<compile_context>
chip_gen: v7x
topology: tpu7x:2x2x1
jax: 0.10.0
libtpu: 0.0.40
codegen_flags: <defaults>
</compile_context>

<pallas_src>
import functools

import jax
import jax.numpy as jnp
from jax import lax
from jax.experimental import pallas as pl
from jax.experimental.pallas import tpu as pltpu


def _round_up(x, m):
    return ((x + m - 1) // m) * m


def _vmem_capacity_bytes():
    try:
        return int(pltpu.get_tpu_info().vmem_capacity_bytes)
    except Exception:
        return 64 * 1024 * 1024          # conservative fallback (v7x-sized)


def _inner_rows(w):
    """Rows per register-resident accumulation sub-block: target ~128 output pixels so the
    f32 accumulator (<=128 lanes wide) stays comfortably in vregs.  Always even, so the
    per-strip row count (a multiple of this) is even too (needed by the 2-row halo block)."""
    tr = max(2, (128 // max(1, w)) & ~1)
    return min(8, tr)


def _strip_footprint_bytes(th, w, cin, cout, tr):
    """Rough per-grid-step VMEM footprint: double-buffered blocks + working set."""
    lane = 128
    in_main = th * _round_up(w + 2, 16) * _round_up(cin, lane) * 2       # bf16
    in_halo = 2 * _round_up(w + 2, 16) * _round_up(cin, lane) * 2        # bf16
    weights = 9 * _round_up(cin, 16) * _round_up(cout, lane) * 2         # bf16
    out_blk = th * _round_up(w, 16) * _round_up(cout, lane) * 2          # bf16
    work = 6 * tr * w * lane * 4                                         # acc / patch temps
    return 2 * (in_main + in_halo + out_blk + weights) + work


def _choose_strip_rows(h, w, cin, cout, tr, budget_bytes, max_subblocks=16):
    """Largest strip (multiple of tr, capped unroll) whose footprint fits the VMEM budget."""
    nblk = min(pl.cdiv(h, tr), max_subblocks)
    while nblk > 1 and _strip_footprint_bytes(nblk * tr, w, cin, cout, tr) > budget_bytes:
        nblk -= 1
    return nblk * tr


def _conv3x3_kernel(tr, a_ref, halo_ref, w_ref, o_ref):
    # a_ref:    (1, TH,  W+2, Cin)  bf16 -- main rows of this strip's halo'd window
    # halo_ref: (1, 2,   W+2, Cin)  bf16 -- bottom 2 halo rows of the window
    # w_ref:    (9, Cin, Cout)      bf16 -- taps in kh*3+kw order
    # o_ref:    (1, TH,  W,   Cout) bf16
    th = a_ref.shape[1]
    cin = a_ref.shape[3]
    wpix = o_ref.shape[2]
    cout = o_ref.shape[3]

    # Static (trace-time) loop over row sub-blocks; each sub-block's f32 accumulator lives
    # in vregs and is stored exactly once.
    for r0 in range(0, th, tr):
        acc = None
        for kh in range(3):
            lo = r0 + kh
            n_top = max(0, min(tr, th - lo))
            n_halo = tr - n_top            # 0, 1 or 2 (only the last sub-block straddles)
            if n_halo == 0:
                rows = a_ref[0, lo:lo + tr, :, :]                  # (tr, W+2, Cin)
            elif n_top == 0:
                rows = halo_ref[0, 0:n_halo, :, :]
            else:
                rows = jnp.concatenate(
                    [a_ref[0, lo:lo + n_top, :, :], halo_ref[0, 0:n_halo, :, :]], axis=0)
            for kw in range(3):
                patch = rows[:, kw:kw + wpix, :].reshape(tr * wpix, cin)
                contrib = jnp.dot(patch, w_ref[kh * 3 + kw],
                                  preferred_element_type=jnp.float32)
                acc = contrib if acc is None else acc + contrib
        o_ref[0, r0:r0 + tr, :, :] = acc.reshape(tr, wpix, cout).astype(o_ref.dtype)


def conv3x3_same_nhwc(x_nhwc, w_hwio):
    """3x3 / stride-1 / pad-1 / no-bias conv via Pallas.

    x_nhwc: (B, H, W, Cin), w_hwio: (3, 3, Cin, Cout).  Returns (B, H, W, Cout) bf16.
    """
    b, h, w, cin = x_nhwc.shape
    cout = w_hwio.shape[-1]

    tr = _inner_rows(w)
    vmem_cap = _vmem_capacity_bytes()
    th = _choose_strip_rows(h, w, cin, cout, tr,
                            budget_bytes=max(4 << 20, vmem_cap // 8))
    s = pl.cdiv(h, th)
    h_pad = s * th                         # ragged last strip handled by bottom zero-pad

    xb = x_nhwc.astype(jnp.bfloat16)
    # Single conv-border pad (+ bottom ragged pad).  This is the only extra HBM pass on the
    # input -- no overlapping per-strip halo copies are materialized.
    x_pad = jnp.pad(xb, ((0, 0), (1, 1 + (h_pad - h)), (1, 1), (0, 0)))
    # Weights: (3,3,Cin,Cout) -> (9, Cin, Cout), tap index = kh*3+kw.  Resident in VMEM.
    w9 = w_hwio.astype(jnp.bfloat16).reshape(9, cin, cout)

    kernel = functools.partial(_conv3x3_kernel, tr)

    out = pl.pallas_call(
        kernel,
        out_shape=jax.ShapeDtypeStruct((b, h_pad, w, cout), jnp.bfloat16),
        grid_spec=pltpu.PrefetchScalarGridSpec(
            num_scalar_prefetch=0,
            grid=(b, s),
            in_specs=[
                # main TH rows of this strip's (TH+2)-row halo'd window
                pl.BlockSpec((1, th, w + 2, cin), lambda bi, si: (bi, si, 0, 0)),
                # bottom 2 halo rows: start row (si+1)*th  (th is even by construction)
                pl.BlockSpec((1, 2, w + 2, cin),
                             lambda bi, si: (bi, (si + 1) * (th // 2), 0, 0)),
                # weights, constant index map -> fetched once and kept resident
                pl.BlockSpec((9, cin, cout), lambda bi, si: (0, 0, 0)),
            ],
            out_specs=pl.BlockSpec((1, th, w, cout), lambda bi, si: (bi, si, 0, 0)),
        ),
        compiler_params=pltpu.CompilerParams(
            dimension_semantics=("parallel", "parallel"),
            vmem_limit_bytes=int(max(32 << 20, min(vmem_cap // 2, 64 << 20))),
        ),
    )(x_pad, x_pad, w9)

    return out[:, :h] if h_pad != h else out


def upsample_forward(x_nchw, w_oihw):
    """Full Upsample forward. x: (B, n_feat, H, W), w: (2*n_feat, n_feat, 3, 3).
    Returns (B, n_feat // 2, 2H, 2W) in x's dtype."""
    b, _, h, w = x_nchw.shape
    x_nhwc = jnp.transpose(x_nchw, (0, 2, 3, 1))
    w_hwio = jnp.transpose(w_oihw, (2, 3, 1, 0))          # (3, 3, Cin, Cout)
    y = conv3x3_same_nhwc(x_nhwc, w_hwio)                 # (B, H, W, 2*n_feat) bf16
    # PixelShuffle(2) in NHWC (PyTorch semantics), then one NHWC->NCHW transpose at the end.
    c = y.shape[-1] // 4
    y = y.reshape(b, h, w, c, 2, 2)
    y = jnp.transpose(y, (0, 1, 4, 2, 5, 3))              # (B, H, 2, W, 2, C)
    y = y.reshape(b, 2 * h, 2 * w, c)
    return jnp.transpose(y, (0, 3, 1, 2)).astype(x_nchw.dtype)


def _pixel_shuffle_nchw_ref(x, r=2):
    """Reference PyTorch-semantics PixelShuffle on NCHW (test only)."""
    b, crr, h, w = x.shape
    c = crr // (r * r)
    x = x.reshape(b, c, r, r, h, w)
    x = jnp.transpose(x, (0, 1, 4, 2, 5, 3))
    return x.reshape(b, c, h * r, w * r)


if __name__ == "__main__":
    key = jax.random.PRNGKey(0)
    kx, kw_ = jax.random.split(key)

    B, n_feat, H, W = 2, 4, 16, 16
    x = jax.random.normal(kx, (B, n_feat, H, W), dtype=jnp.float32)
    # Conv2d(n_feat, 2*n_feat, 3, bias=False) weight shape: (2*n_feat, n_feat, 3, 3)
    w = jax.random.normal(kw_, (2 * n_feat, n_feat, 3, 3), dtype=jnp.float32) * 0.1

    out = jax.block_until_ready(upsample_forward(x, w))
    assert out.shape == (B, n_feat // 2, 2 * H, 2 * W), out.shape

    # Reference: same bf16-rounded operands, f32-accumulated conv, result rounded to bf16
    # (matching the kernel's bf16-in / f32-accumulate / bf16-out MXU path), then PixelShuffle.
    xb = x.astype(jnp.bfloat16).astype(jnp.float32)
    wb = w.astype(jnp.bfloat16).astype(jnp.float32)
    ref_conv = lax.conv_general_dilated(
        xb, wb, window_strides=(1, 1), padding=((1, 1), (1, 1)),
        dimension_numbers=("NCHW", "OIHW", "NCHW"),
        precision=lax.Precision.HIGHEST,
    ).astype(jnp.bfloat16).astype(jnp.float32)
    ref = _pixel_shuffle_nchw_ref(ref_conv, r=2)

    err = float(jnp.max(jnp.abs(out - ref)))
    assert jnp.allclose(out, ref, atol=2e-2, rtol=2e-2), f"mismatch vs reference: {err}"

    print("KERNEL_OK")
</pallas_src>

<mosaic_0001>
module attributes {stable_mosaic.version = 11 : i64} {
  func.func @_conv3x3_kernel(%arg0: i32, %arg1: i32, %arg2: memref<1x16x18x4xbf16, #tpu.memory_space<vmem>>, %arg3: memref<1x2x18x4xbf16, #tpu.memory_space<vmem>>, %arg4: memref<9x4x8xbf16, #tpu.memory_space<vmem>>, %arg5: memref<1x16x16x8xbf16, #tpu.memory_space<vmem>>) attributes {dimension_semantics = [#tpu.dimension_semantics<parallel>, #tpu.dimension_semantics<parallel>], iteration_bounds = array<i64: 2, 1>, scalar_prefetch = 0 : i64, scratch_operands = 0 : i64, tpu.core_type = #tpu.core_type<tc>, window_params = [{transform_indices = @transform_0, window_bounds = array<i64: 1, 16, 18, 4>}, {transform_indices = @transform_1, window_bounds = array<i64: 1, 2, 18, 4>}, {pipeline_mode = #tpu.pipeline_mode<synchronous>, transform_indices = @transform_2, window_bounds = array<i64: 9, 4, 8>}, {transform_indices = @transform_3, window_bounds = array<i64: 1, 16, 16, 8>}]} {
    %c0 = arith.constant 0 : index
    %c0_0 = arith.constant 0 : index
    %c0_1 = arith.constant 0 : index
    %c0_2 = arith.constant 0 : index
    %0 = vector.load %arg2[%c0, %c0_0, %c0_1, %c0_2] : memref<1x16x18x4xbf16, #tpu.memory_space<vmem>>, vector<1x8x18x4xbf16>
    %1 = vector.shape_cast %0 : vector<1x8x18x4xbf16> to vector<8x18x4xbf16>
    %2 = vector.extract_strided_slice %1 {offsets = [0, 0, 0], sizes = [8, 16, 4], strides = [1, 1, 1]} : vector<8x18x4xbf16> to vector<8x16x4xbf16>
    %3 = vector.shape_cast %2 : vector<8x16x4xbf16> to vector<128x4xbf16>
    %c0_3 = arith.constant 0 : index
    %c0_4 = arith.constant 0 : index
    %c0_5 = arith.constant 0 : index
    %4 = vector.load %arg4[%c0_3, %c0_4, %c0_5] : memref<9x4x8xbf16, #tpu.memory_space<vmem>>, vector<1x4x8xbf16>
    %5 = vector.shape_cast %4 : vector<1x4x8xbf16> to vector<4x8xbf16>
    %cst = arith.constant dense<0.000000e+00> : vector<128x8xf32>
    %6 = tpu.matmul %3, %5, %cst {dimension_numbers = #tpu.dot_dimension_numbers<[1], [0], [0], [1], [0, 0, 1, 1], [], []>} : vector<128x4xbf16>, vector<4x8xbf16>, vector<128x8xf32> -> vector<128x8xf32>
    %7 = vector.extract_strided_slice %1 {offsets = [0, 1, 0], sizes = [8, 16, 4], strides = [1, 1, 1]} : vector<8x18x4xbf16> to vector<8x16x4xbf16>
    %8 = vector.shape_cast %7 : vector<8x16x4xbf16> to vector<128x4xbf16>
    %c1 = arith.constant 1 : index
    %c0_6 = arith.constant 0 : index
    %c0_7 = arith.constant 0 : index
    %9 = vector.load %arg4[%c1, %c0_6, %c0_7] : memref<9x4x8xbf16, #tpu.memory_space<vmem>>, vector<1x4x8xbf16>
    %10 = vector.shape_cast %9 : vector<1x4x8xbf16> to vector<4x8xbf16>
    %cst_8 = arith.constant dense<0.000000e+00> : vector<128x8xf32>
    %11 = tpu.matmul %8, %10, %cst_8 {dimension_numbers = #tpu.dot_dimension_numbers<[1], [0], [0], [1], [0, 0, 1, 1], [], []>} : vector<128x4xbf16>, vector<4x8xbf16>, vector<128x8xf32> -> vector<128x8xf32>
    %12 = arith.addf %6, %11 : vector<128x8xf32>
    %13 = vector.extract_strided_slice %1 {offsets = [0, 2, 0], sizes = [8, 16, 4], strides = [1, 1, 1]} : vector<8x18x4xbf16> to vector<8x16x4xbf16>
    %14 = vector.shape_cast %13 : vector<8x16x4xbf16> to vector<128x4xbf16>
    %c2 = arith.constant 2 : index
    %c0_9 = arith.constant 0 : index
    %c0_10 = arith.constant 0 : index
    %15 = vector.load %arg4[%c2, %c0_9, %c0_10] : memref<9x4x8xbf16, #tpu.memory_space<vmem>>, vector<1x4x8xbf16>
    %16 = vector.shape_cast %15 : vector<1x4x8xbf16> to vector<4x8xbf16>
    %cst_11 = arith.constant dense<0.000000e+00> : vector<128x8xf32>
    %17 = tpu.matmul %14, %16, %cst_11 {dimension_numbers = #tpu.dot_dimension_numbers<[1], [0], [0], [1], [0, 0, 1, 1], [], []>} : vector<128x4xbf16>, vector<4x8xbf16>, vector<128x8xf32> -> vector<128x8xf32>
    %18 = arith.addf %12, %17 : vector<128x8xf32>
    %c0_12 = arith.constant 0 : index
    %c1_13 = arith.constant 1 : index
    %c0_14 = arith.constant 0 : index
    %c0_15 = arith.constant 0 : index
    %19 = vector.load %arg2[%c0_12, %c1_13, %c0_14, %c0_15] : memref<1x16x18x4xbf16, #tpu.memory_space<vmem>>, vector<1x8x18x4xbf16>
    %20 = vector.shape_cast %19 : vector<1x8x18x4xbf16> to vector<8x18x4xbf16>
    %21 = vector.extract_strided_slice %20 {offsets = [0, 0, 0], sizes = [8, 16, 4], strides = [1, 1, 1]} : vector<8x18x4xbf16> to vector<8x16x4xbf16>
    %22 = vector.shape_cast %21 : vector<8x16x4xbf16> to vector<128x4xbf16>
    %c3 = arith.constant 3 : index
    %c0_16 = arith.constant 0 : index
    %c0_17 = arith.constant 0 : index
    %23 = vector.load %arg4[%c3, %c0_16, %c0_17] : memref<9x4x8xbf16, #tpu.memory_space<vmem>>, vector<1x4x8xbf16>
    %24 = vector.shape_cast %23 : vector<1x4x8xbf16> to vector<4x8xbf16>
    %cst_18 = arith.constant dense<0.000000e+00> : vector<128x8xf32>
    %25 = tpu.matmul %22, %24, %cst_18 {dimension_numbers = #tpu.dot_dimension_numbers<[1], [0], [0], [1], [0, 0, 1, 1], [], []>} : vector<128x4xbf16>, vector<4x8xbf16>, vector<128x8xf32> -> vector<128x8xf32>
    %26 = arith.addf %18, %25 : vector<128x8xf32>
    %27 = vector.extract_strided_slice %20 {offsets = [0, 1, 0], sizes = [8, 16, 4], strides = [1, 1, 1]} : vector<8x18x4xbf16> to vector<8x16x4xbf16>
    %28 = vector.shape_cast %27 : vector<8x16x4xbf16> to vector<128x4xbf16>
    %c4 = arith.constant 4 : index
    %c0_19 = arith.constant 0 : index
    %c0_20 = arith.constant 0 : index
    %29 = vector.load %arg4[%c4, %c0_19, %c0_20] : memref<9x4x8xbf16, #tpu.memory_space<vmem>>, vector<1x4x8xbf16>
    %30 = vector.shape_cast %29 : vector<1x4x8xbf16> to vector<4x8xbf16>
    %cst_21 = arith.constant dense<0.000000e+00> : vector<128x8xf32>
    %31 = tpu.matmul %28, %30, %cst_21 {dimension_numbers = #tpu.dot_dimension_numbers<[1], [0], [0], [1], [0, 0, 1, 1], [], []>} : vector<128x4xbf16>, vector<4x8xbf16>, vector<128x8xf32> -> vector<128x8xf32>
    %32 = arith.addf %26, %31 : vector<128x8xf32>
    %33 = vector.extract_strided_slice %20 {offsets = [0, 2, 0], sizes = [8, 16, 4], strides = [1, 1, 1]} : vector<8x18x4xbf16> to vector<8x16x4xbf16>
    %34 = vector.shape_cast %33 : vector<8x16x4xbf16> to vector<128x4xbf16>
    %c5 = arith.constant 5 : index
    %c0_22 = arith.constant 0 : index
    %c0_23 = arith.constant 0 : index
    %35 = vector.load %arg4[%c5, %c0_22, %c0_23] : memref<9x4x8xbf16, #tpu.memory_space<vmem>>, vector<1x4x8xbf16>
    %36 = vector.shape_cast %35 : vector<1x4x8xbf16> to vector<4x8xbf16>
    %cst_24 = arith.constant dense<0.000000e+00> : vector<128x8xf32>
    %37 = tpu.matmul %34, %36, %cst_24 {dimension_numbers = #tpu.dot_dimension_numbers<[1], [0], [0], [1], [0, 0, 1, 1], [], []>} : vector<128x4xbf16>, vector<4x8xbf16>, vector<128x8xf32> -> vector<128x8xf32>
    %38 = arith.addf %32, %37 : vector<128x8xf32>
    %c0_25 = arith.constant 0 : index
    %c2_26 = arith.constant 2 : index
    %c0_27 = arith.constant 0 : index
    %c0_28 = arith.constant 0 : index
    %39 = vector.load %arg2[%c0_25, %c2_26, %c0_27, %c0_28] : memref<1x16x18x4xbf16, #tpu.memory_space<vmem>>, vector<1x8x18x4xbf16>
    %40 = vector.shape_cast %39 : vector<1x8x18x4xbf16> to vector<8x18x4xbf16>
    %41 = vector.extract_strided_slice %40 {offsets = [0, 0, 0], sizes = [8, 16, 4], strides = [1, 1, 1]} : vector<8x18x4xbf16> to vector<8x16x4xbf16>
    %42 = vector.shape_cast %41 : vector<8x16x4xbf16> to vector<128x4xbf16>
    %c6 = arith.constant 6 : index
    %c0_29 = arith.constant 0 : index
    %c0_30 = arith.constant 0 : index
    %43 = vector.load %arg4[%c6, %c0_29, %c0_30] : memref<9x4x8xbf16, #tpu.memory_space<vmem>>, vector<1x4x8xbf16>
    %44 = vector.shape_cast %43 : vector<1x4x8xbf16> to vector<4x8xbf16>
    %cst_31 = arith.constant dense<0.000000e+00> : vector<128x8xf32>
    %45 = tpu.matmul %42, %44, %cst_31 {dimension_numbers = #tpu.dot_dimension_numbers<[1], [0], [0], [1], [0, 0, 1, 1], [], []>} : vector<128x4xbf16>, vector<4x8xbf16>, vector<128x8xf32> -> vector<128x8xf32>
    %46 = arith.addf %38, %45 : vector<128x8xf32>
    %47 = vector.extract_strided_slice %40 {offsets = [0, 1, 0], sizes = [8, 16, 4], strides = [1, 1, 1]} : vector<8x18x4xbf16> to vector<8x16x4xbf16>
    %48 = vector.shape_cast %47 : vector<8x16x4xbf16> to vector<128x4xbf16>
    %c7 = arith.constant 7 : index
    %c0_32 = arith.constant 0 : index
    %c0_33 = arith.constant 0 : index
    %49 = vector.load %arg4[%c7, %c0_32, %c0_33] : memref<9x4x8xbf16, #tpu.memory_space<vmem>>, vector<1x4x8xbf16>
    %50 = vector.shape_cast %49 : vector<1x4x8xbf16> to vector<4x8xbf16>
    %cst_34 = arith.constant dense<0.000000e+00> : vector<128x8xf32>
    %51 = tpu.matmul %48, %50, %cst_34 {dimension_numbers = #tpu.dot_dimension_numbers<[1], [0], [0], [1], [0, 0, 1, 1], [], []>} : vector<128x4xbf16>, vector<4x8xbf16>, vector<128x8xf32> -> vector<128x8xf32>
    %52 = arith.addf %46, %51 : vector<128x8xf32>
    %53 = vector.extract_strided_slice %40 {offsets = [0, 2, 0], sizes = [8, 16, 4], strides = [1, 1, 1]} : vector<8x18x4xbf16> to vector<8x16x4xbf16>
    %54 = vector.shape_cast %53 : vector<8x16x4xbf16> to vector<128x4xbf16>
    %c8 = arith.constant 8 : index
    %c0_35 = arith.constant 0 : index
    %c0_36 = arith.constant 0 : index
    %55 = vector.load %arg4[%c8, %c0_35, %c0_36] : memref<9x4x8xbf16, #tpu.memory_space<vmem>>, vector<1x4x8xbf16>
    %56 = vector.shape_cast %55 : vector<1x4x8xbf16> to vector<4x8xbf16>
    %cst_37 = arith.constant dense<0.000000e+00> : vector<128x8xf32>
    %57 = tpu.matmul %54, %56, %cst_37 {dimension_numbers = #tpu.dot_dimension_numbers<[1], [0], [0], [1], [0, 0, 1, 1], [], []>} : vector<128x4xbf16>, vector<4x8xbf16>, vector<128x8xf32> -> vector<128x8xf32>
    %58 = arith.addf %52, %57 : vector<128x8xf32>
    %59 = vector.shape_cast %58 : vector<128x8xf32> to vector<8x16x8xf32>
    %60 = arith.truncf %59 : vector<8x16x8xf32> to vector<8x16x8xbf16>
    %c0_38 = arith.constant 0 : index
    %c0_39 = arith.constant 0 : index
    %c0_40 = arith.constant 0 : index
    %c0_41 = arith.constant 0 : index
    %61 = vector.load %arg5[%c0_38, %c0_39, %c0_40, %c0_41] : memref<1x16x16x8xbf16, #tpu.memory_space<vmem>>, vector<1x8x16x8xbf16>
    %62 = vector.shape_cast %61 : vector<1x8x16x8xbf16> to vector<8x16x8xbf16>
    %63 = vector.shape_cast %60 : vector<8x16x8xbf16> to vector<1x8x16x8xbf16>
    tpu.vector_store %arg5[%c0_38, %c0_39, %c0_40, %c0_41], %63 {strides = array<i32>} : memref<1x16x16x8xbf16, #tpu.memory_space<vmem>>, vector<1x8x16x8xbf16>,
    %c0_42 = arith.constant 0 : index
    %c8_43 = arith.constant 8 : index
    %c0_44 = arith.constant 0 : index
    %c0_45 = arith.constant 0 : index
    %64 = vector.load %arg2[%c0_42, %c8_43, %c0_44, %c0_45] : memref<1x16x18x4xbf16, #tpu.memory_space<vmem>>, vector<1x8x18x4xbf16>
    %65 = vector.shape_cast %64 : vector<1x8x18x4xbf16> to vector<8x18x4xbf16>
    %66 = vector.extract_strided_slice %65 {offsets = [0, 0, 0], sizes = [8, 16, 4], strides = [1, 1, 1]} : vector<8x18x4xbf16> to vector<8x16x4xbf16>
    %67 = vector.shape_cast %66 : vector<8x16x4xbf16> to vector<128x4xbf16>
    %c0_46 = arith.constant 0 : index
    %c0_47 = arith.constant 0 : index
    %c0_48 = arith.constant 0 : index
    %68 = vector.load %arg4[%c0_46, %c0_47, %c0_48] : memref<9x4x8xbf16, #tpu.memory_space<vmem>>, vector<1x4x8xbf16>
    %69 = vector.shape_cast %68 : vector<1x4x8xbf16> to vector<4x8xbf16>
    %cst_49 = arith.constant dense<0.000000e+00> : vector<128x8xf32>
    %70 = tpu.matmul %67, %69, %cst_49 {dimension_numbers = #tpu.dot_dimension_numbers<[1], [0], [0], [1], [0, 0, 1, 1], [], []>} : vector<128x4xbf16>, vector<4x8xbf16>, vector<128x8xf32> -> vector<128x8xf32>
    %71 = vector.extract_strided_slice %65 {offsets = [0, 1, 0], sizes = [8, 16, 4], strides = [1, 1, 1]} : vector<8x18x4xbf16> to vector<8x16x4xbf16>
    %72 = vector.shape_cast %71 : vector<8x16x4xbf16> to vector<128x4xbf16>
    %c1_50 = arith.constant 1 : index
    %c0_51 = arith.constant 0 : index
    %c0_52 = arith.constant 0 : index
    %73 = vector.load %arg4[%c1_50, %c0_51, %c0_52] : memref<9x4x8xbf16, #tpu.memory_space<vmem>>, vector<1x4x8xbf16>
    %74 = vector.shape_cast %73 : vector<1x4x8xbf16> to vector<4x8xbf16>
    %cst_53 = arith.constant dense<0.000000e+00> : vector<128x8xf32>
    %75 = tpu.matmul %72, %74, %cst_53 {dimension_numbers = #tpu.dot_dimension_numbers<[1], [0], [0], [1], [0, 0, 1, 1], [], []>} : vector<128x4xbf16>, vector<4x8xbf16>, vector<128x8xf32> -> vector<128x8xf32>
    %76 = arith.addf %70, %75 : vector<128x8xf32>
    %77 = vector.extract_strided_slice %65 {offsets = [0, 2, 0], sizes = [8, 16, 4], strides = [1, 1, 1]} : vector<8x18x4xbf16> to vector<8x16x4xbf16>
    %78 = vector.shape_cast %77 : vector<8x16x4xbf16> to vector<128x4xbf16>
    %c2_54 = arith.constant 2 : index
    %c0_55 = arith.constant 0 : index
    %c0_56 = arith.constant 0 : index
    %79 = vector.load %arg4[%c2_54, %c0_55, %c0_56] : memref<9x4x8xbf16, #tpu.memory_space<vmem>>, vector<1x4x8xbf16>
    %80 = vector.shape_cast %79 : vector<1x4x8xbf16> to vector<4x8xbf16>
    %cst_57 = arith.constant dense<0.000000e+00> : vector<128x8xf32>
    %81 = tpu.matmul %78, %80, %cst_57 {dimension_numbers = #tpu.dot_dimension_numbers<[1], [0], [0], [1], [0, 0, 1, 1], [], []>} : vector<128x4xbf16>, vector<4x8xbf16>, vector<128x8xf32> -> vector<128x8xf32>
    %82 = arith.addf %76, %81 : vector<128x8xf32>
    %c0_58 = arith.constant 0 : index
    %c9 = arith.constant 9 : index
    %c0_59 = arith.constant 0 : index
    %c0_60 = arith.constant 0 : index
    %83 = vector.load %arg2[%c0_58, %c9, %c0_59, %c0_60] : memref<1x16x18x4xbf16, #tpu.memory_space<vmem>>, vector<1x7x18x4xbf16>
    %84 = vector.shape_cast %83 : vector<1x7x18x4xbf16> to vector<7x18x4xbf16>
    %c0_61 = arith.constant 0 : index
    %c0_62 = arith.constant 0 : index
    %c0_63 = arith.constant 0 : index
    %c0_64 = arith.constant 0 : index
    %85 = vector.load %arg3[%c0_61, %c0_62, %c0_63, %c0_64] : memref<1x2x18x4xbf16, #tpu.memory_space<vmem>>, vector<1x1x18x4xbf16>
    %86 = vector.shape_cast %85 : vector<1x1x18x4xbf16> to vector<1x18x4xbf16>
    %87 = tpu.concatenate %84, %86 in 0 : vector<7x18x4xbf16>, vector<1x18x4xbf16> -> vector<8x18x4xbf16>
    %88 = vector.extract_strided_slice %87 {offsets = [0, 0, 0], sizes = [8, 16, 4], strides = [1, 1, 1]} : vector<8x18x4xbf16> to vector<8x16x4xbf16>
    %89 = vector.shape_cast %88 : vector<8x16x4xbf16> to vector<128x4xbf16>
    %c3_65 = arith.constant 3 : index
    %c0_66 = arith.constant 0 : index
    %c0_67 = arith.constant 0 : index
    %90 = vector.load %arg4[%c3_65, %c0_66, %c0_67] : memref<9x4x8xbf16, #tpu.memory_space<vmem>>, vector<1x4x8xbf16>
    %91 = vector.shape_cast %90 : vector<1x4x8xbf16> to vector<4x8xbf16>
    %cst_68 = arith.constant dense<0.000000e+00> : vector<128x8xf32>
    %92 = tpu.matmul %89, %91, %cst_68 {dimension_numbers = #tpu.dot_dimension_numbers<[1], [0], [0], [1], [0, 0, 1, 1], [], []>} : vector<128x4xbf16>, vector<4x8xbf16>, vector<128x8xf32> -> vector<128x8xf32>
    %93 = arith.addf %82, %92 : vector<128x8xf32>
    %94 = vector.extract_strided_slice %87 {offsets = [0, 1, 0], sizes = [8, 16, 4], strides = [1, 1, 1]} : vector<8x18x4xbf16> to vector<8x16x4xbf16>
    %95 = vector.shape_cast %94 : vector<8x16x4xbf16> to vector<128x4xbf16>
    %c4_69 = arith.constant 4 : index
    %c0_70 = arith.constant 0 : index
    %c0_71 = arith.constant 0 : index
    %96 = vector.load %arg4[%c4_69, %c0_70, %c0_71] : memref<9x4x8xbf16, #tpu.memory_space<vmem>>, vector<1x4x8xbf16>
    %97 = vector.shape_cast %96 : vector<1x4x8xbf16> to vector<4x8xbf16>
    %cst_72 = arith.constant dense<0.000000e+00> : vector<128x8xf32>
    %98 = tpu.matmul %95, %97, %cst_72 {dimension_numbers = #tpu.dot_dimension_numbers<[1], [0], [0], [1], [0, 0, 1, 1], [], []>} : vector<128x4xbf16>, vector<4x8xbf16>, vector<128x8xf32> -> vector<128x8xf32>
    %99 = arith.addf %93, %98 : vector<128x8xf32>
    %100 = vector.extract_strided_slice %87 {offsets = [0, 2, 0], sizes = [8, 16, 4], strides = [1, 1, 1]} : vector<8x18x4xbf16> to vector<8x16x4xbf16>
    %101 = vector.shape_cast %100 : vector<8x16x4xbf16> to vector<128x4xbf16>
    %c5_73 = arith.constant 5 : index
    %c0_74 = arith.constant 0 : index
    %c0_75 = arith.constant 0 : index
    %102 = vector.load %arg4[%c5_73, %c0_74, %c0_75] : memref<9x4x8xbf16, #tpu.memory_space<vmem>>, vector<1x4x8xbf16>
    %103 = vector.shape_cast %102 : vector<1x4x8xbf16> to vector<4x8xbf16>
    %cst_76 = arith.constant dense<0.000000e+00> : vector<128x8xf32>
    %104 = tpu.matmul %101, %103, %cst_76 {dimension_numbers = #tpu.dot_dimension_numbers<[1], [0], [0], [1], [0, 0, 1, 1], [], []>} : vector<128x4xbf16>, vector<4x8xbf16>, vector<128x8xf32> -> vector<128x8xf32>
    %105 = arith.addf %99, %104 : vector<128x8xf32>
    %c0_77 = arith.constant 0 : index
    %c10 = arith.constant 10 : index
    %c0_78 = arith.constant 0 : index
    %c0_79 = arith.constant 0 : index
    %106 = vector.load %arg2[%c0_77, %c10, %c0_78, %c0_79] : memref<1x16x18x4xbf16, #tpu.memory_space<vmem>>, vector<1x6x18x4xbf16>
    %107 = vector.shape_cast %106 : vector<1x6x18x4xbf16> to vector<6x18x4xbf16>
    %c0_80 = arith.constant 0 : index
    %c0_81 = arith.constant 0 : index
    %c0_82 = arith.constant 0 : index
    %c0_83 = arith.constant 0 : index
    %108 = vector.load %arg3[%c0_80, %c0_81, %c0_82, %c0_83] : memref<1x2x18x4xbf16, #tpu.memory_space<vmem>>, vector<1x2x18x4xbf16>
    %109 = vector.shape_cast %108 : vector<1x2x18x4xbf16> to vector<2x18x4xbf16>
    %110 = tpu.concatenate %107, %109 in 0 : vector<6x18x4xbf16>, vector<2x18x4xbf16> -> vector<8x18x4xbf16>
    %111 = vector.extract_strided_slice %110 {offsets = [0, 0, 0], sizes = [8, 16, 4], strides = [1, 1, 1]} : vector<8x18x4xbf16> to vector<8x16x4xbf16>
    %112 = vector.shape_cast %111 : vector<8x16x4xbf16> to vector<128x4xbf16>
    %c6_84 = arith.constant 6 : index
    %c0_85 = arith.constant 0 : index
    %c0_86 = arith.constant 0 : index
    %113 = vector.load %arg4[%c6_84, %c0_85, %c0_86] : memref<9x4x8xbf16, #tpu.memory_space<vmem>>, vector<1x4x8xbf16>
    %114 = vector.shape_cast %113 : vector<1x4x8xbf16> to vector<4x8xbf16>
    %cst_87 = arith.constant dense<0.000000e+00> : vector<128x8xf32>
    %115 = tpu.matmul %112, %114, %cst_87 {dimension_numbers = #tpu.dot_dimension_numbers<[1], [0], [0], [1], [0, 0, 1, 1], [], []>} : vector<128x4xbf16>, vector<4x8xbf16>, vector<128x8xf32> -> vector<128x8xf32>
    %116 = arith.addf %105, %115 : vector<128x8xf32>
    %117 = vector.extract_strided_slice %110 {offsets = [0, 1, 0], sizes = [8, 16, 4], strides = [1, 1, 1]} : vector<8x18x4xbf16> to vector<8x16x4xbf16>
    %118 = vector.shape_cast %117 : vector<8x16x4xbf16> to vector<128x4xbf16>
    %c7_88 = arith.constant 7 : index
    %c0_89 = arith.constant 0 : index
    %c0_90 = arith.constant 0 : index
    %119 = vector.load %arg4[%c7_88, %c0_89, %c0_90] : memref<9x4x8xbf16, #tpu.memory_space<vmem>>, vector<1x4x8xbf16>
    %120 = vector.shape_cast %119 : vector<1x4x8xbf16> to vector<4x8xbf16>
    %cst_91 = arith.constant dense<0.000000e+00> : vector<128x8xf32>
    %121 = tpu.matmul %118, %120, %cst_91 {dimension_numbers = #tpu.dot_dimension_numbers<[1], [0], [0], [1], [0, 0, 1, 1], [], []>} : vector<128x4xbf16>, vector<4x8xbf16>, vector<128x8xf32> -> vector<128x8xf32>
    %122 = arith.addf %116, %121 : vector<128x8xf32>
    %123 = vector.extract_strided_slice %110 {offsets = [0, 2, 0], sizes = [8, 16, 4], strides = [1, 1, 1]} : vector<8x18x4xbf16> to vector<8x16x4xbf16>
    %124 = vector.shape_cast %123 : vector<8x16x4xbf16> to vector<128x4xbf16>
    %c8_92 = arith.constant 8 : index
    %c0_93 = arith.constant 0 : index
    %c0_94 = arith.constant 0 : index
    %125 = vector.load %arg4[%c8_92, %c0_93, %c0_94] : memref<9x4x8xbf16, #tpu.memory_space<vmem>>, vector<1x4x8xbf16>
    %126 = vector.shape_cast %125 : vector<1x4x8xbf16> to vector<4x8xbf16>
    %cst_95 = arith.constant dense<0.000000e+00> : vector<128x8xf32>
    %127 = tpu.matmul %124, %126, %cst_95 {dimension_numbers = #tpu.dot_dimension_numbers<[1], [0], [0], [1], [0, 0, 1, 1], [], []>} : vector<128x4xbf16>, vector<4x8xbf16>, vector<128x8xf32> -> vector<128x8xf32>
    %128 = arith.addf %122, %127 : vector<128x8xf32>
    %129 = vector.shape_cast %128 : vector<128x8xf32> to vector<8x16x8xf32>
    %130 = arith.truncf %129 : vector<8x16x8xf32> to vector<8x16x8xbf16>
    %c0_96 = arith.constant 0 : index
    %c8_97 = arith.constant 8 : index
    %c0_98 = arith.constant 0 : index
    %c0_99 = arith.constant 0 : index
    %131 = vector.load %arg5[%c0_96, %c8_97, %c0_98, %c0_99] : memref<1x16x16x8xbf16, #tpu.memory_space<vmem>>, vector<1x8x16x8xbf16>
    %132 = vector.shape_cast %131 : vector<1x8x16x8xbf16> to vector<8x16x8xbf16>
    %133 = vector.shape_cast %130 : vector<8x16x8xbf16> to vector<1x8x16x8xbf16>
    tpu.vector_store %arg5[%c0_96, %c8_97, %c0_98, %c0_99], %133 {strides = array<i32>} : memref<1x16x16x8xbf16, #tpu.memory_space<vmem>>, vector<1x8x16x8xbf16>,
    return
  }
  func.func @transform_0(%arg0: i32, %arg1: i32) -> (i32, i32, i32, i32) {
    %c0_i32 = arith.constant 0 : i32
    %c0_i32_0 = arith.constant 0 : i32
    %c0_i32_1 = arith.constant 0 : i32
    return %arg0, %arg1, %c0_i32, %c0_i32_0 : i32, i32, i32, i32
  }
  func.func @transform_1(%arg0: i32, %arg1: i32) -> (i32, i32, i32, i32) {
    %c1_i32 = arith.constant 1 : i32
    %0 = arith.addi %arg1, %c1_i32 : i32
    %c8_i32 = arith.constant 8 : i32
    %1 = arith.muli %0, %c8_i32 : i32
    %c0_i32 = arith.constant 0 : i32
    %c0_i32_0 = arith.constant 0 : i32
    %c0_i32_1 = arith.constant 0 : i32
    return %arg0, %1, %c0_i32, %c0_i32_0 : i32, i32, i32, i32
  }
  func.func @transform_2(%arg0: i32, %arg1: i32) -> (i32, i32, i32) {
    %c0_i32 = arith.constant 0 : i32
    %c0_i32_0 = arith.constant 0 : i32
    %c0_i32_1 = arith.constant 0 : i32
    %c0_i32_2 = arith.constant 0 : i32
    return %c0_i32, %c0_i32_0, %c0_i32_1 : i32, i32, i32
  }
  func.func @transform_3(%arg0: i32, %arg1: i32) -> (i32, i32, i32, i32) {
    %c0_i32 = arith.constant 0 : i32
    %c0_i32_0 = arith.constant 0 : i32
    %c0_i32_1 = arith.constant 0 : i32
    return %arg0, %arg1, %c0_i32, %c0_i32_0 : i32, i32, i32, i32
  }
}

</mosaic_0001>

<llo_original>
// kernel: tpu_custom_call.1
$region0: #{tpu_custom_call.1}
  #allocation0 [shape = 'u32[]', space=smem, size = 0x4, offset = 0x4, fixed_abs, tag = 'smem constant byte address 0x4 - core index']
  #allocation1 [shape = 'u32[144,128]{1,0:T(1,128)}', space=vmem, size = 0x12000, scoped, tag = 'internal scratch']
  %s0 = inlined_call_operand.vmem [shape: bf16[2,18,18,4], index: 0, kind: input, shape index: {}]
  %s1 = inlined_call_operand.vmem [shape: bf16[2,18,18,4], index: 1, kind: input, shape index: {}]
  %s2 = inlined_call_operand.vmem [shape: bf16[9,4,8], index: 2, kind: input, shape index: {}]
  %s3 = inlined_call_operand.vmem [shape: bf16[2,16,16,8], index: 3, kind: output, shape index: {}]
  %s4 = sld [smem:[#allocation0]]
  $region45: #{tpu_custom_call.1} parent=0
    _
  %s6 = ssub.s32 1, %s4
  %s7 = scalar_select 0, %s6, %s4
  loop: start=0, step=1, limit=4
  $region2: #{tpu_custom_call.1} parent=0 // loop_pre_header
    _
  $region3: #{tpu_custom_call.1} parent=0 // loop_header
    %s9 = sphi 0, %s13
    %p10 = scmp.ge.s32.totalorder %s9, 4
    %s16 = sphi 0, %s28
    %s17 = sphi 0, %s24
    %s18 = sphi 0, %s16
    %s19 = sphi 0, %s17
    %s20 = sphi 0, %s18
    %s21 = sphi 0, %s19
    %s33 = sphi 0, %s35
    %s36 = sphi 0, %s33
    %s37 = sphi 0, %s36
    %s53 = sphi 0, %s37
    %s65 = sphi 0, %s67
    %s68 = sphi 0, %s65
    %s69 = sphi 0, %s68
    %s85 = sphi 0, %s69
    %s89 = sphi 0, %s89
    %s91 = sphi 0, %s89
    %s92 = sphi 0, %s91
    %s106 = sphi 0, %s92
    %s114 = sphi 0, %s116
    %s117 = sphi 0, %s114
    %s118 = sphi 0, %s117
    %s134 = sphi 0, %s118
  $region4: #{tpu_custom_call.1} parent=0 // loop_header_branch
    %12 = sbr.rel (%p10) target = $region8
  $region5: #{tpu_custom_call.1} parent=0 // loop_body
    %s14 = ssub.s32 %s9, 1
    %s15 = ssub.s32 %s9, 2
    %s22 = sadd.s32 1, %s17
    %p23 = scmp.ge.s32.totalorder %s22, 1
    %s24 = scalar_select %p23, 0, %s22
    %s25 = sadd.s32 1, %s16
    %s26 = scalar_select %p23, %s25, %s16
    %p27 = scmp.ge.s32.totalorder %s26, 2
    %s28 = scalar_select %p27, 0, %s26
    %s29 = ssub.s32 %s16, %s28
    %s30 = ssub.s32 %s17, %s24
    %s31 = sor.u32 %s29, %s30
    %p32 = scmp.eq.s32.totalorder %s31, 0
    %s34 = sadd.s32 %s33, 1
    %s35 = scalar_select %p32, %s33, %s34
    %p38 = pneg %p32
    %p39 = scmp.eq.s32.totalorder %s9, 1
    %p40 = por %p38, %p39
    %p41 = scmp.ne.s32.totalorder %s33, %s36
    %p42 = scmp.eq.s32.totalorder %s9, 0
    %p43 = por %p41, %p42
    %p44 = scmp.ne.s32.totalorder %s33, %s36
    %p45 = scmp.eq.s32.totalorder %s14, 1
    %p46 = por %p44, %p45
    %p47 = scmp.ne.s32.totalorder %s36, %s37
    %p48 = scmp.eq.s32.totalorder %s14, 0
    %p49 = por %p47, %p48
    %p50 = scmp.ne.s32.totalorder %s36, %s37
    %p51 = scmp.eq.s32.totalorder %s15, 1
    %p52 = por %p50, %p51
    %p54 = scmp.ne.s32.totalorder %s37, %s53
    %p55 = scmp.eq.s32.totalorder %s15, 0
    %p56 = por %p54, %p55
    %s57 = sadd.s32 %s17, 1
    %s58 = smul.u32 %s57, 8
    %s59 = sadd.s32 %s24, 1
    %s60 = smul.u32 %s59, 8
    %s61 = ssub.s32 %s16, %s28
    %s62 = ssub.s32 %s58, %s60
    %s63 = sor.u32 %s61, %s62
    %p64 = scmp.eq.s32.totalorder %s63, 0
    %s66 = sadd.s32 %s65, 1
    %s67 = scalar_select %p64, %s65, %s66
    %p70 = pneg %p64
    %p71 = scmp.eq.s32.totalorder %s9, 1
    %p72 = por %p70, %p71
    %p73 = scmp.ne.s32.totalorder %s65, %s68
    %p74 = scmp.eq.s32.totalorder %s9, 0
    %p75 = por %p73, %p74
    %p76 = scmp.ne.s32.totalorder %s65, %s68
    %p77 = scmp.eq.s32.totalorder %s14, 1
    %p78 = por %p76, %p77
    %p79 = scmp.ne.s32.totalorder %s68, %s69
    %p80 = scmp.eq.s32.totalorder %s14, 0
    %p81 = por %p79, %p80
    %p82 = scmp.ne.s32.totalorder %s68, %s69
    %p83 = scmp.eq.s32.totalorder %s15, 1
    %p84 = por %p82, %p83
    %p86 = scmp.ne.s32.totalorder %s69, %s85
    %p87 = scmp.eq.s32.totalorder %s15, 0
    %p88 = por %p86, %p87
    %s90 = sadd.s32 %s89, 1
    %p93 = scmp.eq.s32.totalorder %s9, 1
    %p94 = scmp.ne.s32.totalorder %s89, %s91
    %p95 = scmp.eq.s32.totalorder %s9, 0
    %p96 = por %p94, %p95
    %p97 = scmp.ne.s32.totalorder %s89, %s91
    %p98 = scmp.eq.s32.totalorder %s14, 1
    %p99 = por %p97, %p98
    %p100 = scmp.ne.s32.totalorder %s91, %s92
    %p101 = scmp.eq.s32.totalorder %s14, 0
    %p102 = por %p100, %p101
    %p103 = scmp.ne.s32.totalorder %s91, %s92
    %p104 = scmp.eq.s32.totalorder %s15, 1
    %p105 = por %p103, %p104
    %p107 = scmp.ne.s32.totalorder %s92, %s106
    %p108 = scmp.eq.s32.totalorder %s15, 0
    %p109 = por %p107, %p108
    %s110 = ssub.s32 %s16, %s28
    %s111 = ssub.s32 %s17, %s24
    %s112 = sor.u32 %s110, %s111
    %p113 = scmp.eq.s32.totalorder %s112, 0
    %s115 = sadd.s32 %s114, 1
    %s116 = scalar_select %p113, %s114, %s115
    %p119 = pneg %p113
    %p120 = scmp.eq.s32.totalorder %s9, 1
    %p121 = por %p119, %p120
    %p122 = scmp.ne.s32.totalorder %s114, %s117
    %p123 = scmp.eq.s32.totalorder %s9, 0
    %p124 = por %p122, %p123
    %p125 = scmp.ne.s32.totalorder %s114, %s117
    %p126 = scmp.eq.s32.totalorder %s14, 1
    %p127 = por %p125, %p126
    %p128 = scmp.ne.s32.totalorder %s117, %s118
    %p129 = scmp.eq.s32.totalorder %s14, 0
    %p130 = por %p128, %p129
    %p131 = scmp.ne.s32.totalorder %s117, %s118
    %p132 = scmp.eq.s32.totalorder %s15, 1
    %p133 = por %p131, %p132
    %p135 = scmp.ne.s32.totalorder %s118, %s134
    %p136 = scmp.eq.s32.totalorder %s15, 0
    %p137 = por %p135, %p136
    %p138 = scmp.le.s32.totalorder 1, %s9
    %p139 = scmp.lt.s32.totalorder %s9, 3
    %p140 = pnand %p138, %p139
    %p141 = pneg %p140
    // Predicated region
    $region9: #{tpu_custom_call.1} parent=5 // pred_check
      _
    $region10: #{tpu_custom_call.1} parent=5 // pred_check_branch
      %143 = sbr.rel (%p140) target = $region12
    $region11: #{tpu_custom_call.1} parent=5 // pred_region
      %s144 = ssub.s32 %s9, 1
      // Predicated region
      $region13: #{tpu_custom_call.1} parent=11 // pred_check
        %p145 = pneg %p102
      $region14: #{tpu_custom_call.1} parent=11 // pred_check_branch
        %147 = sbr.rel (%p145) target = $region16
      $region15: #{tpu_custom_call.1} parent=11 // pred_region
        _
      $region16: #{tpu_custom_call.1} parent=11 // pred_fallthru
        _
    $region12: #{tpu_custom_call.1} parent=5 // pred_fallthru
      _
    %p148 = scmp.lt.s32.totalorder %s9, 2
    // Predicated region
    $region17: #{tpu_custom_call.1} parent=5 // pred_check
      %p149 = pneg %p148
    $region18: #{tpu_custom_call.1} parent=5 // pred_check_branch
      %151 = sbr.rel (%p149) target = $region20
    $region19: #{tpu_custom_call.1} parent=5 // pred_region
      // Predicated region
      $region21: #{tpu_custom_call.1} parent=19 // pred_check
        %p152 = pneg %p43
      $region22: #{tpu_custom_call.1} parent=19 // pred_check_branch
        %154 = sbr.rel (%p152) target = $region24
      $region23: #{tpu_custom_call.1} parent=19 // pred_region
        %s155 = smul.u32 16, %s17
        %s156 = ssub.s32 18, %s155
        %p157 = scmp.lt.s32.totalorder %s156, 16
        %s158 = scalar_select %p157, %s156, 16
        %s159 = smul.u32 64, %s158
        %s160 = smul.u32 %s159, 3
        %p161 = scmp.lt.s32.totalorder %s16, 1
        %s162 = scalar_select %p161, %s16, 1
        %p163 = scmp.lt.s32.totalorder %s155, 17
        %s164 = scalar_select %p163, %s155, 17
        %s165 = smul.addr %s164, 3
        %s166 = smul.addr %s162, 54
        %s167 = sadd.s32 %s165, %s166
        %s168 = smul.addr %s167, 4
        %s169 = scalar_lea.vmem %s0, %s168
        %s170 = smul.u32 16, %s17
        %s171 = ssub.s32 18, %s170
        %p172 = scmp.lt.s32.totalorder %s171, 16
        %s173 = scalar_select %p172, %s171, 16
        %s174 = smul.u32 64, %s173
        %s175 = smul.u32 %s174, 3
      $region24: #{tpu_custom_call.1} parent=19 // pred_fallthru
        _
      // Predicated region
      $region25: #{tpu_custom_call.1} parent=19 // pred_check
        %p176 = pneg %p75
      $region26: #{tpu_custom_call.1} parent=19 // pred_check_branch
        %178 = sbr.rel (%p176) target = $region28
      $region27: #{tpu_custom_call.1} parent=19 // pred_region
        %s179 = sadd.s32 %s17, 1
        %s180 = smul.u32 %s179, 8
        %s181 = smul.u32 2, %s180
        %p182 = scmp.lt.s32.totalorder %s16, 1
        %s183 = scalar_select %p182, %s16, 1
        %p184 = scmp.lt.s32.totalorder %s181, 17
        %s185 = scalar_select %p184, %s181, 17
        %s186 = smul.addr %s185, 3
        %s187 = smul.addr %s183, 54
        %s188 = sadd.s32 %s186, %s187
        %s189 = smul.addr %s188, 4
        %s190 = scalar_lea.vmem %s1, %s189
        %s191 = sadd.s32 %s17, 1
        %s192 = smul.u32 %s191, 8
        %s193 = smul.u32 2, %s192
      $region28: #{tpu_custom_call.1} parent=19 // pred_fallthru
        _
    $region20: #{tpu_custom_call.1} parent=5 // pred_fallthru
      _
    %p194 = scmp.le.s32.totalorder 1, %s9
    %p195 = scmp.lt.s32.totalorder %s9, 3
    %p196 = pnand %p194, %p195
    %p197 = pneg %p196
    // Predicated region
    $region29: #{tpu_custom_call.1} parent=5 // pred_check
      _
    $region30: #{tpu_custom_call.1} parent=5 // pred_check_branch
      %199 = sbr.rel (%p196) target = $region32
    $region31: #{tpu_custom_call.1} parent=5 // pred_region
      %s200 = ssub.s32 %s9, 1
      %s201 = smul.u32 16, %s19
      %s202 = ssub.s32 18, %s201
      %p203 = scmp.lt.s32.totalorder %s202, 16
      %s204 = scalar_select %p203, %s202, 16
      %s205 = smul.u32 64, %s204
      %s206 = smul.u32 %s205, 3
      %p207 = scmp.lt.s32.totalorder %s18, 1
      %s208 = scalar_select %p207, %s18, 1
      %p209 = scmp.lt.s32.totalorder %s201, 17
      %s210 = scalar_select %p209, %s201, 17
      %s211 = smul.addr %s210, 3
      %s212 = smul.addr %s208, 54
      %s213 = sadd.s32 %s211, %s212
      %s214 = smul.addr %s213, 4
      %s215 = scalar_lea.vmem %s0, %s214
      %p216 = pneg %p49
      %p217 = pneg %p46
      %s218 = sadd.s32 %s19, 1
      %s219 = smul.u32 %s218, 8
      %s220 = smul.u32 2, %s219
      %p221 = scmp.lt.s32.totalorder %s18, 1
      %s222 = scalar_select %p221, %s18, 1
      %p223 = scmp.lt.s32.totalorder %s220, 17
      %s224 = scalar_select %p223, %s220, 17
      %s225 = smul.addr %s224, 3
      %s226 = smul.addr %s222, 54
      %s227 = sadd.s32 %s225, %s226
      %s228 = smul.addr %s227, 4
      %s229 = scalar_lea.vmem %s1, %s228
      %p230 = pneg %p81
      %p231 = pneg %p78
      %p232 = pneg %p102
      %p233 = pneg %p99
      %p234 = pneg %p130
      %p235 = pneg %p127
      %s236 = smul.u32 16, %s19
      %p237 = scmp.lt.s32.totalorder %s18, 1
      %s238 = scalar_select %p237, %s18, 1
      %p239 = scmp.lt.s32.totalorder %s236, 15
      %s240 = scalar_select %p239, %s236, 15
      %s241 = smul.addr %s240, 2
      %s242 = smul.addr %s238, 32
      %s243 = sadd.s32 %s241, %s242
      %s244 = smul.addr %s243, 4
      %s245 = scalar_lea.vmem %s3, %s244
      %s246 = smul.u32 16, %s19
      %s247 = ssub.s32 18, %s246
      %p248 = scmp.lt.s32.totalorder %s247, 16
      %s249 = scalar_select %p248, %s247, 16
      %s250 = smul.u32 64, %s249
      %s251 = smul.u32 %s250, 3
      %p252 = scmp.lt.s32.totalorder %s18, 1
      %s253 = scalar_select %p252, %s18, 1
      %p254 = scmp.lt.s32.totalorder %s246, 17
      %s255 = scalar_select %p254, %s246, 17
      %s256 = smul.addr %s255, 3
      %s257 = smul.addr %s253, 54
      %s258 = sadd.s32 %s256, %s257
      %s259 = smul.addr %s258, 4
      %s260 = scalar_lea.vmem %s0, %s259
      %s261 = smul.u32 16, %s19
      %s262 = ssub.s32 18, %s261
      %p263 = scmp.lt.s32.totalorder %s262, 16
      %s264 = scalar_select %p263, %s262, 16
      %s265 = smul.u32 64, %s264
      %s266 = smul.u32 %s265, 3
      %s267 = sadd.s32 %s19, 1
      %s268 = smul.u32 %s267, 8
      %s269 = smul.u32 2, %s268
      %p270 = scmp.lt.s32.totalorder %s18, 1
      %s271 = scalar_select %p270, %s18, 1
      %p272 = scmp.lt.s32.totalorder %s269, 17
      %s273 = scalar_select %p272, %s269, 17
      %s274 = smul.addr %s273, 3
      %s275 = smul.addr %s271, 54
      %s276 = sadd.s32 %s274, %s275
      %s277 = smul.addr %s276, 4
      %s278 = scalar_lea.vmem %s1, %s277
      %s279 = sadd.s32 %s19, 1
      %s280 = smul.u32 %s279, 8
      %s281 = smul.u32 2, %s280
      %s282 = smul.u32 16, %s19
      %p283 = scmp.lt.s32.totalorder %s18, 1
      %s284 = scalar_select %p283, %s18, 1
      %p285 = scmp.lt.s32.totalorder %s282, 15
      %s286 = scalar_select %p285, %s282, 15
      %s287 = smul.addr %s286, 2
      %s288 = smul.addr %s284, 32
      %s289 = sadd.s32 %s287, %s288
      %s290 = smul.addr %s289, 4
      %s291 = scalar_lea.vmem %s3, %s290
      %s292 = smul.u32 16, %s19
      %v294 = vld [vmem:[%s260] sm:$0xf]
      %v295 = vld [vmem:[%s260 + $0x4] sm:$0xf]
      %v296 = vld [vmem:[%s260 + $0x8] sm:$0x1]
      %v297 = vld [vmem:[%s260 + $0xc] sm:$0xf]
      %v298 = vld [vmem:[%s260 + $0x10] sm:$0xf]
      %v299 = vld [vmem:[%s260 + $0x14] sm:$0x1]
      %v300 = vld [vmem:[%s260 + $0x18] sm:$0xf]
      %v301 = vld [vmem:[%s260 + $0x1c] sm:$0xf]
      %v302 = vld [vmem:[%s260 + $0x20] sm:$0x1]
      %v303 = vld [vmem:[%s260 + $0x24] sm:$0xf]
      %v304 = vld [vmem:[%s260 + $0x28] sm:$0xf]
      %v305 = vld [vmem:[%s260 + $0x2c] sm:$0x1]
      %v306 = vld [vmem:[%s260 + $0x30] sm:$0xf]
      %v307 = vld [vmem:[%s260 + $0x34] sm:$0xf]
      %v308 = vld [vmem:[%s260 + $0x38] sm:$0x1]
      %v309 = vld [vmem:[%s260 + $0x3c] sm:$0xf]
      %v310 = vld [vmem:[%s260 + $0x40] sm:$0xf]
      %v311 = vld [vmem:[%s260 + $0x44] sm:$0x1]
      %v312 = vld [vmem:[%s260 + $0x48] sm:$0xf]
      %v313 = vld [vmem:[%s260 + $0x4c] sm:$0xf]
      %v314 = vld [vmem:[%s260 + $0x50] sm:$0x1]
      %v315 = vld [vmem:[%s260 + $0x54] sm:$0xf]
      %v316 = vld [vmem:[%s260 + $0x58] sm:$0xf]
      %v317 = vld [vmem:[%s260 + $0x5c] sm:$0x1]
      %v318 = vld [vmem:[%s2] sm:$0x3]
      %vm319 = vsmask.f32 3328
      %vm320 = vsmask.f32 7440
      %vm321 = vmor %vm319, %vm320
      %v323 = vshrl.u32 %v294, 16
      %v325 = vrot.slane %v323, 4
      %v326 = vshll.u32 %v294, 16
      %v328 = vrot.slane %v326, 5
      %v329 = vor.u32 %v325, %v328
      %v330 = vrot.slane %v329, 4
      %v332 = vshll.u32 %v295, 16
      %v334 = vrot.slane %v332, 5
      %v335 = vsel %vm321, %v330, %v334
      %v336 = vshrl.u32 %v295, 16
      %v338 = vrot.slane %v336, 4
      %v339 = vor.u32 %v338, %v334
      %v340 = vrot.slane %v339, 4
      %v342 = vshll.u32 %v296, 16
      %v344 = vrot.slane %v342, 5
      %v345 = vsel %vm321, %v340, %v344
      %v347 = vshrl.u32 %v297, 16
      %v349 = vrot.slane %v347, 4
      %v350 = vshll.u32 %v297, 16
      %v352 = vrot.slane %v350, 5
      %v353 = vor.u32 %v349, %v352
      %v354 = vrot.slane %v353, 4
      %v356 = vshll.u32 %v298, 16
      %v358 = vrot.slane %v356, 5
      %v359 = vsel %vm321, %v354, %v358
      %v360 = vshrl.u32 %v298, 16
      %v362 = vrot.slane %v360, 4
      %v363 = vor.u32 %v362, %v358
      %v364 = vrot.slane %v363, 4
      %v366 = vshll.u32 %v299, 16
      %v368 = vrot.slane %v366, 5
      %v369 = vsel %vm321, %v364, %v368
      %v371 = vshrl.u32 %v300, 16
      %v373 = vrot.slane %v371, 4
      %v374 = vshll.u32 %v300, 16
      %v376 = vrot.slane %v374, 5
      %v377 = vor.u32 %v373, %v376
      %v378 = vrot.slane %v377, 4
      %v380 = vshll.u32 %v301, 16
      %v382 = vrot.slane %v380, 5
      %v383 = vsel %vm321, %v378, %v382
      %v384 = vshrl.u32 %v301, 16
      %v386 = vrot.slane %v384, 4
      %v387 = vor.u32 %v386, %v382
      %v388 = vrot.slane %v387, 4
      %v390 = vshll.u32 %v302, 16
      %v392 = vrot.slane %v390, 5
      %v393 = vsel %vm321, %v388, %v392
      %v395 = vshrl.u32 %v303, 16
      %v397 = vrot.slane %v395, 4
      %v398 = vshll.u32 %v303, 16
      %v400 = vrot.slane %v398, 5
      %v401 = vor.u32 %v397, %v400
      %v402 = vrot.slane %v401, 4
      %v404 = vshll.u32 %v304, 16
      %v406 = vrot.slane %v404, 5
      %v407 = vsel %vm321, %v402, %v406
      %v408 = vshrl.u32 %v304, 16
      %v410 = vrot.slane %v408, 4
      %v411 = vor.u32 %v410, %v406
      %v412 = vrot.slane %v411, 4
      %v414 = vshll.u32 %v305, 16
      %v416 = vrot.slane %v414, 5
      %v417 = vsel %vm321, %v412, %v416
      %v419 = vshrl.u32 %v306, 16
      %v421 = vrot.slane %v419, 4
      %v422 = vshll.u32 %v306, 16
      %v424 = vrot.slane %v422, 5
      %v425 = vor.u32 %v421, %v424
      %v426 = vrot.slane %v425, 4
      %v428 = vshll.u32 %v307, 16
      %v430 = vrot.slane %v428, 5
      %v431 = vsel %vm321, %v426, %v430
      %v432 = vshrl.u32 %v307, 16
      %v434 = vrot.slane %v432, 4
      %v435 = vor.u32 %v434, %v430
      %v436 = vrot.slane %v435, 4
      %v438 = vshll.u32 %v308, 16
      %v440 = vrot.slane %v438, 5
      %v441 = vsel %vm321, %v436, %v440
      %v443 = vshrl.u32 %v309, 16
      %v445 = vrot.slane %v443, 4
      %v446 = vshll.u32 %v309, 16
      %v448 = vrot.slane %v446, 5
      %v449 = vor.u32 %v445, %v448
      %v450 = vrot.slane %v449, 4
      %v452 = vshll.u32 %v310, 16
      %v454 = vrot.slane %v452, 5
      %v455 = vsel %vm321, %v450, %v454
      %v456 = vshrl.u32 %v310, 16
      %v458 = vrot.slane %v456, 4
      %v459 = vor.u32 %v458, %v454
      %v460 = vrot.slane %v459, 4
      %v462 = vshll.u32 %v311, 16
      %v464 = vrot.slane %v462, 5
      %v465 = vsel %vm321, %v460, %v464
      %v467 = vshrl.u32 %v312, 16
      %v469 = vrot.slane %v467, 4
      %v470 = vshll.u32 %v312, 16
      %v472 = vrot.slane %v470, 5
      %v473 = vor.u32 %v469, %v472
      %v474 = vrot.slane %v473, 4
      %v476 = vshll.u32 %v313, 16
      %v478 = vrot.slane %v476, 5
      %v479 = vsel %vm321, %v474, %v478
      %v480 = vshrl.u32 %v313, 16
      %v482 = vrot.slane %v480, 4
      %v483 = vor.u32 %v482, %v478
      %v484 = vrot.slane %v483, 4
      %v486 = vshll.u32 %v314, 16
      %v488 = vrot.slane %v486, 5
      %v489 = vsel %vm321, %v484, %v488
      %v491 = vshrl.u32 %v315, 16
      %v493 = vrot.slane %v491, 4
      %v494 = vshll.u32 %v315, 16
      %v496 = vrot.slane %v494, 5
      %v497 = vor.u32 %v493, %v496
      %v498 = vrot.slane %v497, 4
      %v500 = vshll.u32 %v316, 16
      %v502 = vrot.slane %v500, 5
      %v503 = vsel %vm321, %v498, %v502
      %v504 = vshrl.u32 %v316, 16
      %v506 = vrot.slane %v504, 4
      %v507 = vor.u32 %v506, %v502
      %v508 = vrot.slane %v507, 4
      %v510 = vshll.u32 %v317, 16
      %v512 = vrot.slane %v510, 5
      %v513 = vsel %vm321, %v508, %v512
      %s514 = scalar_lea.vmem %s2, 2
      %v515 = vld [vmem:[%s514] sm:$0x3]
      %v516 = vunpack.c.l.b16 %v335
      %v517 = vunpack.c.l.b16 %v345
      %v518 = vunpack.c.l.b16 %v359
      %v519 = vunpack.c.l.b16 %v369
      %v520 = vunpack.c.l.b16 %v383
      %v521 = vunpack.c.l.b16 %v393
      %v522 = vunpack.c.l.b16 %v407
      %v523 = vunpack.c.l.b16 %v417
      %v524 = vunpack.c.l.b16 %v431
      %v525 = vunpack.c.l.b16 %v441
      %v526 = vunpack.c.l.b16 %v455
      %v527 = vunpack.c.l.b16 %v465
      %v528 = vunpack.c.l.b16 %v479
      %v529 = vunpack.c.l.b16 %v489
      %v530 = vunpack.c.l.b16 %v503
      %v531 = vunpack.c.l.b16 %v513
      %v532 = vpack.c.b16 %v517, %v516
      %v533 = vpack.c.b16 %v519, %v518
      %v534 = vpack.c.b16 %v521, %v520
      %v535 = vpack.c.b16 %v523, %v522
      %v536 = vpack.c.b16 %v525, %v524
      %v537 = vpack.c.b16 %v527, %v526
      %v538 = vpack.c.b16 %v529, %v528
      %v539 = vpack.c.b16 %v531, %v530
      %vm540 = vcmask 31744
      %v542 = vsel %vm540, %v532, 0
      %v545 = vsel %vm540, %v533, 0
      %v548 = vsel %vm540, %v534, 0
      %v551 = vsel %vm540, %v535, 0
      %v554 = vsel %vm540, %v536, 0
      %v557 = vsel %vm540, %v537, 0
      %v560 = vsel %vm540, %v538, 0
      %v563 = vsel %vm540, %v539, 0
      %vm565 = vcmask 1041408
      %v567 = vsel %vm565, %v515, 0
      %569 = vmatprep.subr.bf16.mxu0 0
      %570 = vmatpush1.bf16.msra.mxu0 %v567
      %571 = vmatprep.subr.bf16.mxu0 0
      %572 = vmatpush1.bf16.msra.mxu0 0
      %573 = vmatprep.subr.bf16.mxu0 0
      %574 = vmatpush1.bf16.msra.mxu0 0
      %575 = vmatprep.subr.bf16.mxu0 0
      %576 = vmatpush1.bf16.msra.mxu0 0
      %577 = vmatprep.subr.bf16.mxu0 0
      %578 = vmatpush1.bf16.msra.mxu0 0
      %579 = vmatprep.subr.bf16.mxu0 0
      %580 = vmatpush1.bf16.msra.mxu0 0
      %581 = vmatprep.subr.bf16.mxu0 0
      %582 = vmatpush1.bf16.msra.mxu0 0
      %583 = vmatprep.subr.bf16.mxu0 0
      %584 = vmatpush1.bf16.msra.mxu0 0
      %585 = vmatprep.subr.bf16.mxu0 0
      %586 = vmatpush1.bf16.msra.mxu0 0
      %587 = vmatprep.subr.bf16.mxu0 0
      %588 = vmatpush1.bf16.msra.mxu0 0
      %589 = vmatprep.subr.bf16.mxu0 0
      %590 = vmatpush1.bf16.msra.mxu0 0
      %591 = vmatprep.subr.bf16.mxu0 0
      %592 = vmatpush1.bf16.msra.mxu0 0
      %593 = vmatprep.subr.bf16.mxu0 0
      %594 = vmatpush1.bf16.msra.mxu0 0
      %595 = vmatprep.subr.bf16.mxu0 0
      %596 = vmatpush1.bf16.msra.mxu0 0
      %597 = vmatprep.subr.bf16.mxu0 0
      %598 = vmatpush1.bf16.msra.mxu0 0
      %599 = vmatprep.subr.bf16.mxu0 0
      %600 = vmatpush1.bf16.msra.mxu0 0
      %601 = vmatprep.mubr.bf16.mxu0 0
      %602 = vmatmul.mubr.bf16.gmra.mrb[0].mxu0 %v542
      %v603 = vpop.f32.mrb[0].mxu0
      %v604 = vadd.f32 0.0, %v603
      %v605 = vpop.f32.mrb[0].mxu0
      %v606 = vpop.f32.mrb[0].mxu0
      %v607 = vadd.f32 0.0, %v606
      %v608 = vpop.f32.mrb[0].mxu0
      %609 = vmatprep.mubr.bf16.mxu0 0
      %610 = vmatmul.mubr.bf16.gmra.mrb[0].mxu0 %v545
      %v611 = vpop.f32.mrb[0].mxu0
      %v612 = vadd.f32 0.0, %v611
      %v613 = vpop.f32.mrb[0].mxu0
      %v614 = vpop.f32.mrb[0].mxu0
      %v615 = vadd.f32 0.0, %v614
      %v616 = vpop.f32.mrb[0].mxu0
      %617 = vmatprep.mubr.bf16.mxu0 0
      %618 = vmatmul.mubr.bf16.gmra.mrb[0].mxu0 %v548
      %v619 = vpop.f32.mrb[0].mxu0
      %v620 = vadd.f32 0.0, %v619
      %v621 = vpop.f32.mrb[0].mxu0
      %v622 = vpop.f32.mrb[0].mxu0
      %v623 = vadd.f32 0.0, %v622
      %v624 = vpop.f32.mrb[0].mxu0
      %625 = vmatprep.mubr.bf16.mxu0 0
      %626 = vmatmul.mubr.bf16.gmra.mrb[0].mxu0 %v551
      %v627 = vpop.f32.mrb[0].mxu0
      %v628 = vadd.f32 0.0, %v627
      %v629 = vpop.f32.mrb[0].mxu0
      %v630 = vpop.f32.mrb[0].mxu0
      %v631 = vadd.f32 0.0, %v630
      %v632 = vpop.f32.mrb[0].mxu0
      %633 = vmatprep.mubr.bf16.mxu0 0
      %634 = vmatmul.mubr.bf16.gmra.mrb[0].mxu0 %v554
      %v635 = vpop.f32.mrb[0].mxu0
      %v636 = vadd.f32 0.0, %v635
      %v637 = vpop.f32.mrb[0].mxu0
      %v638 = vpop.f32.mrb[0].mxu0
      %v639 = vadd.f32 0.0, %v638
      %v640 = vpop.f32.mrb[0].mxu0
      %641 = vmatprep.mubr.bf16.mxu0 0
      %642 = vmatmul.mubr.bf16.gmra.mrb[0].mxu0 %v557
      %v643 = vpop.f32.mrb[0].mxu0
      %v644 = vadd.f32 0.0, %v643
      %v645 = vpop.f32.mrb[0].mxu0
      %v646 = vpop.f32.mrb[0].mxu0
      %v647 = vadd.f32 0.0, %v646
      %v648 = vpop.f32.mrb[0].mxu0
      %649 = vmatprep.mubr.bf16.mxu0 0
      %650 = vmatmul.mubr.bf16.gmra.mrb[0].mxu0 %v560
      %v651 = vpop.f32.mrb[0].mxu0
      %v652 = vadd.f32 0.0, %v651
      %v653 = vpop.f32.mrb[0].mxu0
      %v654 = vpop.f32.mrb[0].mxu0
      %v655 = vadd.f32 0.0, %v654
      %v656 = vpop.f32.mrb[0].mxu0
      %657 = vmatprep.mubr.bf16.mxu0 0
      %658 = vmatmul.mubr.bf16.gmra.mrb[0].mxu0 %v563
      %v659 = vpop.f32.mrb[0].mxu0
      %v660 = vadd.f32 0.0, %v659
      %v661 = vpop.f32.mrb[0].mxu0
      %v662 = vpop.f32.mrb[0].mxu0
      %v663 = vadd.f32 0.0, %v662
      %v664 = vpop.f32.mrb[0].mxu0
      %665 = vdwg.mxu0
      %v682 = vunpack.c.l.b16 %v294
      %v683 = vunpack.c.l.b16 %v295
      %v684 = vunpack.c.l.b16 %v297
      %v685 = vunpack.c.l.b16 %v298
      %v686 = vunpack.c.l.b16 %v300
      %v687 = vunpack.c.l.b16 %v301
      %v688 = vunpack.c.l.b16 %v303
      %v689 = vunpack.c.l.b16 %v304
      %v690 = vunpack.c.l.b16 %v306
      %v691 = vunpack.c.l.b16 %v307
      %v692 = vunpack.c.l.b16 %v309
      %v693 = vunpack.c.l.b16 %v310
      %v694 = vunpack.c.l.b16 %v312
      %v695 = vunpack.c.l.b16 %v313
      %v696 = vunpack.c.l.b16 %v315
      %v697 = vunpack.c.l.b16 %v316
      %v698 = vpack.c.b16 %v683, %v682
      %v699 = vpack.c.b16 %v685, %v684
      %v700 = vpack.c.b16 %v687, %v686
      %v701 = vpack.c.b16 %v689, %v688
      %v702 = vpack.c.b16 %v691, %v690
      %v703 = vpack.c.b16 %v693, %v692
      %v704 = vpack.c.b16 %v695, %v694
      %v705 = vpack.c.b16 %v697, %v696
      %v707 = vsel %vm540, %v698, 0
      %v710 = vsel %vm540, %v699, 0
      %v713 = vsel %vm540, %v700, 0
      %v716 = vsel %vm540, %v701, 0
      %v719 = vsel %vm540, %v702, 0
      %v722 = vsel %vm540, %v703, 0
      %v725 = vsel %vm540, %v704, 0
      %v728 = vsel %vm540, %v705, 0
      %v731 = vsel %vm565, %v318, 0
      %733 = vmatprep.subr.bf16.mxu0 0
      %734 = vmatpush1.bf16.msra.mxu0 %v731
      %735 = vmatprep.subr.bf16.mxu0 0
      %736 = vmatpush1.bf16.msra.mxu0 0
      %737 = vmatprep.subr.bf16.mxu0 0
      %738 = vmatpush1.bf16.msra.mxu0 0
      %739 = vmatprep.subr.bf16.mxu0 0
      %740 = vmatpush1.bf16.msra.mxu0 0
      %741 = vmatprep.subr.bf16.mxu0 0
      %742 = vmatpush1.bf16.msra.mxu0 0
      %743 = vmatprep.subr.bf16.mxu0 0
      %744 = vmatpush1.bf16.msra.mxu0 0
      %745 = vmatprep.subr.bf16.mxu0 0
      %746 = vmatpush1.bf16.msra.mxu0 0
      %747 = vmatprep.subr.bf16.mxu0 0
      %748 = vmatpush1.bf16.msra.mxu0 0
      %749 = vmatprep.subr.bf16.mxu0 0
      %750 = vmatpush1.bf16.msra.mxu0 0
      %751 = vmatprep.subr.bf16.mxu0 0
      %752 = vmatpush1.bf16.msra.mxu0 0
      %753 = vmatprep.subr.bf16.mxu0 0
      %754 = vmatpush1.bf16.msra.mxu0 0
      %755 = vmatprep.subr.bf16.mxu0 0
      %756 = vmatpush1.bf16.msra.mxu0 0
      %757 = vmatprep.subr.bf16.mxu0 0
      %758 = vmatpush1.bf16.msra.mxu0 0
      %759 = vmatprep.subr.bf16.mxu0 0
      %760 = vmatpush1.bf16.msra.mxu0 0
      %761 = vmatprep.subr.bf16.mxu0 0
      %762 = vmatpush1.bf16.msra.mxu0 0
      %763 = vmatprep.subr.bf16.mxu0 0
      %764 = vmatpush1.bf16.msra.mxu0 0
      %765 = vmatprep.mubr.bf16.mxu0 0
      %766 = vmatmul.mubr.bf16.gmra.mrb[0].mxu0 %v707
      %v767 = vpop.f32.mrb[0].mxu0
      %v768 = vadd.f32 %v604, %v767
      %v769 = vpop.f32.mrb[0].mxu0
      %v770 = vpop.f32.mrb[0].mxu0
      %v771 = vadd.f32 %v607, %v770
      %v772 = vpop.f32.mrb[0].mxu0
      %773 = vmatprep.mubr.bf16.mxu0 0
      %774 = vmatmul.mubr.bf16.gmra.mrb[0].mxu0 %v710
      %v775 = vpop.f32.mrb[0].mxu0
      %v776 = vadd.f32 %v612, %v775
      %v777 = vpop.f32.mrb[0].mxu0
      %v778 = vpop.f32.mrb[0].mxu0
      %v779 = vadd.f32 %v615, %v778
      %v780 = vpop.f32.mrb[0].mxu0
      %781 = vmatprep.mubr.bf16.mxu0 0
      %782 = vmatmul.mubr.bf16.gmra.mrb[0].mxu0 %v713
      %v783 = vpop.f32.mrb[0].mxu0
      %v784 = vadd.f32 %v620, %v783
      %v785 = vpop.f32.mrb[0].mxu0
      %v786 = vpop.f32.mrb[0].mxu0
      %v787 = vadd.f32 %v623, %v786
      %v788 = vpop.f32.mrb[0].mxu0
      %789 = vmatprep.mubr.bf16.mxu0 0
      %790 = vmatmul.mubr.bf16.gmra.mrb[0].mxu0 %v716
      %v791 = vpop.f32.mrb[0].mxu0
      %v792 = vadd.f32 %v628, %v791
      %v793 = vpop.f32.mrb[0].mxu0
      %v794 = vpop.f32.mrb[0].mxu0
      %v795 = vadd.f32 %v631, %v794
      %v796 = vpop.f32.mrb[0].mxu0
      %797 = vmatprep.mubr.bf16.mxu0 0
      %798 = vmatmul.mubr.bf16.gmra.mrb[0].mxu0 %v719
      %v799 = vpop.f32.mrb[0].mxu0
      %v800 = vadd.f32 %v636, %v799
      %v801 = vpop.f32.mrb[0].mxu0
      %v802 = vpop.f32.mrb[0].mxu0
      %v803 = vadd.f32 %v639, %v802
      %v804 = vpop.f32.mrb[0].mxu0
      %805 = vmatprep.mubr.bf16.mxu0 0
      %806 = vmatmul.mubr.bf16.gmra.mrb[0].mxu0 %v722
      %v807 = vpop.f32.mrb[0].mxu0
      %v808 = vadd.f32 %v644, %v807
      %v809 = vpop.f32.mrb[0].mxu0
      %v810 = vpop.f32.mrb[0].mxu0
      %v811 = vadd.f32 %v647, %v810
      %v812 = vpop.f32.mrb[0].mxu0
      %813 = vmatprep.mubr.bf16.mxu0 0
      %814 = vmatmul.mubr.bf16.gmra.mrb[0].mxu0 %v725
      %v815 = vpop.f32.mrb[0].mxu0
      %v816 = vadd.f32 %v652, %v815
      %v817 = vpop.f32.mrb[0].mxu0
      %v818 = vpop.f32.mrb[0].mxu0
      %v819 = vadd.f32 %v655, %v818
      %v820 = vpop.f32.mrb[0].mxu0
      %821 = vmatprep.mubr.bf16.mxu0 0
      %822 = vmatmul.mubr.bf16.gmra.mrb[0].mxu0 %v728
      %v823 = vpop.f32.mrb[0].mxu0
      %v824 = vadd.f32 %v660, %v823
      %v825 = vpop.f32.mrb[0].mxu0
      %v826 = vpop.f32.mrb[0].mxu0
      %v827 = vadd.f32 %v663, %v826
      %v828 = vpop.f32.mrb[0].mxu0
      %829 = vdwg.mxu0
      %vm838 = vcmask 1042432
      %vm839 = vcmask 1046532
      %vm840 = vmor %vm838, %vm839
      %v841 = vrot.slane %v294, 5
      %v842 = vrot.slane %v841, 4
      %v843 = vrot.slane %v295, 5
      %v844 = vsel %vm840, %v842, %v843
      %v845 = vrot.slane %v843, 4
      %v846 = vrot.slane %v296, 5
      %v847 = vsel %vm840, %v845, %v846
      %v848 = vrot.slane %v297, 5
      %v849 = vrot.slane %v848, 4
      %v850 = vrot.slane %v298, 5
      %v851 = vsel %vm840, %v849, %v850
      %v852 = vrot.slane %v850, 4
      %v853 = vrot.slane %v299, 5
      %v854 = vsel %vm840, %v852, %v853
      %v855 = vrot.slane %v300, 5
      %v856 = vrot.slane %v855, 4
      %v857 = vrot.slane %v301, 5
      %v858 = vsel %vm840, %v856, %v857
      %v859 = vrot.slane %v857, 4
      %v860 = vrot.slane %v302, 5
      %v861 = vsel %vm840, %v859, %v860
      %v862 = vrot.slane %v303, 5
      %v863 = vrot.slane %v862, 4
      %v864 = vrot.slane %v304, 5
      %v865 = vsel %vm840, %v863, %v864
      %v866 = vrot.slane %v864, 4
      %v867 = vrot.slane %v305, 5
      %v868 = vsel %vm840, %v866, %v867
      %v869 = vrot.slane %v306, 5
      %v870 = vrot.slane %v869, 4
      %v871 = vrot.slane %v307, 5
      %v872 = vsel %vm840, %v870, %v871
      %v873 = vrot.slane %v871, 4
      %v874 = vrot.slane %v308, 5
      %v875 = vsel %vm840, %v873, %v874
      %v876 = vrot.slane %v309, 5
      %v877 = vrot.slane %v876, 4
      %v878 = vrot.slane %v310, 5
      %v879 = vsel %vm840, %v877, %v878
      %v880 = vrot.slane %v878, 4
      %v881 = vrot.slane %v311, 5
      %v882 = vsel %vm840, %v880, %v881
      %v883 = vrot.slane %v312, 5
      %v884 = vrot.slane %v883, 4
      %v885 = vrot.slane %v313, 5
      %v886 = vsel %vm840, %v884, %v885
      %v887 = vrot.slane %v885, 4
      %v888 = vrot.slane %v314, 5
      %v889 = vsel %vm840, %v887, %v888
      %v890 = vrot.slane %v315, 5
      %v891 = vrot.slane %v890, 4
      %v892 = vrot.slane %v316, 5
      %v893 = vsel %vm840, %v891, %v892
      %v894 = vrot.slane %v892, 4
      %v895 = vrot.slane %v317, 5
      %v896 = vsel %vm840, %v894, %v895
      %s897 = scalar_lea.vmem %s2, 4
      %v898 = vld [vmem:[%s897] sm:$0x3]
      %v899 = vunpack.c.l.b16 %v844
      %v900 = vunpack.c.l.b16 %v847
      %v901 = vunpack.c.l.b16 %v851
      %v902 = vunpack.c.l.b16 %v854
      %v903 = vunpack.c.l.b16 %v858
      %v904 = vunpack.c.l.b16 %v861
      %v905 = vunpack.c.l.b16 %v865
      %v906 = vunpack.c.l.b16 %v868
      %v907 = vunpack.c.l.b16 %v872
      %v908 = vunpack.c.l.b16 %v875
      %v909 = vunpack.c.l.b16 %v879
      %v910 = vunpack.c.l.b16 %v882
      %v911 = vunpack.c.l.b16 %v886
      %v912 = vunpack.c.l.b16 %v889
      %v913 = vunpack.c.l.b16 %v893
      %v914 = vunpack.c.l.b16 %v896
      %v915 = vpack.c.b16 %v900, %v899
      %v916 = vpack.c.b16 %v902, %v901
      %v917 = vpack.c.b16 %v904, %v903
      %v918 = vpack.c.b16 %v906, %v905
      %v919 = vpack.c.b16 %v908, %v907
      %v920 = vpack.c.b16 %v910, %v909
      %v921 = vpack.c.b16 %v912, %v911
      %v922 = vpack.c.b16 %v914, %v913
      %v924 = vsel %vm540, %v915, 0
      %v927 = vsel %vm540, %v916, 0
      %v930 = vsel %vm540, %v917, 0
      %v933 = vsel %vm540, %v918, 0
      %v936 = vsel %vm540, %v919, 0
      %v939 = vsel %vm540, %v920, 0
      %v942 = vsel %vm540, %v921, 0
      %v945 = vsel %vm540, %v922, 0
      %v948 = vsel %vm565, %v898, 0
      %950 = vmatprep.subr.bf16.mxu0 0
      %951 = vmatpush1.bf16.msra.mxu0 %v948
      %952 = vmatprep.subr.bf16.mxu0 0
      %953 = vmatpush1.bf16.msra.mxu0 0
      %954 = vmatprep.subr.bf16.mxu0 0
      %955 = vmatpush1.bf16.msra.mxu0 0
      %956 = vmatprep.subr.bf16.mxu0 0
      %957 = vmatpush1.bf16.msra.mxu0 0
      %958 = vmatprep.subr.bf16.mxu0 0
      %959 = vmatpush1.bf16.msra.mxu0 0
      %960 = vmatprep.subr.bf16.mxu0 0
      %961 = vmatpush1.bf16.msra.mxu0 0
      %962 = vmatprep.subr.bf16.mxu0 0
      %963 = vmatpush1.bf16.msra.mxu0 0
      %964 = vmatprep.subr.bf16.mxu0 0
      %965 = vmatpush1.bf16.msra.mxu0 0
      %966 = vmatprep.subr.bf16.mxu0 0
      %967 = vmatpush1.bf16.msra.mxu0 0
      %968 = vmatprep.subr.bf16.mxu0 0
      %969 = vmatpush1.bf16.msra.mxu0 0
      %970 = vmatprep.subr.bf16.mxu0 0
      %971 = vmatpush1.bf16.msra.mxu0 0
      %972 = vmatprep.subr.bf16.mxu0 0
      %973 = vmatpush1.bf16.msra.mxu0 0
      %974 = vmatprep.subr.bf16.mxu0 0
      %975 = vmatpush1.bf16.msra.mxu0 0
      %976 = vmatprep.subr.bf16.mxu0 0
      %977 = vmatpush1.bf16.msra.mxu0 0
      %978 = vmatprep.subr.bf16.mxu0 0
      %979 = vmatpush1.bf16.msra.mxu0 0
      %980 = vmatprep.subr.bf16.mxu0 0
      %981 = vmatpush1.bf16.msra.mxu0 0
      %982 = vmatprep.mubr.bf16.mxu0 0
      %983 = vmatmul.mubr.bf16.gmra.mrb[0].mxu0 %v924
      %v984 = vpop.f32.mrb[0].mxu0
      %v985 = vadd.f32 0.0, %v984
      %v986 = vpop.f32.mrb[0].mxu0
      %v987 = vpop.f32.mrb[0].mxu0
      %v988 = vadd.f32 0.0, %v987
      %v989 = vpop.f32.mrb[0].mxu0
      %990 = vmatprep.mubr.bf16.mxu0 0
      %991 = vmatmul.mubr.bf16.gmra.mrb[0].mxu0 %v927
      %v992 = vpop.f32.mrb[0].mxu0
      %v993 = vadd.f32 0.0, %v992
      %v994 = vpop.f32.mrb[0].mxu0
      %v995 = vpop.f32.mrb[0].mxu0
      %v996 = vadd.f32 0.0, %v995
      %v997 = vpop.f32.mrb[0].mxu0
      %998 = vmatprep.mubr.bf16.mxu0 0
      %999 = vmatmul.mubr.bf16.gmra.mrb[0].mxu0 %v930
      %v1000 = vpop.f32.mrb[0].mxu0
      %v1001 = vadd.f32 0.0, %v1000
      %v1002 = vpop.f32.mrb[0].mxu0
      %v1003 = vpop.f32.mrb[0].mxu0
      %v1004 = vadd.f32 0.0, %v1003
      %v1005 = vpop.f32.mrb[0].mxu0
      %1006 = vmatprep.mubr.bf16.mxu0 0
      %1007 = vmatmul.mubr.bf16.gmra.mrb[0].mxu0 %v933
      %v1008 = vpop.f32.mrb[0].mxu0
      %v1009 = vadd.f32 0.0, %v1008
      %v1010 = vpop.f32.mrb[0].mxu0
      %v1011 = vpop.f32.mrb[0].mxu0
      %v1012 = vadd.f32 0.0, %v1011
      %v1013 = vpop.f32.mrb[0].mxu0
      %1014 = vmatprep.mubr.bf16.mxu0 0
      %1015 = vmatmul.mubr.bf16.gmra.mrb[0].mxu0 %v936
      %v1016 = vpop.f32.mrb[0].mxu0
      %v1017 = vadd.f32 0.0, %v1016
      %v1018 = vpop.f32.mrb[0].mxu0
      %v1019 = vpop.f32.mrb[0].mxu0
      %v1020 = vadd.f32 0.0, %v1019
      %v1021 = vpop.f32.mrb[0].mxu0
      %1022 = vmatprep.mubr.bf16.mxu0 0
      %1023 = vmatmul.mubr.bf16.gmra.mrb[0].mxu0 %v939
      %v1024 = vpop.f32.mrb[0].mxu0
      %v1025 = vadd.f32 0.0, %v1024
      %v1026 = vpop.f32.mrb[0].mxu0
      %v1027 = vpop.f32.mrb[0].mxu0
      %v1028 = vadd.f32 0.0, %v1027
      %v1029 = vpop.f32.mrb[0].mxu0
      %1030 = vmatprep.mubr.bf16.mxu0 0
      %1031 = vmatmul.mubr.bf16.gmra.mrb[0].mxu0 %v942
      %v1032 = vpop.f32.mrb[0].mxu0
      %v1033 = vadd.f32 0.0, %v1032
      %v1034 = vpop.f32.mrb[0].mxu0
      %v1035 = vpop.f32.mrb[0].mxu0
      %v1036 = vadd.f32 0.0, %v1035
      %v1037 = vpop.f32.mrb[0].mxu0
      %1038 = vmatprep.mubr.bf16.mxu0 0
      %1039 = vmatmul.mubr.bf16.gmra.mrb[0].mxu0 %v945
      %v1040 = vpop.f32.mrb[0].mxu0
      %v1041 = vadd.f32 0.0, %v1040
      %v1042 = vpop.f32.mrb[0].mxu0
      %v1043 = vpop.f32.mrb[0].mxu0
      %v1044 = vadd.f32 0.0, %v1043
      %v1045 = vpop.f32.mrb[0].mxu0
      %1046 = vdwg.mxu0
      %v1047 = vadd.f32 %v768, %v985
      %v1048 = vadd.f32 %v771, %v988
      %v1049 = vadd.f32 %v776, %v993
      %v1050 = vadd.f32 %v779, %v996
      %v1051 = vadd.f32 %v784, %v1001
      %v1052 = vadd.f32 %v787, %v1004
      %v1053 = vadd.f32 %v792, %v1009
      %v1054 = vadd.f32 %v795, %v1012
      %v1055 = vadd.f32 %v800, %v1017
      %v1056 = vadd.f32 %v803, %v1020
      %v1057 = vadd.f32 %v808, %v1025
      %v1058 = vadd.f32 %v811, %v1028
      %v1059 = vadd.f32 %v816, %v1033
      %v1060 = vadd.f32 %v819, %v1036
      %v1061 = vadd.f32 %v824, %v1041
      %v1062 = vadd.f32 %v827, %v1044
      %s1063 = scalar_lea.vmem %s260, 12
      %v1064 = vld [vmem:[%s1063] sm:$0xf]
      %v1065 = vld [vmem:[%s1063 + $0x4] sm:$0xf]
      %v1066 = vld [vmem:[%s1063 + $0x8] sm:$0x1]
      %v1067 = vld [vmem:[%s1063 + $0xc] sm:$0xf]
      %v1068 = vld [vmem:[%s1063 + $0x10] sm:$0xf]
      %v1069 = vld [vmem:[%s1063 + $0x14] sm:$0x1]
      %v1070 = vld [vmem:[%s1063 + $0x18] sm:$0xf]
      %v1071 = vld [vmem:[%s1063 + $0x1c] sm:$0xf]
      %v1072 = vld [vmem:[%s1063 + $0x20] sm:$0x1]
      %v1073 = vld [vmem:[%s1063 + $0x24] sm:$0xf]
      %v1074 = vld [vmem:[%s1063 + $0x28] sm:$0xf]
      %v1075 = vld [vmem:[%s1063 + $0x2c] sm:$0x1]
      %v1076 = vld [vmem:[%s1063 + $0x30] sm:$0xf]
      %v1077 = vld [vmem:[%s1063 + $0x34] sm:$0xf]
      %v1078 = vld [vmem:[%s1063 + $0x38] sm:$0x1]
      %v1079 = vld [vmem:[%s1063 + $0x3c] sm:$0xf]
      %v1080 = vld [vmem:[%s1063 + $0x40] sm:$0xf]
      %v1081 = vld [vmem:[%s1063 + $0x44] sm:$0x1]
      %v1082 = vld [vmem:[%s1063 + $0x48] sm:$0xf]
      %v1083 = vld [vmem:[%s1063 + $0x4c] sm:$0xf]
      %v1084 = vld [vmem:[%s1063 + $0x50] sm:$0x1]
      %v1085 = vld [vmem:[%s1063 + $0x54] sm:$0xf]
      %v1086 = vld [vmem:[%s1063 + $0x58] sm:$0xf]
      %v1087 = vld [vmem:[%s1063 + $0x5c] sm:$0x1]
      %s1088 = scalar_lea.vmem %s2, 6
      %v1089 = vld [vmem:[%s1088] sm:$0x3]
      %v1106 = vunpack.c.l.b16 %v1064
      %v1107 = vunpack.c.l.b16 %v1065
      %v1108 = vunpack.c.l.b16 %v1067
      %v1109 = vunpack.c.l.b16 %v1068
      %v1110 = vunpack.c.l.b16 %v1070
      %v1111 = vunpack.c.l.b16 %v1071
      %v1112 = vunpack.c.l.b16 %v1073
      %v1113 = vunpack.c.l.b16 %v1074
      %v1114 = vunpack.c.l.b16 %v1076
      %v1115 = vunpack.c.l.b16 %v1077
      %v1116 = vunpack.c.l.b16 %v1079
      %v1117 = vunpack.c.l.b16 %v1080
      %v1118 = vunpack.c.l.b16 %v1082
      %v1119 = vunpack.c.l.b16 %v1083
      %v1120 = vunpack.c.l.b16 %v1085
      %v1121 = vunpack.c.l.b16 %v1086
      %v1122 = vpack.c.b16 %v1107, %v1106
      %v1123 = vpack.c.b16 %v1109, %v1108
      %v1124 = vpack.c.b16 %v1111, %v1110
      %v1125 = vpack.c.b16 %v1113, %v1112
      %v1126 = vpack.c.b16 %v1115, %v1114
      %v1127 = vpack.c.b16 %v1117, %v1116
      %v1128 = vpack.c.b16 %v1119, %v1118
      %v1129 = vpack.c.b16 %v1121, %v1120
      %v1131 = vsel %vm540, %v1122, 0
      %v1134 = vsel %vm540, %v1123, 0
      %v1137 = vsel %vm540, %v1124, 0
      %v1140 = vsel %vm540, %v1125, 0
      %v1143 = vsel %vm540, %v1126, 0
      %v1146 = vsel %vm540, %v1127, 0
      %v1149 = vsel %vm540, %v1128, 0
      %v1152 = vsel %vm540, %v1129, 0
      %v1155 = vsel %vm565, %v1089, 0
      %1157 = vmatprep.subr.bf16.mxu0 0
      %1158 = vmatpush1.bf16.msra.mxu0 %v1155
      %1159 = vmatprep.subr.bf16.mxu0 0
      %1160 = vmatpush1.bf16.msra.mxu0 0
      %1161 = vmatprep.subr.bf16.mxu0 0
      %1162 = vmatpush1.bf16.msra.mxu0 0
      %1163 = vmatprep.subr.bf16.mxu0 0
      %1164 = vmatpush1.bf16.msra.mxu0 0
      %1165 = vmatprep.subr.bf16.mxu0 0
      %1166 = vmatpush1.bf16.msra.mxu0 0
      %1167 = vmatprep.subr.bf16.mxu0 0
      %1168 = vmatpush1.bf16.msra.mxu0 0
      %1169 = vmatprep.subr.bf16.mxu0 0
      %1170 = vmatpush1.bf16.msra.mxu0 0
      %1171 = vmatprep.subr.bf16.mxu0 0
      %1172 = vmatpush1.bf16.msra.mxu0 0
      %1173 = vmatprep.subr.bf16.mxu0 0
      %1174 = vmatpush1.bf16.msra.mxu0 0
      %1175 = vmatprep.subr.bf16.mxu0 0
      %1176 = vmatpush1.bf16.msra.mxu0 0
      %1177 = vmatprep.subr.bf16.mxu0 0
      %1178 = vmatpush1.bf16.msra.mxu0 0
      %1179 = vmatprep.subr.bf16.mxu0 0
      %1180 = vmatpush1.bf16.msra.mxu0 0
      %1181 = vmatprep.subr.bf16.mxu0 0
      %1182 = vmatpush1.bf16.msra.mxu0 0
      %1183 = vmatprep.subr.bf16.mxu0 0
      %1184 = vmatpush1.bf16.msra.mxu0 0
      %1185 = vmatprep.subr.bf16.mxu0 0
      %1186 = vmatpush1.bf16.msra.mxu0 0
      %1187 = vmatprep.subr.bf16.mxu0 0
      %1188 = vmatpush1.bf16.msra.mxu0 0
      %1189 = vmatprep.mubr.bf16.mxu0 0
      %1190 = vmatmul.mubr.bf16.gmra.mrb[0].mxu0 %v1131
      %v1191 = vpop.f32.mrb[0].mxu0
      %v1192 = vadd.f32 0.0, %v1191
      %v1193 = vpop.f32.mrb[0].mxu0
      %v1194 = vpop.f32.mrb[0].mxu0
      %v1195 = vadd.f32 0.0, %v1194
      %v1196 = vpop.f32.mrb[0].mxu0
      %1197 = vmatprep.mubr.bf16.mxu0 0
      %1198 = vmatmul.mubr.bf16.gmra.mrb[0].mxu0 %v1134
      %v1199 = vpop.f32.mrb[0].mxu0
      %v1200 = vadd.f32 0.0, %v1199
      %v1201 = vpop.f32.mrb[0].mxu0
      %v1202 = vpop.f32.mrb[0].mxu0
      %v1203 = vadd.f32 0.0, %v1202
      %v1204 = vpop.f32.mrb[0].mxu0
      %1205 = vmatprep.mubr.bf16.mxu0 0
      %1206 = vmatmul.mubr.bf16.gmra.mrb[0].mxu0 %v1137
      %v1207 = vpop.f32.mrb[0].mxu0
      %v1208 = vadd.f32 0.0, %v1207
      %v1209 = vpop.f32.mrb[0].mxu0
      %v1210 = vpop.f32.mrb[0].mxu0
      %v1211 = vadd.f32 0.0, %v1210
      %v1212 = vpop.f32.mrb[0].mxu0
      %1213 = vmatprep.mubr.bf16.mxu0 0
      %1214 = vmatmul.mubr.bf16.gmra.mrb[0].mxu0 %v1140
      %v1215 = vpop.f32.mrb[0].mxu0
      %v1216 = vadd.f32 0.0, %v1215
      %v1217 = vpop.f32.mrb[0].mxu0
      %v1218 = vpop.f32.mrb[0].mxu0
      %v1219 = vadd.f32 0.0, %v1218
      %v1220 = vpop.f32.mrb[0].mxu0
      %1221 = vmatprep.mubr.bf16.mxu0 0
      %1222 = vmatmul.mubr.bf16.gmra.mrb[0].mxu0 %v1143
      %v1223 = vpop.f32.mrb[0].mxu0
      %v1224 = vadd.f32 0.0, %v1223
      %v1225 = vpop.f32.mrb[0].mxu0
      %v1226 = vpop.f32.mrb[0].mxu0
      %v1227 = vadd.f32 0.0, %v1226
      %v1228 = vpop.f32.mrb[0].mxu0
      %1229 = vmatprep.mubr.bf16.mxu0 0
      %1230 = vmatmul.mubr.bf16.gmra.mrb[0].mxu0 %v1146
      %v1231 = vpop.f32.mrb[0].mxu0
      %v1232 = vadd.f32 0.0, %v1231
      %v1233 = vpop.f32.mrb[0].mxu0
      %v1234 = vpop.f32.mrb[0].mxu0
      %v1235 = vadd.f32 0.0, %v1234
      %v1236 = vpop.f32.mrb[0].mxu0
      %1237 = vmatprep.mubr.bf16.mxu0 0
      %1238 = vmatmul.mubr.bf16.gmra.mrb[0].mxu0 %v1149
      %v1239 = vpop.f32.mrb[0].mxu0
      %v1240 = vadd.f32 0.0, %v1239
      %v1241 = vpop.f32.mrb[0].mxu0
      %v1242 = vpop.f32.mrb[0].mxu0
      %v1243 = vadd.f32 0.0, %v1242
      %v1244 = vpop.f32.mrb[0].mxu0
      %1245 = vmatprep.mubr.bf16.mxu0 0
      %1246 = vmatmul.mubr.bf16.gmra.mrb[0].mxu0 %v1152
      %v1247 = vpop.f32.mrb[0].mxu0
      %v1248 = vadd.f32 0.0, %v1247
      %v1249 = vpop.f32.mrb[0].mxu0
      %v1250 = vpop.f32.mrb[0].mxu0
      %v1251 = vadd.f32 0.0, %v1250
      %v1252 = vpop.f32.mrb[0].mxu0
      %1253 = vdwg.mxu0
      %v1254 = vadd.f32 %v1047, %v1192
      %v1255 = vadd.f32 %v1048, %v1195
      %v1256 = vadd.f32 %v1049, %v1200
      %v1257 = vadd.f32 %v1050, %v1203
      %v1258 = vadd.f32 %v1051, %v1208
      %v1259 = vadd.f32 %v1052, %v1211
      %v1260 = vadd.f32 %v1053, %v1216
      %v1261 = vadd.f32 %v1054, %v1219
      %v1262 = vadd.f32 %v1055, %v1224
      %v1263 = vadd.f32 %v1056, %v1227
      %v1264 = vadd.f32 %v1057, %v1232
      %v1265 = vadd.f32 %v1058, %v1235
      %v1266 = vadd.f32 %v1059, %v1240
      %v1267 = vadd.f32 %v1060, %v1243
      %v1268 = vadd.f32 %v1061, %v1248
      %v1269 = vadd.f32 %v1062, %v1251
      %v1271 = vshrl.u32 %v1064, 16
      %v1273 = vrot.slane %v1271, 4
      %v1274 = vshll.u32 %v1064, 16
      %v1276 = vrot.slane %v1274, 5
      %v1277 = vor.u32 %v1273, %v1276
      %v1278 = vrot.slane %v1277, 4
      %v1280 = vshll.u32 %v1065, 16
      %v1282 = vrot.slane %v1280, 5
      %v1283 = vsel %vm321, %v1278, %v1282
      %v1284 = vshrl.u32 %v1065, 16
      %v1286 = vrot.slane %v1284, 4
      %v1287 = vor.u32 %v1286, %v1282
      %v1288 = vrot.slane %v1287, 4
      %v1290 = vshll.u32 %v1066, 16
      %v1292 = vrot.slane %v1290, 5
      %v1293 = vsel %vm321, %v1288, %v1292
      %v1295 = vshrl.u32 %v1067, 16
      %v1297 = vrot.slane %v1295, 4
      %v1298 = vshll.u32 %v1067, 16
      %v1300 = vrot.slane %v1298, 5
      %v1301 = vor.u32 %v1297, %v1300
      %v1302 = vrot.slane %v1301, 4
      %v1304 = vshll.u32 %v1068, 16
      %v1306 = vrot.slane %v1304, 5
      %v1307 = vsel %vm321, %v1302, %v1306
      %v1308 = vshrl.u32 %v1068, 16
      %v1310 = vrot.slane %v1308, 4
      %v1311 = vor.u32 %v1310, %v1306
      %v1312 = vrot.slane %v1311, 4
      %v1314 = vshll.u32 %v1069, 16
      %v1316 = vrot.slane %v1314, 5
      %v1317 = vsel %vm321, %v1312, %v1316
      %v1319 = vshrl.u32 %v1070, 16
      %v1321 = vrot.slane %v1319, 4
      %v1322 = vshll.u32 %v1070, 16
      %v1324 = vrot.slane %v1322, 5
      %v1325 = vor.u32 %v1321, %v1324
      %v1326 = vrot.slane %v1325, 4
      %v1328 = vshll.u32 %v1071, 16
      %v1330 = vrot.slane %v1328, 5
      %v1331 = vsel %vm321, %v1326, %v1330
      %v1332 = vshrl.u32 %v1071, 16
      %v1334 = vrot.slane %v1332, 4
      %v1335 = vor.u32 %v1334, %v1330
      %v1336 = vrot.slane %v1335, 4
      %v1338 = vshll.u32 %v1072, 16
      %v1340 = vrot.slane %v1338, 5
      %v1341 = vsel %vm321, %v1336, %v1340
      %v1343 = vshrl.u32 %v1073, 16
      %v1345 = vrot.slane %v1343, 4
      %v1346 = vshll.u32 %v1073, 16
      %v1348 = vrot.slane %v1346, 5
      %v1349 = vor.u32 %v1345, %v1348
      %v1350 = vrot.slane %v1349, 4
      %v1352 = vshll.u32 %v1074, 16
      %v1354 = vrot.slane %v1352, 5
      %v1355 = vsel %vm321, %v1350, %v1354
      %v1356 = vshrl.u32 %v1074, 16
      %v1358 = vrot.slane %v1356, 4
      %v1359 = vor.u32 %v1358, %v1354
      %v1360 = vrot.slane %v1359, 4
      %v1362 = vshll.u32 %v1075, 16
      %v1364 = vrot.slane %v1362, 5
      %v1365 = vsel %vm321, %v1360, %v1364
      %v1367 = vshrl.u32 %v1076, 16
      %v1369 = vrot.slane %v1367, 4
      %v1370 = vshll.u32 %v1076, 16
      %v1372 = vrot.slane %v1370, 5
      %v1373 = vor.u32 %v1369, %v1372
      %v1374 = vrot.slane %v1373, 4
      %v1376 = vshll.u32 %v1077, 16
      %v1378 = vrot.slane %v1376, 5
      %v1379 = vsel %vm321, %v1374, %v1378
      %v1380 = vshrl.u32 %v1077, 16
      %v1382 = vrot.slane %v1380, 4
      %v1383 = vor.u32 %v1382, %v1378
      %v1384 = vrot.slane %v1383, 4
      %v1386 = vshll.u32 %v1078, 16
      %v1388 = vrot.slane %v1386, 5
      %v1389 = vsel %vm321, %v1384, %v1388
      %v1391 = vshrl.u32 %v1079, 16
      %v1393 = vrot.slane %v1391, 4
      %v1394 = vshll.u32 %v1079, 16
      %v1396 = vrot.slane %v1394, 5
      %v1397 = vor.u32 %v1393, %v1396
      %v1398 = vrot.slane %v1397, 4
      %v1400 = vshll.u32 %v1080, 16
      %v1402 = vrot.slane %v1400, 5
      %v1403 = vsel %vm321, %v1398, %v1402
      %v1404 = vshrl.u32 %v1080, 16
      %v1406 = vrot.slane %v1404, 4
      %v1407 = vor.u32 %v1406, %v1402
      %v1408 = vrot.slane %v1407, 4
      %v1410 = vshll.u32 %v1081, 16
      %v1412 = vrot.slane %v1410, 5
      %v1413 = vsel %vm321, %v1408, %v1412
      %v1415 = vshrl.u32 %v1082, 16
      %v1417 = vrot.slane %v1415, 4
      %v1418 = vshll.u32 %v1082, 16
      %v1420 = vrot.slane %v1418, 5
      %v1421 = vor.u32 %v1417, %v1420
      %v1422 = vrot.slane %v1421, 4
      %v1424 = vshll.u32 %v1083, 16
      %v1426 = vrot.slane %v1424, 5
      %v1427 = vsel %vm321, %v1422, %v1426
      %v1428 = vshrl.u32 %v1083, 16
      %v1430 = vrot.slane %v1428, 4
      %v1431 = vor.u32 %v1430, %v1426
      %v1432 = vrot.slane %v1431, 4
      %v1434 = vshll.u32 %v1084, 16
      %v1436 = vrot.slane %v1434, 5
      %v1437 = vsel %vm321, %v1432, %v1436
      %v1439 = vshrl.u32 %v1085, 16
      %v1441 = vrot.slane %v1439, 4
      %v1442 = vshll.u32 %v1085, 16
      %v1444 = vrot.slane %v1442, 5
      %v1445 = vor.u32 %v1441, %v1444
      %v1446 = vrot.slane %v1445, 4
      %v1448 = vshll.u32 %v1086, 16
      %v1450 = vrot.slane %v1448, 5
      %v1451 = vsel %vm321, %v1446, %v1450
      %v1452 = vshrl.u32 %v1086, 16
      %v1454 = vrot.slane %v1452, 4
      %v1455 = vor.u32 %v1454, %v1450
      %v1456 = vrot.slane %v1455, 4
      %v1458 = vshll.u32 %v1087, 16
      %v1460 = vrot.slane %v1458, 5
      %v1461 = vsel %vm321, %v1456, %v1460
      %s1462 = scalar_lea.vmem %s2, 8
      %v1463 = vld [vmem:[%s1462] sm:$0x3]
      %v1464 = vunpack.c.l.b16 %v1283
      %v1465 = vunpack.c.l.b16 %v1293
      %v1466 = vunpack.c.l.b16 %v1307
      %v1467 = vunpack.c.l.b16 %v1317
      %v1468 = vunpack.c.l.b16 %v1331
      %v1469 = vunpack.c.l.b16 %v1341
      %v1470 = vunpack.c.l.b16 %v1355
      %v1471 = vunpack.c.l.b16 %v1365
      %v1472 = vunpack.c.l.b16 %v1379
      %v1473 = vunpack.c.l.b16 %v1389
      %v1474 = vunpack.c.l.b16 %v1403
      %v1475 = vunpack.c.l.b16 %v1413
      %v1476 = vunpack.c.l.b16 %v1427
      %v1477 = vunpack.c.l.b16 %v1437
      %v1478 = vunpack.c.l.b16 %v1451
      %v1479 = vunpack.c.l.b16 %v1461
      %v1480 = vpack.c.b16 %v1465, %v1464
      %v1481 = vpack.c.b16 %v1467, %v1466
      %v1482 = vpack.c.b16 %v1469, %v1468
      %v1483 = vpack.c.b16 %v1471, %v1470
      %v1484 = vpack.c.b16 %v1473, %v1472
      %v1485 = vpack.c.b16 %v1475, %v1474
      %v1486 = vpack.c.b16 %v1477, %v1476
      %v1487 = vpack.c.b16 %v1479, %v1478
      %v1489 = vsel %vm540, %v1480, 0
      %v1492 = vsel %vm540, %v1481, 0
      %v1495 = vsel %vm540, %v1482, 0
      %v1498 = vsel %vm540, %v1483, 0
      %v1501 = vsel %vm540, %v1484, 0
      %v1504 = vsel %vm540, %v1485, 0
      %v1507 = vsel %vm540, %v1486, 0
      %v1510 = vsel %vm540, %v1487, 0
      %v1513 = vsel %vm565, %v1463, 0
      %1515 = vmatprep.subr.bf16.mxu0 0
      %1516 = vmatpush1.bf16.msra.mxu0 %v1513
      %1517 = vmatprep.subr.bf16.mxu0 0
      %1518 = vmatpush1.bf16.msra.mxu0 0
      %1519 = vmatprep.subr.bf16.mxu0 0
      %1520 = vmatpush1.bf16.msra.mxu0 0
      %1521 = vmatprep.subr.bf16.mxu0 0
      %1522 = vmatpush1.bf16.msra.mxu0 0
      %1523 = vmatprep.subr.bf16.mxu0 0
      %1524 = vmatpush1.bf16.msra.mxu0 0
      %1525 = vmatprep.subr.bf16.mxu0 0
      %1526 = vmatpush1.bf16.msra.mxu0 0
      %1527 = vmatprep.subr.bf16.mxu0 0
      %1528 = vmatpush1.bf16.msra.mxu0 0
      %1529 = vmatprep.subr.bf16.mxu0 0
      %1530 = vmatpush1.bf16.msra.mxu0 0
      %1531 = vmatprep.subr.bf16.mxu0 0
      %1532 = vmatpush1.bf16.msra.mxu0 0
      %1533 = vmatprep.subr.bf16.mxu0 0
      %1534 = vmatpush1.bf16.msra.mxu0 0
      %1535 = vmatprep.subr.bf16.mxu0 0
      %1536 = vmatpush1.bf16.msra.mxu0 0
      %1537 = vmatprep.subr.bf16.mxu0 0
      %1538 = vmatpush1.bf16.msra.mxu0 0
      %1539 = vmatprep.subr.bf16.mxu0 0
      %1540 = vmatpush1.bf16.msra.mxu0 0
      %1541 = vmatprep.subr.bf16.mxu0 0
      %1542 = vmatpush1.bf16.msra.mxu0 0
      %1543 = vmatprep.subr.bf16.mxu0 0
      %1544 = vmatpush1.bf16.msra.mxu0 0
      %1545 = vmatprep.subr.bf16.mxu0 0
      %1546 = vmatpush1.bf16.msra.mxu0 0
      %1547 = vmatprep.mubr.bf16.mxu0 0
      %1548 = vmatmul.mubr.bf16.gmra.mrb[0].mxu0 %v1489
      %v1549 = vpop.f32.mrb[0].mxu0
      %v1550 = vadd.f32 0.0, %v1549
      %v1551 = vpop.f32.mrb[0].mxu0
      %v1552 = vpop.f32.mrb[0].mxu0
      %v1553 = vadd.f32 0.0, %v1552
      %v1554 = vpop.f32.mrb[0].mxu0
      %1555 = vmatprep.mubr.bf16.mxu0 0
      %1556 = vmatmul.mubr.bf16.gmra.mrb[0].mxu0 %v1492
      %v1557 = vpop.f32.mrb[0].mxu0
      %v1558 = vadd.f32 0.0, %v1557
      %v1559 = vpop.f32.mrb[0].mxu0
      %v1560 = vpop.f32.mrb[0].mxu0
      %v1561 = vadd.f32 0.0, %v1560
      %v1562 = vpop.f32.mrb[0].mxu0
      %1563 = vmatprep.mubr.bf16.mxu0 0
      %1564 = vmatmul.mubr.bf16.gmra.mrb[0].mxu0 %v1495
      %v1565 = vpop.f32.mrb[0].mxu0
      %v1566 = vadd.f32 0.0, %v1565
      %v1567 = vpop.f32.mrb[0].mxu0
      %v1568 = vpop.f32.mrb[0].mxu0
      %v1569 = vadd.f32 0.0, %v1568
      %v1570 = vpop.f32.mrb[0].mxu0
      %1571 = vmatprep.mubr.bf16.mxu0 0
      %1572 = vmatmul.mubr.bf16.gmra.mrb[0].mxu0 %v1498
      %v1573 = vpop.f32.mrb[0].mxu0
      %v1574 = vadd.f32 0.0, %v1573
      %v1575 = vpop.f32.mrb[0].mxu0
      %v1576 = vpop.f32.mrb[0].mxu0
      %v1577 = vadd.f32 0.0, %v1576
      %v1578 = vpop.f32.mrb[0].mxu0
      %1579 = vmatprep.mubr.bf16.mxu0 0
      %1580 = vmatmul.mubr.bf16.gmra.mrb[0].mxu0 %v1501
      %v1581 = vpop.f32.mrb[0].mxu0
      %v1582 = vadd.f32 0.0, %v1581
      %v1583 = vpop.f32.mrb[0].mxu0
      %v1584 = vpop.f32.mrb[0].mxu0
      %v1585 = vadd.f32 0.0, %v1584
      %v1586 = vpop.f32.mrb[0].mxu0
      %1587 = vmatprep.mubr.bf16.mxu0 0
      %1588 = vmatmul.mubr.bf16.gmra.mrb[0].mxu0 %v1504
      %v1589 = vpop.f32.mrb[0].mxu0
      %v1590 = vadd.f32 0.0, %v1589
      %v1591 = vpop.f32.mrb[0].mxu0
      %v1592 = vpop.f32.mrb[0].mxu0
      %v1593 = vadd.f32 0.0, %v1592
      %v1594 = vpop.f32.mrb[0].mxu0
      %1595 = vmatprep.mubr.bf16.mxu0 0
      %1596 = vmatmul.mubr.bf16.gmra.mrb[0].mxu0 %v1507
      %v1597 = vpop.f32.mrb[0].mxu0
      %v1598 = vadd.f32 0.0, %v1597
      %v1599 = vpop.f32.mrb[0].mxu0
      %v1600 = vpop.f32.mrb[0].mxu0
      %v1601 = vadd.f32 0.0, %v1600
      %v1602 = vpop.f32.mrb[0].mxu0
      %1603 = vmatprep.mubr.bf16.mxu0 0
      %1604 = vmatmul.mubr.bf16.gmra.mrb[0].mxu0 %v1510
      %v1605 = vpop.f32.mrb[0].mxu0
      %v1606 = vadd.f32 0.0, %v1605
      %v1607 = vpop.f32.mrb[0].mxu0
      %v1608 = vpop.f32.mrb[0].mxu0
      %v1609 = vadd.f32 0.0, %v1608
      %v1610 = vpop.f32.mrb[0].mxu0
      %1611 = vdwg.mxu0
      %v1612 = vadd.f32 %v1254, %v1550
      %v1613 = vadd.f32 %v1255, %v1553
      %v1614 = vadd.f32 %v1256, %v1558
      %v1615 = vadd.f32 %v1257, %v1561
      %v1616 = vadd.f32 %v1258, %v1566
      %v1617 = vadd.f32 %v1259, %v1569
      %v1618 = vadd.f32 %v1260, %v1574
      %v1619 = vadd.f32 %v1261, %v1577
      %v1620 = vadd.f32 %v1262, %v1582
      %v1621 = vadd.f32 %v1263, %v1585
      %v1622 = vadd.f32 %v1264, %v1590
      %v1623 = vadd.f32 %v1265, %v1593
      %v1624 = vadd.f32 %v1266, %v1598
      %v1625 = vadd.f32 %v1267, %v1601
      %v1626 = vadd.f32 %v1268, %v1606
      %v1627 = vadd.f32 %v1269, %v1609
      %v1636 = vrot.slane %v1064, 5
      %v1637 = vrot.slane %v1636, 4
      %v1638 = vrot.slane %v1065, 5
      %v1639 = vsel %vm840, %v1637, %v1638
      %v1640 = vrot.slane %v1638, 4
      %v1641 = vrot.slane %v1066, 5
      %v1642 = vsel %vm840, %v1640, %v1641
      %v1643 = vrot.slane %v1067, 5
      %v1644 = vrot.slane %v1643, 4
      %v1645 = vrot.slane %v1068, 5
      %v1646 = vsel %vm840, %v1644, %v1645
      %v1647 = vrot.slane %v1645, 4
      %v1648 = vrot.slane %v1069, 5
      %v1649 = vsel %vm840, %v1647, %v1648
      %v1650 = vrot.slane %v1070, 5
      %v1651 = vrot.slane %v1650, 4
      %v1652 = vrot.slane %v1071, 5
      %v1653 = vsel %vm840, %v1651, %v1652
      %v1654 = vrot.slane %v1652, 4
      %v1655 = vrot.slane %v1072, 5
      %v1656 = vsel %vm840, %v1654, %v1655
      %v1657 = vrot.slane %v1073, 5
      %v1658 = vrot.slane %v1657, 4
      %v1659 = vrot.slane %v1074, 5
      %v1660 = vsel %vm840, %v1658, %v1659
      %v1661 = vrot.slane %v1659, 4
      %v1662 = vrot.slane %v1075, 5
      %v1663 = vsel %vm840, %v1661, %v1662
      %v1664 = vrot.slane %v1076, 5
      %v1665 = vrot.slane %v1664, 4
      %v1666 = vrot.slane %v1077, 5
      %v1667 = vsel %vm840, %v1665, %v1666
      %v1668 = vrot.slane %v1666, 4
      %v1669 = vrot.slane %v1078, 5
      %v1670 = vsel %vm840, %v1668, %v1669
      %v1671 = vrot.slane %v1079, 5
      %v1672 = vrot.slane %v1671, 4
      %v1673 = vrot.slane %v1080, 5
      %v1674 = vsel %vm840, %v1672, %v1673
      %v1675 = vrot.slane %v1673, 4
      %v1676 = vrot.slane %v1081, 5
      %v1677 = vsel %vm840, %v1675, %v1676
      %v1678 = vrot.slane %v1082, 5
      %v1679 = vrot.slane %v1678, 4
      %v1680 = vrot.slane %v1083, 5
      %v1681 = vsel %vm840, %v1679, %v1680
      %v1682 = vrot.slane %v1680, 4
      %v1683 = vrot.slane %v1084, 5
      %v1684 = vsel %vm840, %v1682, %v1683
      %v1685 = vrot.slane %v1085, 5
      %v1686 = vrot.slane %v1685, 4
      %v1687 = vrot.slane %v1086, 5
      %v1688 = vsel %vm840, %v1686, %v1687
      %v1689 = vrot.slane %v1687, 4
      %v1690 = vrot.slane %v1087, 5
      %v1691 = vsel %vm840, %v1689, %v1690
      %s1692 = scalar_lea.vmem %s2, 10
      %v1693 = vld [vmem:[%s1692] sm:$0x3]
      %v1694 = vunpack.c.l.b16 %v1639
      %v1695 = vunpack.c.l.b16 %v1642
      %v1696 = vunpack.c.l.b16 %v1646
      %v1697 = vunpack.c.l.b16 %v1649
      %v1698 = vunpack.c.l.b16 %v1653
      %v1699 = vunpack.c.l.b16 %v1656
      %v1700 = vunpack.c.l.b16 %v1660
      %v1701 = vunpack.c.l.b16 %v1663
      %v1702 = vunpack.c.l.b16 %v1667
      %v1703 = vunpack.c.l.b16 %v1670
      %v1704 = vunpack.c.l.b16 %v1674
      %v1705 = vunpack.c.l.b16 %v1677
      %v1706 = vunpack.c.l.b16 %v1681
      %v1707 = vunpack.c.l.b16 %v1684
      %v1708 = vunpack.c.l.b16 %v1688
      %v1709 = vunpack.c.l.b16 %v1691
      %v1710 = vpack.c.b16 %v1695, %v1694
      %v1711 = vpack.c.b16 %v1697, %v1696
      %v1712 = vpack.c.b16 %v1699, %v1698
      %v1713 = vpack.c.b16 %v1701, %v1700
      %v1714 = vpack.c.b16 %v1703, %v1702
      %v1715 = vpack.c.b16 %v1705, %v1704
      %v1716 = vpack.c.b16 %v1707, %v1706
      %v1717 = vpack.c.b16 %v1709, %v1708
      %v1719 = vsel %vm540, %v1710, 0
      %v1722 = vsel %vm540, %v1711, 0
      %v1725 = vsel %vm540, %v1712, 0
      %v1728 = vsel %vm540, %v1713, 0
      %v1731 = vsel %vm540, %v1714, 0
      %v1734 = vsel %vm540, %v1715, 0
      %v1737 = vsel %vm540, %v1716, 0
      %v1740 = vsel %vm540, %v1717, 0
      %v1743 = vsel %vm565, %v1693, 0
      %1745 = vmatprep.subr.bf16.mxu0 0
      %1746 = vmatpush1.bf16.msra.mxu0 %v1743
      %1747 = vmatprep.subr.bf16.mxu0 0
      %1748 = vmatpush1.bf16.msra.mxu0 0
      %1749 = vmatprep.subr.bf16.mxu0 0
      %1750 = vmatpush1.bf16.msra.mxu0 0
      %1751 = vmatprep.subr.bf16.mxu0 0
      %1752 = vmatpush1.bf16.msra.mxu0 0
      %1753 = vmatprep.subr.bf16.mxu0 0
      %1754 = vmatpush1.bf16.msra.mxu0 0
      %1755 = vmatprep.subr.bf16.mxu0 0
      %1756 = vmatpush1.bf16.msra.mxu0 0
      %1757 = vmatprep.subr.bf16.mxu0 0
      %1758 = vmatpush1.bf16.msra.mxu0 0
      %1759 = vmatprep.subr.bf16.mxu0 0
      %1760 = vmatpush1.bf16.msra.mxu0 0
      %1761 = vmatprep.subr.bf16.mxu0 0
      %1762 = vmatpush1.bf16.msra.mxu0 0
      %1763 = vmatprep.subr.bf16.mxu0 0
      %1764 = vmatpush1.bf16.msra.mxu0 0
      %1765 = vmatprep.subr.bf16.mxu0 0
      %1766 = vmatpush1.bf16.msra.mxu0 0
      %1767 = vmatprep.subr.bf16.mxu0 0
      %1768 = vmatpush1.bf16.msra.mxu0 0
      %1769 = vmatprep.subr.bf16.mxu0 0
      %1770 = vmatpush1.bf16.msra.mxu0 0
      %1771 = vmatprep.subr.bf16.mxu0 0
      %1772 = vmatpush1.bf16.msra.mxu0 0
      %1773 = vmatprep.subr.bf16.mxu0 0
      %1774 = vmatpush1.bf16.msra.mxu0 0
      %1775 = vmatprep.subr.bf16.mxu0 0
      %1776 = vmatpush1.bf16.msra.mxu0 0
      %1777 = vmatprep.mubr.bf16.mxu0 0
      %1778 = vmatmul.mubr.bf16.gmra.mrb[0].mxu0 %v1719
      %v1779 = vpop.f32.mrb[0].mxu0
      %v1780 = vadd.f32 0.0, %v1779
      %v1781 = vpop.f32.mrb[0].mxu0
      %v1782 = vpop.f32.mrb[0].mxu0
      %v1783 = vadd.f32 0.0, %v1782
      %v1784 = vpop.f32.mrb[0].mxu0
      %1785 = vmatprep.mubr.bf16.mxu0 0
      %1786 = vmatmul.mubr.bf16.gmra.mrb[0].mxu0 %v1722
      %v1787 = vpop.f32.mrb[0].mxu0
      %v1788 = vadd.f32 0.0, %v1787
      %v1789 = vpop.f32.mrb[0].mxu0
      %v1790 = vpop.f32.mrb[0].mxu0
      %v1791 = vadd.f32 0.0, %v1790
      %v1792 = vpop.f32.mrb[0].mxu0
      %1793 = vmatprep.mubr.bf16.mxu0 0
      %1794 = vmatmul.mubr.bf16.gmra.mrb[0].mxu0 %v1725
      %v1795 = vpop.f32.mrb[0].mxu0
      %v1796 = vadd.f32 0.0, %v1795
      %v1797 = vpop.f32.mrb[0].mxu0
      %v1798 = vpop.f32.mrb[0].mxu0
      %v1799 = vadd.f32 0.0, %v1798
      %v1800 = vpop.f32.mrb[0].mxu0
      %1801 = vmatprep.mubr.bf16.mxu0 0
      %1802 = vmatmul.mubr.bf16.gmra.mrb[0].mxu0 %v1728
      %v1803 = vpop.f32.mrb[0].mxu0
      %v1804 = vadd.f32 0.0, %v1803
      %v1805 = vpop.f32.mrb[0].mxu0
      %v1806 = vpop.f32.mrb[0].mxu0
      %v1807 = vadd.f32 0.0, %v1806
      %v1808 = vpop.f32.mrb[0].mxu0
      %1809 = vmatprep.mubr.bf16.mxu0 0
      %1810 = vmatmul.mubr.bf16.gmra.mrb[0].mxu0 %v1731
      %v1811 = vpop.f32.mrb[0].mxu0
      %v1812 = vadd.f32 0.0, %v1811
      %v1813 = vpop.f32.mrb[0].mxu0
      %v1814 = vpop.f32.mrb[0].mxu0
      %v1815 = vadd.f32 0.0, %v1814
      %v1816 = vpop.f32.mrb[0].mxu0
      %1817 = vmatprep.mubr.bf16.mxu0 0
      %1818 = vmatmul.mubr.bf16.gmra.mrb[0].mxu0 %v1734
      %v1819 = vpop.f32.mrb[0].mxu0
      %v1820 = vadd.f32 0.0, %v1819
      %v1821 = vpop.f32.mrb[0].mxu0
      %v1822 = vpop.f32.mrb[0].mxu0
      %v1823 = vadd.f32 0.0, %v1822
      %v1824 = vpop.f32.mrb[0].mxu0
      %1825 = vmatprep.mubr.bf16.mxu0 0
      %1826 = vmatmul.mubr.bf16.gmra.mrb[0].mxu0 %v1737
      %v1827 = vpop.f32.mrb[0].mxu0
      %v1828 = vadd.f32 0.0, %v1827
      %v1829 = vpop.f32.mrb[0].mxu0
      %v1830 = vpop.f32.mrb[0].mxu0
      %v1831 = vadd.f32 0.0, %v1830
      %v1832 = vpop.f32.mrb[0].mxu0
      %1833 = vmatprep.mubr.bf16.mxu0 0
      %1834 = vmatmul.mubr.bf16.gmra.mrb[0].mxu0 %v1740
      %v1835 = vpop.f32.mrb[0].mxu0
      %v1836 = vadd.f32 0.0, %v1835
      %v1837 = vpop.f32.mrb[0].mxu0
      %v1838 = vpop.f32.mrb[0].mxu0
      %v1839 = vadd.f32 0.0, %v1838
      %v1840 = vpop.f32.mrb[0].mxu0
      %1841 = vdwg.mxu0
      %v1842 = vadd.f32 %v1612, %v1780
      %v1843 = vadd.f32 %v1613, %v1783
      %v1844 = vadd.f32 %v1614, %v1788
      %v1845 = vadd.f32 %v1615, %v1791
      %v1846 = vadd.f32 %v1616, %v1796
      %v1847 = vadd.f32 %v1617, %v1799
      %v1848 = vadd.f32 %v1618, %v1804
      %v1849 = vadd.f32 %v1619, %v1807
      %v1850 = vadd.f32 %v1620, %v1812
      %v1851 = vadd.f32 %v1621, %v1815
      %v1852 = vadd.f32 %v1622, %v1820
      %v1853 = vadd.f32 %v1623, %v1823
      %v1854 = vadd.f32 %v1624, %v1828
      %v1855 = vadd.f32 %v1625, %v1831
      %v1856 = vadd.f32 %v1626, %v1836
      %v1857 = vadd.f32 %v1627, %v1839
      %s1858 = scalar_lea.vmem %s260, 24
      %v1859 = vld [vmem:[%s1858] sm:$0xf]
      %v1860 = vld [vmem:[%s1858 + $0x4] sm:$0xf]
      %v1861 = vld [vmem:[%s1858 + $0x8] sm:$0x1]
      %v1862 = vld [vmem:[%s1858 + $0xc] sm:$0xf]
      %v1863 = vld [vmem:[%s1858 + $0x10] sm:$0xf]
      %v1864 = vld [vmem:[%s1858 + $0x14] sm:$0x1]
      %v1865 = vld [vmem:[%s1858 + $0x18] sm:$0xf]
      %v1866 = vld [vmem:[%s1858 + $0x1c] sm:$0xf]
      %v1867 = vld [vmem:[%s1858 + $0x20] sm:$0x1]
      %v1868 = vld [vmem:[%s1858 + $0x24] sm:$0xf]
      %v1869 = vld [vmem:[%s1858 + $0x28] sm:$0xf]
      %v1870 = vld [vmem:[%s1858 + $0x2c] sm:$0x1]
      %v1871 = vld [vmem:[%s1858 + $0x30] sm:$0xf]
      %v1872 = vld [vmem:[%s1858 + $0x34] sm:$0xf]
      %v1873 = vld [vmem:[%s1858 + $0x38] sm:$0x1]
      %v1874 = vld [vmem:[%s1858 + $0x3c] sm:$0xf]
      %v1875 = vld [vmem:[%s1858 + $0x40] sm:$0xf]
      %v1876 = vld [vmem:[%s1858 + $0x44] sm:$0x1]
      %v1877 = vld [vmem:[%s1858 + $0x48] sm:$0xf]
      %v1878 = vld [vmem:[%s1858 + $0x4c] sm:$0xf]
      %v1879 = vld [vmem:[%s1858 + $0x50] sm:$0x1]
      %v1880 = vld [vmem:[%s1858 + $0x54] sm:$0xf]
      %v1881 = vld [vmem:[%s1858 + $0x58] sm:$0xf]
      %v1882 = vld [vmem:[%s1858 + $0x5c] sm:$0x1]
      %s1883 = scalar_lea.vmem %s2, 12
      %v1884 = vld [vmem:[%s1883] sm:$0x3]
      %v1901 = vunpack.c.l.b16 %v1859
      %v1902 = vunpack.c.l.b16 %v1860
      %v1903 = vunpack.c.l.b16 %v1862
      %v1904 = vunpack.c.l.b16 %v1863
      %v1905 = vunpack.c.l.b16 %v1865
      %v1906 = vunpack.c.l.b16 %v1866
      %v1907 = vunpack.c.l.b16 %v1868
      %v1908 = vunpack.c.l.b16 %v1869
      %v1909 = vunpack.c.l.b16 %v1871
      %v1910 = vunpack.c.l.b16 %v1872
      %v1911 = vunpack.c.l.b16 %v1874
      %v1912 = vunpack.c.l.b16 %v1875
      %v1913 = vunpack.c.l.b16 %v1877
      %v1914 = vunpack.c.l.b16 %v1878
      %v1915 = vunpack.c.l.b16 %v1880
      %v1916 = vunpack.c.l.b16 %v1881
      %v1917 = vpack.c.b16 %v1902, %v1901
      %v1918 = vpack.c.b16 %v1904, %v1903
      %v1919 = vpack.c.b16 %v1906, %v1905
      %v1920 = vpack.c.b16 %v1908, %v1907
      %v1921 = vpack.c.b16 %v1910, %v1909
      %v1922 = vpack.c.b16 %v1912, %v1911
      %v1923 = vpack.c.b16 %v1914, %v1913
      %v1924 = vpack.c.b16 %v1916, %v1915
      %v1926 = vsel %vm540, %v1917, 0
      %v1929 = vsel %vm540, %v1918, 0
      %v1932 = vsel %vm540, %v1919, 0
      %v1935 = vsel %vm540, %v1920, 0
      %v1938 = vsel %vm540, %v1921, 0
      %v1941 = vsel %vm540, %v1922, 0
      %v1944 = vsel %vm540, %v1923, 0
      %v1947 = vsel %vm540, %v1924, 0
      %v1950 = vsel %vm565, %v1884, 0
      %1952 = vmatprep.subr.bf16.mxu0 0
      %1953 = vmatpush1.bf16.msra.mxu0 %v1950
      %1954 = vmatprep.subr.bf16.mxu0 0
      %1955 = vmatpush1.bf16.msra.mxu0 0
      %1956 = vmatprep.subr.bf16.mxu0 0
      %1957 = vmatpush1.bf16.msra.mxu0 0
      %1958 = vmatprep.subr.bf16.mxu0 0
      %1959 = vmatpush1.bf16.msra.mxu0 0
      %1960 = vmatprep.subr.bf16.mxu0 0
      %1961 = vmatpush1.bf16.msra.mxu0 0
      %1962 = vmatprep.subr.bf16.mxu0 0
      %1963 = vmatpush1.bf16.msra.mxu0 0
      %1964 = vmatprep.subr.bf16.mxu0 0
      %1965 = vmatpush1.bf16.msra.mxu0 0
      %1966 = vmatprep.subr.bf16.mxu0 0
      %1967 = vmatpush1.bf16.msra.mxu0 0
      %1968 = vmatprep.subr.bf16.mxu0 0
      %1969 = vmatpush1.bf16.msra.mxu0 0
      %1970 = vmatprep.subr.bf16.mxu0 0
      %1971 = vmatpush1.bf16.msra.mxu0 0
      %1972 = vmatprep.subr.bf16.mxu0 0
      %1973 = vmatpush1.bf16.msra.mxu0 0
      %1974 = vmatprep.subr.bf16.mxu0 0
      %1975 = vmatpush1.bf16.msra.mxu0 0
      %1976 = vmatprep.subr.bf16.mxu0 0
      %1977 = vmatpush1.bf16.msra.mxu0 0
      %1978 = vmatprep.subr.bf16.mxu0 0
      %1979 = vmatpush1.bf16.msra.mxu0 0
      %1980 = vmatprep.subr.bf16.mxu0 0
      %1981 = vmatpush1.bf16.msra.mxu0 0
      %1982 = vmatprep.subr.bf16.mxu0 0
      %1983 = vmatpush1.bf16.msra.mxu0 0
      %1984 = vmatprep.mubr.bf16.mxu0 0
      %1985 = vmatmul.mubr.bf16.gmra.mrb[0].mxu0 %v1926
      %v1986 = vpop.f32.mrb[0].mxu0
      %v1987 = vadd.f32 0.0, %v1986
      %v1988 = vpop.f32.mrb[0].mxu0
      %v1989 = vpop.f32.mrb[0].mxu0
      %v1990 = vadd.f32 0.0, %v1989
      %v1991 = vpop.f32.mrb[0].mxu0
      %1992 = vmatprep.mubr.bf16.mxu0 0
      %1993 = vmatmul.mubr.bf16.gmra.mrb[0].mxu0 %v1929
      %v1994 = vpop.f32.mrb[0].mxu0
      %v1995 = vadd.f32 0.0, %v1994
      %v1996 = vpop.f32.mrb[0].mxu0
      %v1997 = vpop.f32.mrb[0].mxu0
      %v1998 = vadd.f32 0.0, %v1997
      %v1999 = vpop.f32.mrb[0].mxu0
      %2000 = vmatprep.mubr.bf16.mxu0 0
      %2001 = vmatmul.mubr.bf16.gmra.mrb[0].mxu0 %v1932
      %v2002 = vpop.f32.mrb[0].mxu0
      %v2003 = vadd.f32 0.0, %v2002
      %v2004 = vpop.f32.mrb[0].mxu0
      %v2005 = vpop.f32.mrb[0].mxu0
      %v2006 = vadd.f32 0.0, %v2005
      %v2007 = vpop.f32.mrb[0].mxu0
      %2008 = vmatprep.mubr.bf16.mxu0 0
      %2009 = vmatmul.mubr.bf16.gmra.mrb[0].mxu0 %v1935
      %v2010 = vpop.f32.mrb[0].mxu0
      %v2011 = vadd.f32 0.0, %v2010
      %v2012 = vpop.f32.mrb[0].mxu0
      %v2013 = vpop.f32.mrb[0].mxu0
      %v2014 = vadd.f32 0.0, %v2013
      %v2015 = vpop.f32.mrb[0].mxu0
      %2016 = vmatprep.mubr.bf16.mxu0 0
      %2017 = vmatmul.mubr.bf16.gmra.mrb[0].mxu0 %v1938
      %v2018 = vpop.f32.mrb[0].mxu0
      %v2019 = vadd.f32 0.0, %v2018
      %v2020 = vpop.f32.mrb[0].mxu0
      %v2021 = vpop.f32.mrb[0].mxu0
      %v2022 = vadd.f32 0.0, %v2021
      %v2023 = vpop.f32.mrb[0].mxu0
      %2024 = vmatprep.mubr.bf16.mxu0 0
      %2025 = vmatmul.mubr.bf16.gmra.mrb[0].mxu0 %v1941
      %v2026 = vpop.f32.mrb[0].mxu0
      %v2027 = vadd.f32 0.0, %v2026
      %v2028 = vpop.f32.mrb[0].mxu0
      %v2029 = vpop.f32.mrb[0].mxu0
      %v2030 = vadd.f32 0.0, %v2029
      %v2031 = vpop.f32.mrb[0].mxu0
      %2032 = vmatprep.mubr.bf16.mxu0 0
      %2033 = vmatmul.mubr.bf16.gmra.mrb[0].mxu0 %v1944
      %v2034 = vpop.f32.mrb[0].mxu0
      %v2035 = vadd.f32 0.0, %v2034
      %v2036 = vpop.f32.mrb[0].mxu0
      %v2037 = vpop.f32.mrb[0].mxu0
      %v2038 = vadd.f32 0.0, %v2037
      %v2039 = vpop.f32.mrb[0].mxu0
      %2040 = vmatprep.mubr.bf16.mxu0 0
      %2041 = vmatmul.mubr.bf16.gmra.mrb[0].mxu0 %v1947
      %v2042 = vpop.f32.mrb[0].mxu0
      %v2043 = vadd.f32 0.0, %v2042
      %v2044 = vpop.f32.mrb[0].mxu0
      %v2045 = vpop.f32.mrb[0].mxu0
      %v2046 = vadd.f32 0.0, %v2045
      %v2047 = vpop.f32.mrb[0].mxu0
      %2048 = vdwg.mxu0
      %v2049 = vadd.f32 %v1842, %v1987
      %v2050 = vadd.f32 %v1843, %v1990
      %v2051 = vadd.f32 %v1844, %v1995
      %v2052 = vadd.f32 %v1845, %v1998
      %v2053 = vadd.f32 %v1846, %v2003
      %v2054 = vadd.f32 %v1847, %v2006
      %v2055 = vadd.f32 %v1848, %v2011
      %v2056 = vadd.f32 %v1849, %v2014
      %v2057 = vadd.f32 %v1850, %v2019
      %v2058 = vadd.f32 %v1851, %v2022
      %v2059 = vadd.f32 %v1852, %v2027
      %v2060 = vadd.f32 %v1853, %v2030
      %v2061 = vadd.f32 %v1854, %v2035
      %v2062 = vadd.f32 %v1855, %v2038
      %v2063 = vadd.f32 %v1856, %v2043
      %v2064 = vadd.f32 %v1857, %v2046
      %v2066 = vshrl.u32 %v1859, 16
      %v2068 = vrot.slane %v2066, 4
      %v2069 = vshll.u32 %v1859, 16
      %v2071 = vrot.slane %v2069, 5
      %v2072 = vor.u32 %v2068, %v2071
      %v2073 = vrot.slane %v2072, 4
      %v2075 = vshll.u32 %v1860, 16
      %v2077 = vrot.slane %v2075, 5
      %v2078 = vsel %vm321, %v2073, %v2077
      %v2079 = vshrl.u32 %v1860, 16
      %v2081 = vrot.slane %v2079, 4
      %v2082 = vor.u32 %v2081, %v2077
      %v2083 = vrot.slane %v2082, 4
      %v2085 = vshll.u32 %v1861, 16
      %v2087 = vrot.slane %v2085, 5
      %v2088 = vsel %vm321, %v2083, %v2087
      %v2090 = vshrl.u32 %v1862, 16
      %v2092 = vrot.slane %v2090, 4
      %v2093 = vshll.u32 %v1862, 16
      %v2095 = vrot.slane %v2093, 5
      %v2096 = vor.u32 %v2092, %v2095
      %v2097 = vrot.slane %v2096, 4
      %v2099 = vshll.u32 %v1863, 16
      %v2101 = vrot.slane %v2099, 5
      %v2102 = vsel %vm321, %v2097, %v2101
      %v2103 = vshrl.u32 %v1863, 16
      %v2105 = vrot.slane %v2103, 4
      %v2106 = vor.u32 %v2105, %v2101
      %v2107 = vrot.slane %v2106, 4
      %v2109 = vshll.u32 %v1864, 16
      %v2111 = vrot.slane %v2109, 5
      %v2112 = vsel %vm321, %v2107, %v2111
      %v2114 = vshrl.u32 %v1865, 16
      %v2116 = vrot.slane %v2114, 4
      %v2117 = vshll.u32 %v1865, 16
      %v2119 = vrot.slane %v2117, 5
      %v2120 = vor.u32 %v2116, %v2119
      %v2121 = vrot.slane %v2120, 4
      %v2123 = vshll.u32 %v1866, 16
      %v2125 = vrot.slane %v2123, 5
      %v2126 = vsel %vm321, %v2121, %v2125
      %v2127 = vshrl.u32 %v1866, 16
      %v2129 = vrot.slane %v2127, 4
      %v2130 = vor.u32 %v2129, %v2125
      %v2131 = vrot.slane %v2130, 4
      %v2133 = vshll.u32 %v1867, 16
      %v2135 = vrot.slane %v2133, 5
      %v2136 = vsel %vm321, %v2131, %v2135
      %v2138 = vshrl.u32 %v1868, 16
      %v2140 = vrot.slane %v2138, 4
      %v2141 = vshll.u32 %v1868, 16
      %v2143 = vrot.slane %v2141, 5
      %v2144 = vor.u32 %v2140, %v2143
      %v2145 = vrot.slane %v2144, 4
      %v2147 = vshll.u32 %v1869, 16
      %v2149 = vrot.slane %v2147, 5
      %v2150 = vsel %vm321, %v2145, %v2149
      %v2151 = vshrl.u32 %v1869, 16
      %v2153 = vrot.slane %v2151, 4
      %v2154 = vor.u32 %v2153, %v2149
      %v2155 = vrot.slane %v2154, 4
      %v2157 = vshll.u32 %v1870, 16
      %v2159 = vrot.slane %v2157, 5
      %v2160 = vsel %vm321, %v2155, %v2159
      %v2162 = vshrl.u32 %v1871, 16
      %v2164 = vrot.slane %v2162, 4
      %v2165 = vshll.u32 %v1871, 16
      %v2167 = vrot.slane %v2165, 5
      %v2168 = vor.u32 %v2164, %v2167
      %v2169 = vrot.slane %v2168, 4
      %v2171 = vshll.u32 %v1872, 16
      %v2173 = vrot.slane %v2171, 5
      %v2174 = vsel %vm321, %v2169, %v2173
      %v2175 = vshrl.u32 %v1872, 16
      %v2177 = vrot.slane %v2175, 4
      %v2178 = vor.u32 %v2177, %v2173
      %v2179 = vrot.slane %v2178, 4
      %v2181 = vshll.u32 %v1873, 16
      %v2183 = vrot.slane %v2181, 5
      %v2184 = vsel %vm321, %v2179, %v2183
      %v2186 = vshrl.u32 %v1874, 16
      %v2188 = vrot.slane %v2186, 4
      %v2189 = vshll.u32 %v1874, 16
      %v2191 = vrot.slane %v2189, 5
      %v2192 = vor.u32 %v2188, %v2191
      %v2193 = vrot.slane %v2192, 4
      %v2195 = vshll.u32 %v1875, 16
      %v2197 = vrot.slane %v2195, 5
      %v2198 = vsel %vm321, %v2193, %v2197
      %v2199 = vshrl.u32 %v1875, 16
      %v2201 = vrot.slane %v2199, 4
      %v2202 = vor.u32 %v2201, %v2197
      %v2203 = vrot.slane %v2202, 4
      %v2205 = vshll.u32 %v1876, 16
      %v2207 = vrot.slane %v2205, 5
      %v2208 = vsel %vm321, %v2203, %v2207
      %v2210 = vshrl.u32 %v1877, 16
      %v2212 = vrot.slane %v2210, 4
      %v2213 = vshll.u32 %v1877, 16
      %v2215 = vrot.slane %v2213, 5
      %v2216 = vor.u32 %v2212, %v2215
      %v2217 = vrot.slane %v2216, 4
      %v2219 = vshll.u32 %v1878, 16
      %v2221 = vrot.slane %v2219, 5
      %v2222 = vsel %vm321, %v2217, %v2221
      %v2223 = vshrl.u32 %v1878, 16
      %v2225 = vrot.slane %v2223, 4
      %v2226 = vor.u32 %v2225, %v2221
      %v2227 = vrot.slane %v2226, 4
      %v2229 = vshll.u32 %v1879, 16
      %v2231 = vrot.slane %v2229, 5
      %v2232 = vsel %vm321, %v2227, %v2231
      %v2234 = vshrl.u32 %v1880, 16
      %v2236 = vrot.slane %v2234, 4
      %v2237 = vshll.u32 %v1880, 16
      %v2239 = vrot.slane %v2237, 5
      %v2240 = vor.u32 %v2236, %v2239
      %v2241 = vrot.slane %v2240, 4
      %v2243 = vshll.u32 %v1881, 16
      %v2245 = vrot.slane %v2243, 5
      %v2246 = vsel %vm321, %v2241, %v2245
      %v2247 = vshrl.u32 %v1881, 16
      %v2249 = vrot.slane %v2247, 4
      %v2250 = vor.u32 %v2249, %v2245
      %v2251 = vrot.slane %v2250, 4
      %v2253 = vshll.u32 %v1882, 16
      %v2255 = vrot.slane %v2253, 5
      %v2256 = vsel %vm321, %v2251, %v2255
      %s2257 = scalar_lea.vmem %s2, 14
      %v2258 = vld [vmem:[%s2257] sm:$0x3]
      %v2259 = vunpack.c.l.b16 %v2078
      %v2260 = vunpack.c.l.b16 %v2088
      %v2261 = vunpack.c.l.b16 %v2102
      %v2262 = vunpack.c.l.b16 %v2112
      %v2263 = vunpack.c.l.b16 %v2126
      %v2264 = vunpack.c.l.b16 %v2136
      %v2265 = vunpack.c.l.b16 %v2150
      %v2266 = vunpack.c.l.b16 %v2160
      %v2267 = vunpack.c.l.b16 %v2174
      %v2268 = vunpack.c.l.b16 %v2184
      %v2269 = vunpack.c.l.b16 %v2198
      %v2270 = vunpack.c.l.b16 %v2208
      %v2271 = vunpack.c.l.b16 %v2222
      %v2272 = vunpack.c.l.b16 %v2232
      %v2273 = vunpack.c.l.b16 %v2246
      %v2274 = vunpack.c.l.b16 %v2256
      %v2275 = vpack.c.b16 %v2260, %v2259
      %v2276 = vpack.c.b16 %v2262, %v2261
      %v2277 = vpack.c.b16 %v2264, %v2263
      %v2278 = vpack.c.b16 %v2266, %v2265
      %v2279 = vpack.c.b16 %v2268, %v2267
      %v2280 = vpack.c.b16 %v2270, %v2269
      %v2281 = vpack.c.b16 %v2272, %v2271
      %v2282 = vpack.c.b16 %v2274, %v2273
      %v2284 = vsel %vm540, %v2275, 0
      %v2287 = vsel %vm540, %v2276, 0
      %v2290 = vsel %vm540, %v2277, 0
      %v2293 = vsel %vm540, %v2278, 0
      %v2296 = vsel %vm540, %v2279, 0
      %v2299 = vsel %vm540, %v2280, 0
      %v2302 = vsel %vm540, %v2281, 0
      %v2305 = vsel %vm540, %v2282, 0
      %v2308 = vsel %vm565, %v2258, 0
      %2310 = vmatprep.subr.bf16.mxu0 0
      %2311 = vmatpush1.bf16.msra.mxu0 %v2308
      %2312 = vmatprep.subr.bf16.mxu0 0
      %2313 = vmatpush1.bf16.msra.mxu0 0
      %2314 = vmatprep.subr.bf16.mxu0 0
      %2315 = vmatpush1.bf16.msra.mxu0 0
      %2316 = vmatprep.subr.bf16.mxu0 0
      %2317 = vmatpush1.bf16.msra.mxu0 0
      %2318 = vmatprep.subr.bf16.mxu0 0
      %2319 = vmatpush1.bf16.msra.mxu0 0
      %2320 = vmatprep.subr.bf16.mxu0 0
      %2321 = vmatpush1.bf16.msra.mxu0 0
      %2322 = vmatprep.subr.bf16.mxu0 0
      %2323 = vmatpush1.bf16.msra.mxu0 0
      %2324 = vmatprep.subr.bf16.mxu0 0
      %2325 = vmatpush1.bf16.msra.mxu0 0
      %2326 = vmatprep.subr.bf16.mxu0 0
      %2327 = vmatpush1.bf16.msra.mxu0 0
      %2328 = vmatprep.subr.bf16.mxu0 0
      %2329 = vmatpush1.bf16.msra.mxu0 0
      %2330 = vmatprep.subr.bf16.mxu0 0
      %2331 = vmatpush1.bf16.msra.mxu0 0
      %2332 = vmatprep.subr.bf16.mxu0 0
      %2333 = vmatpush1.bf16.msra.mxu0 0
      %2334 = vmatprep.subr.bf16.mxu0 0
      %2335 = vmatpush1.bf16.msra.mxu0 0
      %2336 = vmatprep.subr.bf16.mxu0 0
      %2337 = vmatpush1.bf16.msra.mxu0 0
      %2338 = vmatprep.subr.bf16.mxu0 0
      %2339 = vmatpush1.bf16.msra.mxu0 0
      %2340 = vmatprep.subr.bf16.mxu0 0
      %2341 = vmatpush1.bf16.msra.mxu0 0
      %2342 = vmatprep.mubr.bf16.mxu0 0
      %2343 = vmatmul.mubr.bf16.gmra.mrb[0].mxu0 %v2284
      %v2344 = vpop.f32.mrb[0].mxu0
      %v2345 = vadd.f32 0.0, %v2344
      %v2346 = vpop.f32.mrb[0].mxu0
      %v2347 = vpop.f32.mrb[0].mxu0
      %v2348 = vadd.f32 0.0, %v2347
      %v2349 = vpop.f32.mrb[0].mxu0
      %2350 = vmatprep.mubr.bf16.mxu0 0
      %2351 = vmatmul.mubr.bf16.gmra.mrb[0].mxu0 %v2287
      %v2352 = vpop.f32.mrb[0].mxu0
      %v2353 = vadd.f32 0.0, %v2352
      %v2354 = vpop.f32.mrb[0].mxu0
      %v2355 = vpop.f32.mrb[0].mxu0
      %v2356 = vadd.f32 0.0, %v2355
      %v2357 = vpop.f32.mrb[0].mxu0
      %2358 = vmatprep.mubr.bf16.mxu0 0
      %2359 = vmatmul.mubr.bf16.gmra.mrb[0].mxu0 %v2290
      %v2360 = vpop.f32.mrb[0].mxu0
      %v2361 = vadd.f32 0.0, %v2360
      %v2362 = vpop.f32.mrb[0].mxu0
      %v2363 = vpop.f32.mrb[0].mxu0
      %v2364 = vadd.f32 0.0, %v2363
      %v2365 = vpop.f32.mrb[0].mxu0
      %2366 = vmatprep.mubr.bf16.mxu0 0
      %2367 = vmatmul.mubr.bf16.gmra.mrb[0].mxu0 %v2293
      %v2368 = vpop.f32.mrb[0].mxu0
      %v2369 = vadd.f32 0.0, %v2368
      %v2370 = vpop.f32.mrb[0].mxu0
      %v2371 = vpop.f32.mrb[0].mxu0
      %v2372 = vadd.f32 0.0, %v2371
      %v2373 = vpop.f32.mrb[0].mxu0
      %2374 = vmatprep.mubr.bf16.mxu0 0
      %2375 = vmatmul.mubr.bf16.gmra.mrb[0].mxu0 %v2296
      %v2376 = vpop.f32.mrb[0].mxu0
      %v2377 = vadd.f32 0.0, %v2376
      %v2378 = vpop.f32.mrb[0].mxu0
      %v2379 = vpop.f32.mrb[0].mxu0
      %v2380 = vadd.f32 0.0, %v2379
      %v2381 = vpop.f32.mrb[0].mxu0
      %2382 = vmatprep.mubr.bf16.mxu0 0
      %2383 = vmatmul.mubr.bf16.gmra.mrb[0].mxu0 %v2299
      %v2384 = vpop.f32.mrb[0].mxu0
      %v2385 = vadd.f32 0.0, %v2384
      %v2386 = vpop.f32.mrb[0].mxu0
      %v2387 = vpop.f32.mrb[0].mxu0
      %v2388 = vadd.f32 0.0, %v2387
      %v2389 = vpop.f32.mrb[0].mxu0
      %2390 = vmatprep.mubr.bf16.mxu0 0
      %2391 = vmatmul.mubr.bf16.gmra.mrb[0].mxu0 %v2302
      %v2392 = vpop.f32.mrb[0].mxu0
      %v2393 = vadd.f32 0.0, %v2392
      %v2394 = vpop.f32.mrb[0].mxu0
      %v2395 = vpop.f32.mrb[0].mxu0
      %v2396 = vadd.f32 0.0, %v2395
      %v2397 = vpop.f32.mrb[0].mxu0
      %2398 = vmatprep.mubr.bf16.mxu0 0
      %2399 = vmatmul.mubr.bf16.gmra.mrb[0].mxu0 %v2305
      %v2400 = vpop.f32.mrb[0].mxu0
      %v2401 = vadd.f32 0.0, %v2400
      %v2402 = vpop.f32.mrb[0].mxu0
      %v2403 = vpop.f32.mrb[0].mxu0
      %v2404 = vadd.f32 0.0, %v2403
      %v2405 = vpop.f32.mrb[0].mxu0
      %2406 = vdwg.mxu0
      %v2407 = vadd.f32 %v2049, %v2345
      %v2408 = vadd.f32 %v2050, %v2348
      %v2409 = vadd.f32 %v2051, %v2353
      %v2410 = vadd.f32 %v2052, %v2356
      %v2411 = vadd.f32 %v2053, %v2361
      %v2412 = vadd.f32 %v2054, %v2364
      %v2413 = vadd.f32 %v2055, %v2369
      %v2414 = vadd.f32 %v2056, %v2372
      %v2415 = vadd.f32 %v2057, %v2377
      %v2416 = vadd.f32 %v2058, %v2380
      %v2417 = vadd.f32 %v2059, %v2385
      %v2418 = vadd.f32 %v2060, %v2388
      %v2419 = vadd.f32 %v2061, %v2393
      %v2420 = vadd.f32 %v2062, %v2396
      %v2421 = vadd.f32 %v2063, %v2401
      %v2422 = vadd.f32 %v2064, %v2404
      %v2431 = vrot.slane %v1859, 5
      %v2432 = vrot.slane %v2431, 4
      %v2433 = vrot.slane %v1860, 5
      %v2434 = vsel %vm840, %v2432, %v2433
      %v2435 = vrot.slane %v2433, 4
      %v2436 = vrot.slane %v1861, 5
      %v2437 = vsel %vm840, %v2435, %v2436
      %v2438 = vrot.slane %v1862, 5
      %v2439 = vrot.slane %v2438, 4
      %v2440 = vrot.slane %v1863, 5
      %v2441 = vsel %vm840, %v2439, %v2440
      %v2442 = vrot.slane %v2440, 4
      %v2443 = vrot.slane %v1864, 5
      %v2444 = vsel %vm840, %v2442, %v2443
      %v2445 = vrot.slane %v1865, 5
      %v2446 = vrot.slane %v2445, 4
      %v2447 = vrot.slane %v1866, 5
      %v2448 = vsel %vm840, %v2446, %v2447
      %v2449 = vrot.slane %v2447, 4
      %v2450 = vrot.slane %v1867, 5
      %v2451 = vsel %vm840, %v2449, %v2450
      %v2452 = vrot.slane %v1868, 5
      %v2453 = vrot.slane %v2452, 4
      %v2454 = vrot.slane %v1869, 5
      %v2455 = vsel %vm840, %v2453, %v2454
      %v2456 = vrot.slane %v2454, 4
      %v2457 = vrot.slane %v1870, 5
      %v2458 = vsel %vm840, %v2456, %v2457
      %v2459 = vrot.slane %v1871, 5
      %v2460 = vrot.slane %v2459, 4
      %v2461 = vrot.slane %v1872, 5
      %v2462 = vsel %vm840, %v2460, %v2461
      %v2463 = vrot.slane %v2461, 4
      %v2464 = vrot.slane %v1873, 5
      %v2465 = vsel %vm840, %v2463, %v2464
      %v2466 = vrot.slane %v1874, 5
      %v2467 = vrot.slane %v2466, 4
      %v2468 = vrot.slane %v1875, 5
      %v2469 = vsel %vm840, %v2467, %v2468
      %v2470 = vrot.slane %v2468, 4
      %v2471 = vrot.slane %v1876, 5
      %v2472 = vsel %vm840, %v2470, %v2471
      %v2473 = vrot.slane %v1877, 5
      %v2474 = vrot.slane %v2473, 4
      %v2475 = vrot.slane %v1878, 5
      %v2476 = vsel %vm840, %v2474, %v2475
      %v2477 = vrot.slane %v2475, 4
      %v2478 = vrot.slane %v1879, 5
      %v2479 = vsel %vm840, %v2477, %v2478
      %v2480 = vrot.slane %v1880, 5
      %v2481 = vrot.slane %v2480, 4
      %v2482 = vrot.slane %v1881, 5
      %v2483 = vsel %vm840, %v2481, %v2482
      %v2484 = vrot.slane %v2482, 4
      %v2485 = vrot.slane %v1882, 5
      %v2486 = vsel %vm840, %v2484, %v2485
      %s2487 = scalar_lea.vmem %s2, 16
      %v2488 = vld [vmem:[%s2487] sm:$0x3]
      %v2489 = vunpack.c.l.b16 %v2434
      %v2490 = vunpack.c.l.b16 %v2437
      %v2491 = vunpack.c.l.b16 %v2441
      %v2492 = vunpack.c.l.b16 %v2444
      %v2493 = vunpack.c.l.b16 %v2448
      %v2494 = vunpack.c.l.b16 %v2451
      %v2495 = vunpack.c.l.b16 %v2455
      %v2496 = vunpack.c.l.b16 %v2458
      %v2497 = vunpack.c.l.b16 %v2462
      %v2498 = vunpack.c.l.b16 %v2465
      %v2499 = vunpack.c.l.b16 %v2469
      %v2500 = vunpack.c.l.b16 %v2472
      %v2501 = vunpack.c.l.b16 %v2476
      %v2502 = vunpack.c.l.b16 %v2479
      %v2503 = vunpack.c.l.b16 %v2483
      %v2504 = vunpack.c.l.b16 %v2486
      %v2505 = vpack.c.b16 %v2490, %v2489
      %v2506 = vpack.c.b16 %v2492, %v2491
      %v2507 = vpack.c.b16 %v2494, %v2493
      %v2508 = vpack.c.b16 %v2496, %v2495
      %v2509 = vpack.c.b16 %v2498, %v2497
      %v2510 = vpack.c.b16 %v2500, %v2499
      %v2511 = vpack.c.b16 %v2502, %v2501
      %v2512 = vpack.c.b16 %v2504, %v2503
      %v2514 = vsel %vm540, %v2505, 0
      %v2517 = vsel %vm540, %v2506, 0
      %v2520 = vsel %vm540, %v2507, 0
      %v2523 = vsel %vm540, %v2508, 0
      %v2526 = vsel %vm540, %v2509, 0
      %v2529 = vsel %vm540, %v2510, 0
      %v2532 = vsel %vm540, %v2511, 0
      %v2535 = vsel %vm540, %v2512, 0
      %v2538 = vsel %vm565, %v2488, 0
      %2540 = vmatprep.subr.bf16.mxu0 0
      %2541 = vmatpush1.bf16.msra.mxu0 %v2538
      %2542 = vmatprep.subr.bf16.mxu0 0
      %2543 = vmatpush1.bf16.msra.mxu0 0
      %2544 = vmatprep.subr.bf16.mxu0 0
      %2545 = vmatpush1.bf16.msra.mxu0 0
      %2546 = vmatprep.subr.bf16.mxu0 0
      %2547 = vmatpush1.bf16.msra.mxu0 0
      %2548 = vmatprep.subr.bf16.mxu0 0
      %2549 = vmatpush1.bf16.msra.mxu0 0
      %2550 = vmatprep.subr.bf16.mxu0 0
      %2551 = vmatpush1.bf16.msra.mxu0 0
      %2552 = vmatprep.subr.bf16.mxu0 0
      %2553 = vmatpush1.bf16.msra.mxu0 0
      %2554 = vmatprep.subr.bf16.mxu0 0
      %2555 = vmatpush1.bf16.msra.mxu0 0
      %2556 = vmatprep.subr.bf16.mxu0 0
      %2557 = vmatpush1.bf16.msra.mxu0 0
      %2558 = vmatprep.subr.bf16.mxu0 0
      %2559 = vmatpush1.bf16.msra.mxu0 0
      %2560 = vmatprep.subr.bf16.mxu0 0
      %2561 = vmatpush1.bf16.msra.mxu0 0
      %2562 = vmatprep.subr.bf16.mxu0 0
      %2563 = vmatpush1.bf16.msra.mxu0 0
      %2564 = vmatprep.subr.bf16.mxu0 0
      %2565 = vmatpush1.bf16.msra.mxu0 0
      %2566 = vmatprep.subr.bf16.mxu0 0
      %2567 = vmatpush1.bf16.msra.mxu0 0
      %2568 = vmatprep.subr.bf16.mxu0 0
      %2569 = vmatpush1.bf16.msra.mxu0 0
      %2570 = vmatprep.subr.bf16.mxu0 0
      %2571 = vmatpush1.bf16.msra.mxu0 0
      %2572 = vmatprep.mubr.bf16.mxu0 0
      %2573 = vmatmul.mubr.bf16.gmra.mrb[0].mxu0 %v2514
      %v2574 = vpop.f32.mrb[0].mxu0
      %v2575 = vadd.f32 0.0, %v2574
      %v2576 = vpop.f32.mrb[0].mxu0
      %v2577 = vpop.f32.mrb[0].mxu0
      %v2578 = vadd.f32 0.0, %v2577
      %v2579 = vpop.f32.mrb[0].mxu0
      %2580 = vmatprep.mubr.bf16.mxu0 0
      %2581 = vmatmul.mubr.bf16.gmra.mrb[0].mxu0 %v2517
      %v2582 = vpop.f32.mrb[0].mxu0
      %v2583 = vadd.f32 0.0, %v2582
      %v2584 = vpop.f32.mrb[0].mxu0
      %v2585 = vpop.f32.mrb[0].mxu0
      %v2586 = vadd.f32 0.0, %v2585
      %v2587 = vpop.f32.mrb[0].mxu0
      %2588 = vmatprep.mubr.bf16.mxu0 0
      %2589 = vmatmul.mubr.bf16.gmra.mrb[0].mxu0 %v2520
      %v2590 = vpop.f32.mrb[0].mxu0
      %v2591 = vadd.f32 0.0, %v2590
      %v2592 = vpop.f32.mrb[0].mxu0
      %v2593 = vpop.f32.mrb[0].mxu0
      %v2594 = vadd.f32 0.0, %v2593
      %v2595 = vpop.f32.mrb[0].mxu0
      %2596 = vmatprep.mubr.bf16.mxu0 0
      %2597 = vmatmul.mubr.bf16.gmra.mrb[0].mxu0 %v2523
      %v2598 = vpop.f32.mrb[0].mxu0
      %v2599 = vadd.f32 0.0, %v2598
      %v2600 = vpop.f32.mrb[0].mxu0
      %v2601 = vpop.f32.mrb[0].mxu0
      %v2602 = vadd.f32 0.0, %v2601
      %v2603 = vpop.f32.mrb[0].mxu0
      %2604 = vmatprep.mubr.bf16.mxu0 0
      %2605 = vmatmul.mubr.bf16.gmra.mrb[0].mxu0 %v2526
      %v2606 = vpop.f32.mrb[0].mxu0
      %v2607 = vadd.f32 0.0, %v2606
      %v2608 = vpop.f32.mrb[0].mxu0
      %v2609 = vpop.f32.mrb[0].mxu0
      %v2610 = vadd.f32 0.0, %v2609
      %v2611 = vpop.f32.mrb[0].mxu0
      %2612 = vmatprep.mubr.bf16.mxu0 0
      %2613 = vmatmul.mubr.bf16.gmra.mrb[0].mxu0 %v2529
      %v2614 = vpop.f32.mrb[0].mxu0
      %v2615 = vadd.f32 0.0, %v2614
      %v2616 = vpop.f32.mrb[0].mxu0
      %v2617 = vpop.f32.mrb[0].mxu0
      %v2618 = vadd.f32 0.0, %v2617
      %v2619 = vpop.f32.mrb[0].mxu0
      %2620 = vmatprep.mubr.bf16.mxu0 0
      %2621 = vmatmul.mubr.bf16.gmra.mrb[0].mxu0 %v2532
      %v2622 = vpop.f32.mrb[0].mxu0
      %v2623 = vadd.f32 0.0, %v2622
      %v2624 = vpop.f32.mrb[0].mxu0
      %v2625 = vpop.f32.mrb[0].mxu0
      %v2626 = vadd.f32 0.0, %v2625
      %v2627 = vpop.f32.mrb[0].mxu0
      %2628 = vmatprep.mubr.bf16.mxu0 0
      %2629 = vmatmul.mubr.bf16.gmra.mrb[0].mxu0 %v2535
      %v2630 = vpop.f32.mrb[0].mxu0
      %v2631 = vadd.f32 0.0, %v2630
      %v2632 = vpop.f32.mrb[0].mxu0
      %v2633 = vpop.f32.mrb[0].mxu0
      %v2634 = vadd.f32 0.0, %v2633
      %v2635 = vpop.f32.mrb[0].mxu0
      %2636 = vdwg.mxu0
      %v2637 = vadd.f32 %v2407, %v2575
      %v2638 = vadd.f32 %v2408, %v2578
      %v2639 = vadd.f32 %v2409, %v2583
      %v2640 = vadd.f32 %v2410, %v2586
      %v2641 = vadd.f32 %v2411, %v2591
      %v2642 = vadd.f32 %v2412, %v2594
      %v2643 = vadd.f32 %v2413, %v2599
      %v2644 = vadd.f32 %v2414, %v2602
      %v2645 = vadd.f32 %v2415, %v2607
      %v2646 = vadd.f32 %v2416, %v2610
      %v2647 = vadd.f32 %v2417, %v2615
      %v2648 = vadd.f32 %v2418, %v2618
      %v2649 = vadd.f32 %v2419, %v2623
      %v2650 = vadd.f32 %v2420, %v2626
      %v2651 = vadd.f32 %v2421, %v2631
      %v2652 = vadd.f32 %v2422, %v2634
      %v2653 = vpack.c.bf16 %v2638, %v2637
      %v2654 = vpack.c.bf16 %v2640, %v2639
      %v2655 = vpack.c.bf16 %v2642, %v2641
      %v2656 = vpack.c.bf16 %v2644, %v2643
      %v2657 = vpack.c.bf16 %v2646, %v2645
      %v2658 = vpack.c.bf16 %v2648, %v2647
      %v2659 = vpack.c.bf16 %v2650, %v2649
      %v2660 = vpack.c.bf16 %v2652, %v2651
      %v2669 = vunpack.c.l.b16 %v2653
      %v2670 = vunpack.c.h.b16 %v2653
      %v2671 = vunpack.c.l.b16 %v2654
      %v2672 = vunpack.c.h.b16 %v2654
      %v2673 = vunpack.c.l.b16 %v2655
      %v2674 = vunpack.c.h.b16 %v2655
      %v2675 = vunpack.c.l.b16 %v2656
      %v2676 = vunpack.c.h.b16 %v2656
      %v2677 = vunpack.c.l.b16 %v2657
      %v2678 = vunpack.c.h.b16 %v2657
      %v2679 = vunpack.c.l.b16 %v2658
      %v2680 = vunpack.c.h.b16 %v2658
      %v2681 = vunpack.c.l.b16 %v2659
      %v2682 = vunpack.c.h.b16 %v2659
      %v2683 = vunpack.c.l.b16 %v2660
      %v2684 = vunpack.c.h.b16 %v2660
      %v2685 = vpack.c.b16 %v2669, %v2669
      %v2686 = vpack.c.b16 %v2670, %v2670
      %v2687 = vpack.c.b16 %v2671, %v2671
      %v2688 = vpack.c.b16 %v2672, %v2672
      %v2689 = vpack.c.b16 %v2673, %v2673
      %v2690 = vpack.c.b16 %v2674, %v2674
      %v2691 = vpack.c.b16 %v2675, %v2675
      %v2692 = vpack.c.b16 %v2676, %v2676
      %v2693 = vpack.c.b16 %v2677, %v2677
      %v2694 = vpack.c.b16 %v2678, %v2678
      %v2695 = vpack.c.b16 %v2679, %v2679
      %v2696 = vpack.c.b16 %v2680, %v2680
      %v2697 = vpack.c.b16 %v2681, %v2681
      %v2698 = vpack.c.b16 %v2682, %v2682
      %v2699 = vpack.c.b16 %v2683, %v2683
      %v2700 = vpack.c.b16 %v2684, %v2684
      %vm2717 = vcmask 60416
      %2718 = vst.msk [vmem:[%s291] sm:$0xf] %vm2717, %v2685
      %2719 = vst.msk [vmem:[%s291 + $0x4] sm:$0xf] %vm2717, %v2686
      %2720 = vst.msk [vmem:[%s291 + $0x8] sm:$0xf] %vm2717, %v2687
      %2721 = vst.msk [vmem:[%s291 + $0xc] sm:$0xf] %vm2717, %v2688
      %2722 = vst.msk [vmem:[%s291 + $0x10] sm:$0xf] %vm2717, %v2689
      %2723 = vst.msk [vmem:[%s291 + $0x14] sm:$0xf] %vm2717, %v2690
      %2724 = vst.msk [vmem:[%s291 + $0x18] sm:$0xf] %vm2717, %v2691
      %2725 = vst.msk [vmem:[%s291 + $0x1c] sm:$0xf] %vm2717, %v2692
      %2726 = vst.msk [vmem:[%s291 + $0x20] sm:$0xf] %vm2717, %v2693
      %2727 = vst.msk [vmem:[%s291 + $0x24] sm:$0xf] %vm2717, %v2694
      %2728 = vst.msk [vmem:[%s291 + $0x28] sm:$0xf] %vm2717, %v2695
      %2729 = vst.msk [vmem:[%s291 + $0x2c] sm:$0xf] %vm2717, %v2696
      %2730 = vst.msk [vmem:[%s291 + $0x30] sm:$0xf] %vm2717, %v2697
      %2731 = vst.msk [vmem:[%s291 + $0x34] sm:$0xf] %vm2717, %v2698
      %2732 = vst.msk [vmem:[%s291 + $0x38] sm:$0xf] %vm2717, %v2699
      %2733 = vst.msk [vmem:[%s291 + $0x3c] sm:$0xf] %vm2717, %v2700
      %s2734 = scalar_lea.vmem %s260, 96
      %v2735 = vld [vmem:[%s2734] sm:$0xf]
      %v2736 = vld [vmem:[%s2734 + $0x4] sm:$0xf]
      %v2737 = vld [vmem:[%s2734 + $0x8] sm:$0x1]
      %v2738 = vld [vmem:[%s2734 + $0xc] sm:$0xf]
      %v2739 = vld [vmem:[%s2734 + $0x10] sm:$0xf]
      %v2740 = vld [vmem:[%s2734 + $0x14] sm:$0x1]
      %v2741 = vld [vmem:[%s2734 + $0x18] sm:$0xf]
      %v2742 = vld [vmem:[%s2734 + $0x1c] sm:$0xf]
      %v2743 = vld [vmem:[%s2734 + $0x20] sm:$0x1]
      %v2744 = vld [vmem:[%s2734 + $0x24] sm:$0xf]
      %v2745 = vld [vmem:[%s2734 + $0x28] sm:$0xf]
      %v2746 = vld [vmem:[%s2734 + $0x2c] sm:$0x1]
      %v2747 = vld [vmem:[%s2734 + $0x30] sm:$0xf]
      %v2748 = vld [vmem:[%s2734 + $0x34] sm:$0xf]
      %v2749 = vld [vmem:[%s2734 + $0x38] sm:$0x1]
      %v2750 = vld [vmem:[%s2734 + $0x3c] sm:$0xf]
      %v2751 = vld [vmem:[%s2734 + $0x40] sm:$0xf]
      %v2752 = vld [vmem:[%s2734 + $0x44] sm:$0x1]
      %v2753 = vld [vmem:[%s2734 + $0x48] sm:$0xf]
      %v2754 = vld [vmem:[%s2734 + $0x4c] sm:$0xf]
      %v2755 = vld [vmem:[%s2734 + $0x50] sm:$0x1]
      %v2756 = vld [vmem:[%s2734 + $0x54] sm:$0xf]
      %v2757 = vld [vmem:[%s2734 + $0x58] sm:$0xf]
      %v2758 = vld [vmem:[%s2734 + $0x5c] sm:$0x1]
      %v2759 = vld [vmem:[%s2] sm:$0x3]
      %v2761 = vshrl.u32 %v2735, 16
      %v2763 = vrot.slane %v2761, 4
      %v2764 = vshll.u32 %v2735, 16
      %v2766 = vrot.slane %v2764, 5
      %v2767 = vor.u32 %v2763, %v2766
      %v2768 = vrot.slane %v2767, 4
      %v2770 = vshll.u32 %v2736, 16
      %v2772 = vrot.slane %v2770, 5
      %v2773 = vsel %vm321, %v2768, %v2772
      %v2774 = vshrl.u32 %v2736, 16
      %v2776 = vrot.slane %v2774, 4
      %v2777 = vor.u32 %v2776, %v2772
      %v2778 = vrot.slane %v2777, 4
      %v2780 = vshll.u32 %v2737, 16
      %v2782 = vrot.slane %v2780, 5
      %v2783 = vsel %vm321, %v2778, %v2782
      %v2785 = vshrl.u32 %v2738, 16
      %v2787 = vrot.slane %v2785, 4
      %v2788 = vshll.u32 %v2738, 16
      %v2790 = vrot.slane %v2788, 5
      %v2791 = vor.u32 %v2787, %v2790
      %v2792 = vrot.slane %v2791, 4
      %v2794 = vshll.u32 %v2739, 16
      %v2796 = vrot.slane %v2794, 5
      %v2797 = vsel %vm321, %v2792, %v2796
      %v2798 = vshrl.u32 %v2739, 16
      %v2800 = vrot.slane %v2798, 4
      %v2801 = vor.u32 %v2800, %v2796
      %v2802 = vrot.slane %v2801, 4
      %v2804 = vshll.u32 %v2740, 16
      %v2806 = vrot.slane %v2804, 5
      %v2807 = vsel %vm321, %v2802, %v2806
      %v2809 = vshrl.u32 %v2741, 16
      %v2811 = vrot.slane %v2809, 4
      %v2812 = vshll.u32 %v2741, 16
      %v2814 = vrot.slane %v2812, 5
      %v2815 = vor.u32 %v2811, %v2814
      %v2816 = vrot.slane %v2815, 4
      %v2818 = vshll.u32 %v2742, 16
      %v2820 = vrot.slane %v2818, 5
      %v2821 = vsel %vm321, %v2816, %v2820
      %v2822 = vshrl.u32 %v2742, 16
      %v2824 = vrot.slane %v2822, 4
      %v2825 = vor.u32 %v2824, %v2820
      %v2826 = vrot.slane %v2825, 4
      %v2828 = vshll.u32 %v2743, 16
      %v2830 = vrot.slane %v2828, 5
      %v2831 = vsel %vm321, %v2826, %v2830
      %v2833 = vshrl.u32 %v2744, 16
      %v2835 = vrot.slane %v2833, 4
      %v2836 = vshll.u32 %v2744, 16
      %v2838 = vrot.slane %v2836, 5
      %v2839 = vor.u32 %v2835, %v2838
      %v2840 = vrot.slane %v2839, 4
      %v2842 = vshll.u32 %v2745, 16
      %v2844 = vrot.slane %v2842, 5
      %v2845 = vsel %vm321, %v2840, %v2844
      %v2846 = vshrl.u32 %v2745, 16
      %v2848 = vrot.slane %v2846, 4
      %v2849 = vor.u32 %v2848, %v2844
      %v2850 = vrot.slane %v2849, 4
      %v2852 = vshll.u32 %v2746, 16
      %v2854 = vrot.slane %v2852, 5
      %v2855 = vsel %vm321, %v2850, %v2854
      %v2857 = vshrl.u32 %v2747, 16
      %v2859 = vrot.slane %v2857, 4
      %v2860 = vshll.u32 %v2747, 16
      %v2862 = vrot.slane %v2860, 5
      %v2863 = vor.u32 %v2859, %v2862
      %v2864 = vrot.slane %v2863, 4
      %v2866 = vshll.u32 %v2748, 16
      %v2868 = vrot.slane %v2866, 5
      %v2869 = vsel %vm321, %v2864, %v2868
      %v2870 = vshrl.u32 %v2748, 16
      %v2872 = vrot.slane %v2870, 4
      %v2873 = vor.u32 %v2872, %v2868
      %v2874 = vrot.slane %v2873, 4
      %v2876 = vshll.u32 %v2749, 16
      %v2878 = vrot.slane %v2876, 5
      %v2879 = vsel %vm321, %v2874, %v2878
      %v2881 = vshrl.u32 %v2750, 16
      %v2883 = vrot.slane %v2881, 4
      %v2884 = vshll.u32 %v2750, 16
      %v2886 = vrot.slane %v2884, 5
      %v2887 = vor.u32 %v2883, %v2886
      %v2888 = vrot.slane %v2887, 4
      %v2890 = vshll.u32 %v2751, 16
      %v2892 = vrot.slane %v2890, 5
      %v2893 = vsel %vm321, %v2888, %v2892
      %v2894 = vshrl.u32 %v2751, 16
      %v2896 = vrot.slane %v2894, 4
      %v2897 = vor.u32 %v2896, %v2892
      %v2898 = vrot.slane %v2897, 4
      %v2900 = vshll.u32 %v2752, 16
      %v2902 = vrot.slane %v2900, 5
      %v2903 = vsel %vm321, %v2898, %v2902
      %v2905 = vshrl.u32 %v2753, 16
      %v2907 = vrot.slane %v2905, 4
      %v2908 = vshll.u32 %v2753, 16
      %v2910 = vrot.slane %v2908, 5
      %v2911 = vor.u32 %v2907, %v2910
      %v2912 = vrot.slane %v2911, 4
      %v2914 = vshll.u32 %v2754, 16
      %v2916 = vrot.slane %v2914, 5
      %v2917 = vsel %vm321, %v2912, %v2916
      %v2918 = vshrl.u32 %v2754, 16
      %v2920 = vrot.slane %v2918, 4
      %v2921 = vor.u32 %v2920, %v2916
      %v2922 = vrot.slane %v2921, 4
      %v2924 = vshll.u32 %v2755, 16
      %v2926 = vrot.slane %v2924, 5
      %v2927 = vsel %vm321, %v2922, %v2926
      %v2929 = vshrl.u32 %v2756, 16
      %v2931 = vrot.slane %v2929, 4
      %v2932 = vshll.u32 %v2756, 16
      %v2934 = vrot.slane %v2932, 5
      %v2935 = vor.u32 %v2931, %v2934
      %v2936 = vrot.slane %v2935, 4
      %v2938 = vshll.u32 %v2757, 16
      %v2940 = vrot.slane %v2938, 5
      %v2941 = vsel %vm321, %v2936, %v2940
      %v2942 = vshrl.u32 %v2757, 16
      %v2944 = vrot.slane %v2942, 4
      %v2945 = vor.u32 %v2944, %v2940
      %v2946 = vrot.slane %v2945, 4
      %v2948 = vshll.u32 %v2758, 16
      %v2950 = vrot.slane %v2948, 5
      %v2951 = vsel %vm321, %v2946, %v2950
      %v2952 = vld [vmem:[%s514] sm:$0x3]
      %v2953 = vunpack.c.l.b16 %v2773
      %v2954 = vunpack.c.l.b16 %v2783
      %v2955 = vunpack.c.l.b16 %v2797
      %v2956 = vunpack.c.l.b16 %v2807
      %v2957 = vunpack.c.l.b16 %v2821
      %v2958 = vunpack.c.l.b16 %v2831
      %v2959 = vunpack.c.l.b16 %v2845
      %v2960 = vunpack.c.l.b16 %v2855
      %v2961 = vunpack.c.l.b16 %v2869
      %v2962 = vunpack.c.l.b16 %v2879
      %v2963 = vunpack.c.l.b16 %v2893
      %v2964 = vunpack.c.l.b16 %v2903
      %v2965 = vunpack.c.l.b16 %v2917
      %v2966 = vunpack.c.l.b16 %v2927
      %v2967 = vunpack.c.l.b16 %v2941
      %v2968 = vunpack.c.l.b16 %v2951
      %v2969 = vpack.c.b16 %v2954, %v2953
      %v2970 = vpack.c.b16 %v2956, %v2955
      %v2971 = vpack.c.b16 %v2958, %v2957
      %v2972 = vpack.c.b16 %v2960, %v2959
      %v2973 = vpack.c.b16 %v2962, %v2961
      %v2974 = vpack.c.b16 %v2964, %v2963
      %v2975 = vpack.c.b16 %v2966, %v2965
      %v2976 = vpack.c.b16 %v2968, %v2967
      %v2978 = vsel %vm540, %v2969, 0
      %v2981 = vsel %vm540, %v2970, 0
      %v2984 = vsel %vm540, %v2971, 0
      %v2987 = vsel %vm540, %v2972, 0
      %v2990 = vsel %vm540, %v2973, 0
      %v2993 = vsel %vm540, %v2974, 0
      %v2996 = vsel %vm540, %v2975, 0
      %v2999 = vsel %vm540, %v2976, 0
      %v3002 = vsel %vm565, %v2952, 0
      %3004 = vmatprep.subr.bf16.mxu0 0
      %3005 = vmatpush1.bf16.msra.mxu0 %v3002
      %3006 = vmatprep.subr.bf16.mxu0 0
      %3007 = vmatpush1.bf16.msra.mxu0 0
      %3008 = vmatprep.subr.bf16.mxu0 0
      %3009 = vmatpush1.bf16.msra.mxu0 0
      %3010 = vmatprep.subr.bf16.mxu0 0
      %3011 = vmatpush1.bf16.msra.mxu0 0
      %3012 = vmatprep.subr.bf16.mxu0 0
      %3013 = vmatpush1.bf16.msra.mxu0 0
      %3014 = vmatprep.subr.bf16.mxu0 0
      %3015 = vmatpush1.bf16.msra.mxu0 0
      %3016 = vmatprep.subr.bf16.mxu0 0
      %3017 = vmatpush1.bf16.msra.mxu0 0
      %3018 = vmatprep.subr.bf16.mxu0 0
      %3019 = vmatpush1.bf16.msra.mxu0 0
      %3020 = vmatprep.subr.bf16.mxu0 0
      %3021 = vmatpush1.bf16.msra.mxu0 0
      %3022 = vmatprep.subr.bf16.mxu0 0
      %3023 = vmatpush1.bf16.msra.mxu0 0
      %3024 = vmatprep.subr.bf16.mxu0 0
      %3025 = vmatpush1.bf16.msra.mxu0 0
      %3026 = vmatprep.subr.bf16.mxu0 0
      %3027 = vmatpush1.bf16.msra.mxu0 0
      %3028 = vmatprep.subr.bf16.mxu0 0
      %3029 = vmatpush1.bf16.msra.mxu0 0
      %3030 = vmatprep.subr.bf16.mxu0 0
      %3031 = vmatpush1.bf16.msra.mxu0 0
      %3032 = vmatprep.subr.bf16.mxu0 0
      %3033 = vmatpush1.bf16.msra.mxu0 0
      %3034 = vmatprep.subr.bf16.mxu0 0
      %3035 = vmatpush1.bf16.msra.mxu0 0
      %3036 = vmatprep.mubr.bf16.mxu0 0
      %3037 = vmatmul.mubr.bf16.gmra.mrb[0].mxu0 %v2978
      %v3038 = vpop.f32.mrb[0].mxu0
      %v3039 = vadd.f32 0.0, %v3038
      %v3040 = vpop.f32.mrb[0].mxu0
      %v3041 = vpop.f32.mrb[0].mxu0
      %v3042 = vadd.f32 0.0, %v3041
      %v3043 = vpop.f32.mrb[0].mxu0
      %3044 = vmatprep.mubr.bf16.mxu0 0
      %3045 = vmatmul.mubr.bf16.gmra.mrb[0].mxu0 %v2981
      %v3046 = vpop.f32.mrb[0].mxu0
      %v3047 = vadd.f32 0.0, %v3046
      %v3048 = vpop.f32.mrb[0].mxu0
      %v3049 = vpop.f32.mrb[0].mxu0
      %v3050 = vadd.f32 0.0, %v3049
      %v3051 = vpop.f32.mrb[0].mxu0
      %3052 = vmatprep.mubr.bf16.mxu0 0
      %3053 = vmatmul.mubr.bf16.gmra.mrb[0].mxu0 %v2984
      %v3054 = vpop.f32.mrb[0].mxu0
      %v3055 = vadd.f32 0.0, %v3054
      %v3056 = vpop.f32.mrb[0].mxu0
      %v3057 = vpop.f32.mrb[0].mxu0
      %v3058 = vadd.f32 0.0, %v3057
      %v3059 = vpop.f32.mrb[0].mxu0
      %3060 = vmatprep.mubr.bf16.mxu0 0
      %3061 = vmatmul.mubr.bf16.gmra.mrb[0].mxu0 %v2987
      %v3062 = vpop.f32.mrb[0].mxu0
      %v3063 = vadd.f32 0.0, %v3062
      %v3064 = vpop.f32.mrb[0].mxu0
      %v3065 = vpop.f32.mrb[0].mxu0
      %v3066 = vadd.f32 0.0, %v3065
      %v3067 = vpop.f32.mrb[0].mxu0
      %3068 = vmatprep.mubr.bf16.mxu0 0
      %3069 = vmatmul.mubr.bf16.gmra.mrb[0].mxu0 %v2990
      %v3070 = vpop.f32.mrb[0].mxu0
      %v3071 = vadd.f32 0.0, %v3070
      %v3072 = vpop.f32.mrb[0].mxu0
      %v3073 = vpop.f32.mrb[0].mxu0
      %v3074 = vadd.f32 0.0, %v3073
      %v3075 = vpop.f32.mrb[0].mxu0
      %3076 = vmatprep.mubr.bf16.mxu0 0
      %3077 = vmatmul.mubr.bf16.gmra.mrb[0].mxu0 %v2993
      %v3078 = vpop.f32.mrb[0].mxu0
      %v3079 = vadd.f32 0.0, %v3078
      %v3080 = vpop.f32.mrb[0].mxu0
      %v3081 = vpop.f32.mrb[0].mxu0
      %v3082 = vadd.f32 0.0, %v3081
      %v3083 = vpop.f32.mrb[0].mxu0
      %3084 = vmatprep.mubr.bf16.mxu0 0
      %3085 = vmatmul.mubr.bf16.gmra.mrb[0].mxu0 %v2996
      %v3086 = vpop.f32.mrb[0].mxu0
      %v3087 = vadd.f32 0.0, %v3086
      %v3088 = vpop.f32.mrb[0].mxu0
      %v3089 = vpop.f32.mrb[0].mxu0
      %v3090 = vadd.f32 0.0, %v3089
      %v3091 = vpop.f32.mrb[0].mxu0
      %3092 = vmatprep.mubr.bf16.mxu0 0
      %3093 = vmatmul.mubr.bf16.gmra.mrb[0].mxu0 %v2999
      %v3094 = vpop.f32.mrb[0].mxu0
      %v3095 = vadd.f32 0.0, %v3094
      %v3096 = vpop.f32.mrb[0].mxu0
      %v3097 = vpop.f32.mrb[0].mxu0
      %v3098 = vadd.f32 0.0, %v3097
      %v3099 = vpop.f32.mrb[0].mxu0
      %3100 = vdwg.mxu0
      %v3117 = vunpack.c.l.b16 %v2735
      %v3118 = vunpack.c.l.b16 %v2736
      %v3119 = vunpack.c.l.b16 %v2738
      %v3120 = vunpack.c.l.b16 %v2739
      %v3121 = vunpack.c.l.b16 %v2741
      %v3122 = vunpack.c.l.b16 %v2742
      %v3123 = vunpack.c.l.b16 %v2744
      %v3124 = vunpack.c.l.b16 %v2745
      %v3125 = vunpack.c.l.b16 %v2747
      %v3126 = vunpack.c.l.b16 %v2748
      %v3127 = vunpack.c.l.b16 %v2750
      %v3128 = vunpack.c.l.b16 %v2751
      %v3129 = vunpack.c.l.b16 %v2753
      %v3130 = vunpack.c.l.b16 %v2754
      %v3131 = vunpack.c.l.b16 %v2756
      %v3132 = vunpack.c.l.b16 %v2757
      %v3133 = vpack.c.b16 %v3118, %v3117
      %v3134 = vpack.c.b16 %v3120, %v3119
      %v3135 = vpack.c.b16 %v3122, %v3121
      %v3136 = vpack.c.b16 %v3124, %v3123
      %v3137 = vpack.c.b16 %v3126, %v3125
      %v3138 = vpack.c.b16 %v3128, %v3127
      %v3139 = vpack.c.b16 %v3130, %v3129
      %v3140 = vpack.c.b16 %v3132, %v3131
      %v3142 = vsel %vm540, %v3133, 0
      %v3145 = vsel %vm540, %v3134, 0
      %v3148 = vsel %vm540, %v3135, 0
      %v3151 = vsel %vm540, %v3136, 0
      %v3154 = vsel %vm540, %v3137, 0
      %v3157 = vsel %vm540, %v3138, 0
      %v3160 = vsel %vm540, %v3139, 0
      %v3163 = vsel %vm540, %v3140, 0
      %v3166 = vsel %vm565, %v2759, 0
      %3168 = vmatprep.subr.bf16.mxu0 0
      %3169 = vmatpush1.bf16.msra.mxu0 %v3166
      %3170 = vmatprep.subr.bf16.mxu0 0
      %3171 = vmatpush1.bf16.msra.mxu0 0
      %3172 = vmatprep.subr.bf16.mxu0 0
      %3173 = vmatpush1.bf16.msra.mxu0 0
      %3174 = vmatprep.subr.bf16.mxu0 0
      %3175 = vmatpush1.bf16.msra.mxu0 0
      %3176 = vmatprep.subr.bf16.mxu0 0
      %3177 = vmatpush1.bf16.msra.mxu0 0
      %3178 = vmatprep.subr.bf16.mxu0 0
      %3179 = vmatpush1.bf16.msra.mxu0 0
      %3180 = vmatprep.subr.bf16.mxu0 0
      %3181 = vmatpush1.bf16.msra.mxu0 0
      %3182 = vmatprep.subr.bf16.mxu0 0
      %3183 = vmatpush1.bf16.msra.mxu0 0
      %3184 = vmatprep.subr.bf16.mxu0 0
      %3185 = vmatpush1.bf16.msra.mxu0 0
      %3186 = vmatprep.subr.bf16.mxu0 0
      %3187 = vmatpush1.bf16.msra.mxu0 0
      %3188 = vmatprep.subr.bf16.mxu0 0
      %3189 = vmatpush1.bf16.msra.mxu0 0
      %3190 = vmatprep.subr.bf16.mxu0 0
      %3191 = vmatpush1.bf16.msra.mxu0 0
      %3192 = vmatprep.subr.bf16.mxu0 0
      %3193 = vmatpush1.bf16.msra.mxu0 0
      %3194 = vmatprep.subr.bf16.mxu0 0
      %3195 = vmatpush1.bf16.msra.mxu0 0
      %3196 = vmatprep.subr.bf16.mxu0 0
      %3197 = vmatpush1.bf16.msra.mxu0 0
      %3198 = vmatprep.subr.bf16.mxu0 0
      %3199 = vmatpush1.bf16.msra.mxu0 0
      %3200 = vmatprep.mubr.bf16.mxu0 0
      %3201 = vmatmul.mubr.bf16.gmra.mrb[0].mxu0 %v3142
      %v3202 = vpop.f32.mrb[0].mxu0
      %v3203 = vadd.f32 %v3039, %v3202
      %v3204 = vpop.f32.mrb[0].mxu0
      %v3205 = vpop.f32.mrb[0].mxu0
      %v3206 = vadd.f32 %v3042, %v3205
      %v3207 = vpop.f32.mrb[0].mxu0
      %3208 = vmatprep.mubr.bf16.mxu0 0
      %3209 = vmatmul.mubr.bf16.gmra.mrb[0].mxu0 %v3145
      %v3210 = vpop.f32.mrb[0].mxu0
      %v3211 = vadd.f32 %v3047, %v3210
      %v3212 = vpop.f32.mrb[0].mxu0
      %v3213 = vpop.f32.mrb[0].mxu0
      %v3214 = vadd.f32 %v3050, %v3213
      %v3215 = vpop.f32.mrb[0].mxu0
      %3216 = vmatprep.mubr.bf16.mxu0 0
      %3217 = vmatmul.mubr.bf16.gmra.mrb[0].mxu0 %v3148
      %v3218 = vpop.f32.mrb[0].mxu0
      %v3219 = vadd.f32 %v3055, %v3218
      %v3220 = vpop.f32.mrb[0].mxu0
      %v3221 = vpop.f32.mrb[0].mxu0
      %v3222 = vadd.f32 %v3058, %v3221
      %v3223 = vpop.f32.mrb[0].mxu0
      %3224 = vmatprep.mubr.bf16.mxu0 0
      %3225 = vmatmul.mubr.bf16.gmra.mrb[0].mxu0 %v3151
      %v3226 = vpop.f32.mrb[0].mxu0
      %v3227 = vadd.f32 %v3063, %v3226
      %v3228 = vpop.f32.mrb[0].mxu0
      %v3229 = vpop.f32.mrb[0].mxu0
      %v3230 = vadd.f32 %v3066, %v3229
      %v3231 = vpop.f32.mrb[0].mxu0
      %3232 = vmatprep.mubr.bf16.mxu0 0
      %3233 = vmatmul.mubr.bf16.gmra.mrb[0].mxu0 %v3154
      %v3234 = vpop.f32.mrb[0].mxu0
      %v3235 = vadd.f32 %v3071, %v3234
      %v3236 = vpop.f32.mrb[0].mxu0
      %v3237 = vpop.f32.mrb[0].mxu0
      %v3238 = vadd.f32 %v3074, %v3237
      %v3239 = vpop.f32.mrb[0].mxu0
      %3240 = vmatprep.mubr.bf16.mxu0 0
      %3241 = vmatmul.mubr.bf16.gmra.mrb[0].mxu0 %v3157
      %v3242 = vpop.f32.mrb[0].mxu0
      %v3243 = vadd.f32 %v3079, %v3242
      %v3244 = vpop.f32.mrb[0].mxu0
      %v3245 = vpop.f32.mrb[0].mxu0
      %v3246 = vadd.f32 %v3082, %v3245
      %v3247 = vpop.f32.mrb[0].mxu0
      %3248 = vmatprep.mubr.bf16.mxu0 0
      %3249 = vmatmul.mubr.bf16.gmra.mrb[0].mxu0 %v3160
      %v3250 = vpop.f32.mrb[0].mxu0
      %v3251 = vadd.f32 %v3087, %v3250
      %v3252 = vpop.f32.mrb[0].mxu0
      %v3253 = vpop.f32.mrb[0].mxu0
      %v3254 = vadd.f32 %v3090, %v3253
      %v3255 = vpop.f32.mrb[0].mxu0
      %3256 = vmatprep.mubr.bf16.mxu0 0
      %3257 = vmatmul.mubr.bf16.gmra.mrb[0].mxu0 %v3163
      %v3258 = vpop.f32.mrb[0].mxu0
      %v3259 = vadd.f32 %v3095, %v3258
      %v3260 = vpop.f32.mrb[0].mxu0
      %v3261 = vpop.f32.mrb[0].mxu0
      %v3262 = vadd.f32 %v3098, %v3261
      %v3263 = vpop.f32.mrb[0].mxu0
      %3264 = vdwg.mxu0
      %v3273 = vrot.slane %v2735, 5
      %v3274 = vrot.slane %v3273, 4
      %v3275 = vrot.slane %v2736, 5
      %v3276 = vsel %vm840, %v3274, %v3275
      %v3277 = vrot.slane %v3275, 4
      %v3278 = vrot.slane %v2737, 5
      %v3279 = vsel %vm840, %v3277, %v3278
      %v3280 = vrot.slane %v2738, 5
      %v3281 = vrot.slane %v3280, 4
      %v3282 = vrot.slane %v2739, 5
      %v3283 = vsel %vm840, %v3281, %v3282
      %v3284 = vrot.slane %v3282, 4
      %v3285 = vrot.slane %v2740, 5
      %v3286 = vsel %vm840, %v3284, %v3285
      %v3287 = vrot.slane %v2741, 5
      %v3288 = vrot.slane %v3287, 4
      %v3289 = vrot.slane %v2742, 5
      %v3290 = vsel %vm840, %v3288, %v3289
      %v3291 = vrot.slane %v3289, 4
      %v3292 = vrot.slane %v2743, 5
      %v3293 = vsel %vm840, %v3291, %v3292
      %v3294 = vrot.slane %v2744, 5
      %v3295 = vrot.slane %v3294, 4
      %v3296 = vrot.slane %v2745, 5
      %v3297 = vsel %vm840, %v3295, %v3296
      %v3298 = vrot.slane %v3296, 4
      %v3299 = vrot.slane %v2746, 5
      %v3300 = vsel %vm840, %v3298, %v3299
      %v3301 = vrot.slane %v2747, 5
      %v3302 = vrot.slane %v3301, 4
      %v3303 = vrot.slane %v2748, 5
      %v3304 = vsel %vm840, %v3302, %v3303
      %v3305 = vrot.slane %v3303, 4
      %v3306 = vrot.slane %v2749, 5
      %v3307 = vsel %vm840, %v3305, %v3306
      %v3308 = vrot.slane %v2750, 5
      %v3309 = vrot.slane %v3308, 4
      %v3310 = vrot.slane %v2751, 5
      %v3311 = vsel %vm840, %v3309, %v3310
      %v3312 = vrot.slane %v3310, 4
      %v3313 = vrot.slane %v2752, 5
      %v3314 = vsel %vm840, %v3312, %v3313
      %v3315 = vrot.slane %v2753, 5
      %v3316 = vrot.slane %v3315, 4
      %v3317 = vrot.slane %v2754, 5
      %v3318 = vsel %vm840, %v3316, %v3317
      %v3319 = vrot.slane %v3317, 4
      %v3320 = vrot.slane %v2755, 5
      %v3321 = vsel %vm840, %v3319, %v3320
      %v3322 = vrot.slane %v2756, 5
      %v3323 = vrot.slane %v3322, 4
      %v3324 = vrot.slane %v2757, 5
      %v3325 = vsel %vm840, %v3323, %v3324
      %v3326 = vrot.slane %v3324, 4
      %v3327 = vrot.slane %v2758, 5
      %v3328 = vsel %vm840, %v3326, %v3327
      %v3329 = vld [vmem:[%s897] sm:$0x3]
      %v3330 = vunpack.c.l.b16 %v3276
      %v3331 = vunpack.c.l.b16 %v3279
      %v3332 = vunpack.c.l.b16 %v3283
      %v3333 = vunpack.c.l.b16 %v3286
      %v3334 = vunpack.c.l.b16 %v3290
      %v3335 = vunpack.c.l.b16 %v3293
      %v3336 = vunpack.c.l.b16 %v3297
      %v3337 = vunpack.c.l.b16 %v3300
      %v3338 = vunpack.c.l.b16 %v3304
      %v3339 = vunpack.c.l.b16 %v3307
      %v3340 = vunpack.c.l.b16 %v3311
      %v3341 = vunpack.c.l.b16 %v3314
      %v3342 = vunpack.c.l.b16 %v3318
      %v3343 = vunpack.c.l.b16 %v3321
      %v3344 = vunpack.c.l.b16 %v3325
      %v3345 = vunpack.c.l.b16 %v3328
      %v3346 = vpack.c.b16 %v3331, %v3330
      %v3347 = vpack.c.b16 %v3333, %v3332
      %v3348 = vpack.c.b16 %v3335, %v3334
      %v3349 = vpack.c.b16 %v3337, %v3336
      %v3350 = vpack.c.b16 %v3339, %v3338
      %v3351 = vpack.c.b16 %v3341, %v3340
      %v3352 = vpack.c.b16 %v3343, %v3342
      %v3353 = vpack.c.b16 %v3345, %v3344
      %v3355 = vsel %vm540, %v3346, 0
      %v3358 = vsel %vm540, %v3347, 0
      %v3361 = vsel %vm540, %v3348, 0
      %v3364 = vsel %vm540, %v3349, 0
      %v3367 = vsel %vm540, %v3350, 0
      %v3370 = vsel %vm540, %v3351, 0
      %v3373 = vsel %vm540, %v3352, 0
      %v3376 = vsel %vm540, %v3353, 0
      %v3379 = vsel %vm565, %v3329, 0
      %3381 = vmatprep.subr.bf16.mxu0 0
      %3382 = vmatpush1.bf16.msra.mxu0 %v3379
      %3383 = vmatprep.subr.bf16.mxu0 0
      %3384 = vmatpush1.bf16.msra.mxu0 0
      %3385 = vmatprep.subr.bf16.mxu0 0
      %3386 = vmatpush1.bf16.msra.mxu0 0
      %3387 = vmatprep.subr.bf16.mxu0 0
      %3388 = vmatpush1.bf16.msra.mxu0 0
      %3389 = vmatprep.subr.bf16.mxu0 0
      %3390 = vmatpush1.bf16.msra.mxu0 0
      %3391 = vmatprep.subr.bf16.mxu0 0
      %3392 = vmatpush1.bf16.msra.mxu0 0
      %3393 = vmatprep.subr.bf16.mxu0 0
      %3394 = vmatpush1.bf16.msra.mxu0 0
      %3395 = vmatprep.subr.bf16.mxu0 0
      %3396 = vmatpush1.bf16.msra.mxu0 0
      %3397 = vmatprep.subr.bf16.mxu0 0
      %3398 = vmatpush1.bf16.msra.mxu0 0
      %3399 = vmatprep.subr.bf16.mxu0 0
      %3400 = vmatpush1.bf16.msra.mxu0 0
      %3401 = vmatprep.subr.bf16.mxu0 0
      %3402 = vmatpush1.bf16.msra.mxu0 0
      %3403 = vmatprep.subr.bf16.mxu0 0
      %3404 = vmatpush1.bf16.msra.mxu0 0
      %3405 = vmatprep.subr.bf16.mxu0 0
      %3406 = vmatpush1.bf16.msra.mxu0 0
      %3407 = vmatprep.subr.bf16.mxu0 0
      %3408 = vmatpush1.bf16.msra.mxu0 0
      %3409 = vmatprep.subr.bf16.mxu0 0
      %3410 = vmatpush1.bf16.msra.mxu0 0
      %3411 = vmatprep.subr.bf16.mxu0 0
      %3412 = vmatpush1.bf16.msra.mxu0 0
      %3413 = vmatprep.mubr.bf16.mxu0 0
      %3414 = vmatmul.mubr.bf16.gmra.mrb[0].mxu0 %v3355
      %v3415 = vpop.f32.mrb[0].mxu0
      %v3416 = vadd.f32 0.0, %v3415
      %v3417 = vpop.f32.mrb[0].mxu0
      %v3418 = vpop.f32.mrb[0].mxu0
      %v3419 = vadd.f32 0.0, %v3418
      %v3420 = vpop.f32.mrb[0].mxu0
      %3421 = vmatprep.mubr.bf16.mxu0 0
      %3422 = vmatmul.mubr.bf16.gmra.mrb[0].mxu0 %v3358
      %v3423 = vpop.f32.mrb[0].mxu0
      %v3424 = vadd.f32 0.0, %v3423
      %v3425 = vpop.f32.mrb[0].mxu0
      %v3426 = vpop.f32.mrb[0].mxu0
      %v3427 = vadd.f32 0.0, %v3426
      %v3428 = vpop.f32.mrb[0].mxu0
      %3429 = vmatprep.mubr.bf16.mxu0 0
      %3430 = vmatmul.mubr.bf16.gmra.mrb[0].mxu0 %v3361
      %v3431 = vpop.f32.mrb[0].mxu0
      %v3432 = vadd.f32 0.0, %v3431
      %v3433 = vpop.f32.mrb[0].mxu0
      %v3434 = vpop.f32.mrb[0].mxu0
      %v3435 = vadd.f32 0.0, %v3434
      %v3436 = vpop.f32.mrb[0].mxu0
      %3437 = vmatprep.mubr.bf16.mxu0 0
      %3438 = vmatmul.mubr.bf16.gmra.mrb[0].mxu0 %v3364
      %v3439 = vpop.f32.mrb[0].mxu0
      %v3440 = vadd.f32 0.0, %v3439
      %v3441 = vpop.f32.mrb[0].mxu0
      %v3442 = vpop.f32.mrb[0].mxu0
      %v3443 = vadd.f32 0.0, %v3442
      %v3444 = vpop.f32.mrb[0].mxu0
      %3445 = vmatprep.mubr.bf16.mxu0 0
      %3446 = vmatmul.mubr.bf16.gmra.mrb[0].mxu0 %v3367
      %v3447 = vpop.f32.mrb[0].mxu0
      %v3448 = vadd.f32 0.0, %v3447
      %v3449 = vpop.f32.mrb[0].mxu0
      %v3450 = vpop.f32.mrb[0].mxu0
      %v3451 = vadd.f32 0.0, %v3450
      %v3452 = vpop.f32.mrb[0].mxu0
      %3453 = vmatprep.mubr.bf16.mxu0 0
      %3454 = vmatmul.mubr.bf16.gmra.mrb[0].mxu0 %v3370
      %v3455 = vpop.f32.mrb[0].mxu0
      %v3456 = vadd.f32 0.0, %v3455
      %v3457 = vpop.f32.mrb[0].mxu0
      %v3458 = vpop.f32.mrb[0].mxu0
      %v3459 = vadd.f32 0.0, %v3458
      %v3460 = vpop.f32.mrb[0].mxu0
      %3461 = vmatprep.mubr.bf16.mxu0 0
      %3462 = vmatmul.mubr.bf16.gmra.mrb[0].mxu0 %v3373
      %v3463 = vpop.f32.mrb[0].mxu0
      %v3464 = vadd.f32 0.0, %v3463
      %v3465 = vpop.f32.mrb[0].mxu0
      %v3466 = vpop.f32.mrb[0].mxu0
      %v3467 = vadd.f32 0.0, %v3466
      %v3468 = vpop.f32.mrb[0].mxu0
      %3469 = vmatprep.mubr.bf16.mxu0 0
      %3470 = vmatmul.mubr.bf16.gmra.mrb[0].mxu0 %v3376
      %v3471 = vpop.f32.mrb[0].mxu0
      %v3472 = vadd.f32 0.0, %v3471
      %v3473 = vpop.f32.mrb[0].mxu0
      %v3474 = vpop.f32.mrb[0].mxu0
      %v3475 = vadd.f32 0.0, %v3474
      %v3476 = vpop.f32.mrb[0].mxu0
      %3477 = vdwg.mxu0
      %v3478 = vadd.f32 %v3203, %v3416
      %v3479 = vadd.f32 %v3206, %v3419
      %v3480 = vadd.f32 %v3211, %v3424
      %v3481 = vadd.f32 %v3214, %v3427
      %v3482 = vadd.f32 %v3219, %v3432
      %v3483 = vadd.f32 %v3222, %v3435
      %v3484 = vadd.f32 %v3227, %v3440
      %v3485 = vadd.f32 %v3230, %v3443
      %v3486 = vadd.f32 %v3235, %v3448
      %v3487 = vadd.f32 %v3238, %v3451
      %v3488 = vadd.f32 %v3243, %v3456
      %v3489 = vadd.f32 %v3246, %v3459
      %v3490 = vadd.f32 %v3251, %v3464
      %v3491 = vadd.f32 %v3254, %v3467
      %v3492 = vadd.f32 %v3259, %v3472
      %v3493 = vadd.f32 %v3262, %v3475
      %s3494 = scalar_lea.vmem %s260, 108
      %v3495 = vld [vmem:[%s3494] sm:$0xf]
      %v3496 = vld [vmem:[%s3494 + $0x4] sm:$0xf]
      %v3497 = vld [vmem:[%s3494 + $0x8] sm:$0x1]
      %v3498 = vld [vmem:[%s3494 + $0xc] sm:$0xf]
      %v3499 = vld [vmem:[%s3494 + $0x10] sm:$0xf]
      %v3500 = vld [vmem:[%s3494 + $0x14] sm:$0x1]
      %v3501 = vld [vmem:[%s3494 + $0x18] sm:$0xf]
      %v3502 = vld [vmem:[%s3494 + $0x1c] sm:$0xf]
      %v3503 = vld [vmem:[%s3494 + $0x20] sm:$0x1]
      %v3504 = vld [vmem:[%s3494 + $0x24] sm:$0xf]
      %v3505 = vld [vmem:[%s3494 + $0x28] sm:$0xf]
      %v3506 = vld [vmem:[%s3494 + $0x2c] sm:$0x1]
      %v3507 = vld [vmem:[%s3494 + $0x30] sm:$0xf]
      %v3508 = vld [vmem:[%s3494 + $0x34] sm:$0xf]
      %v3509 = vld [vmem:[%s3494 + $0x38] sm:$0x1]
      %v3510 = vld [vmem:[%s3494 + $0x3c] sm:$0xf]
      %v3511 = vld [vmem:[%s3494 + $0x40] sm:$0xf]
      %v3512 = vld [vmem:[%s3494 + $0x44] sm:$0x1]
      %v3513 = vld [vmem:[%s3494 + $0x48] sm:$0xf]
      %v3514 = vld [vmem:[%s3494 + $0x4c] sm:$0xf]
      %v3515 = vld [vmem:[%s3494 + $0x50] sm:$0x1]
      %v3516 = vld [vmem:[%s278] sm:$0xf]
      %v3517 = vld [vmem:[%s278 + $0x4] sm:$0xf]
      %v3518 = vld [vmem:[%s278 + $0x8] sm:$0x1]
      %v3519 = vld [vmem:[%s1088] sm:$0x3]
      %v3536 = vunpack.c.l.b16 %v3495
      %v3537 = vunpack.c.l.b16 %v3496
      %v3538 = vunpack.c.l.b16 %v3498
      %v3539 = vunpack.c.l.b16 %v3499
      %v3540 = vunpack.c.l.b16 %v3501
      %v3541 = vunpack.c.l.b16 %v3502
      %v3542 = vunpack.c.l.b16 %v3504
      %v3543 = vunpack.c.l.b16 %v3505
      %v3544 = vunpack.c.l.b16 %v3507
      %v3545 = vunpack.c.l.b16 %v3508
      %v3546 = vunpack.c.l.b16 %v3510
      %v3547 = vunpack.c.l.b16 %v3511
      %v3548 = vunpack.c.l.b16 %v3513
      %v3549 = vunpack.c.l.b16 %v3514
      %v3550 = vunpack.c.l.b16 %v3516
      %v3551 = vunpack.c.l.b16 %v3517
      %v3552 = vpack.c.b16 %v3537, %v3536
      %v3553 = vpack.c.b16 %v3539, %v3538
      %v3554 = vpack.c.b16 %v3541, %v3540
      %v3555 = vpack.c.b16 %v3543, %v3542
      %v3556 = vpack.c.b16 %v3545, %v3544
      %v3557 = vpack.c.b16 %v3547, %v3546
      %v3558 = vpack.c.b16 %v3549, %v3548
      %v3559 = vpack.c.b16 %v3551, %v3550
      %v3561 = vsel %vm540, %v3552, 0
      %v3564 = vsel %vm540, %v3553, 0
      %v3567 = vsel %vm540, %v3554, 0
      %v3570 = vsel %vm540, %v3555, 0
      %v3573 = vsel %vm540, %v3556, 0
      %v3576 = vsel %vm540, %v3557, 0
      %v3579 = vsel %vm540, %v3558, 0
      %v3582 = vsel %vm540, %v3559, 0
      %v3585 = vsel %vm565, %v3519, 0
      %3587 = vmatprep.subr.bf16.mxu0 0
      %3588 = vmatpush1.bf16.msra.mxu0 %v3585
      %3589 = vmatprep.subr.bf16.mxu0 0
      %3590 = vmatpush1.bf16.msra.mxu0 0
      %3591 = vmatprep.subr.bf16.mxu0 0
      %3592 = vmatpush1.bf16.msra.mxu0 0
      %3593 = vmatprep.subr.bf16.mxu0 0
      %3594 = vmatpush1.bf16.msra.mxu0 0
      %3595 = vmatprep.subr.bf16.mxu0 0
      %3596 = vmatpush1.bf16.msra.mxu0 0
      %3597 = vmatprep.subr.bf16.mxu0 0
      %3598 = vmatpush1.bf16.msra.mxu0 0
      %3599 = vmatprep.subr.bf16.mxu0 0
      %3600 = vmatpush1.bf16.msra.mxu0 0
      %3601 = vmatprep.subr.bf16.mxu0 0
      %3602 = vmatpush1.bf16.msra.mxu0 0
      %3603 = vmatprep.subr.bf16.mxu0 0
      %3604 = vmatpush1.bf16.msra.mxu0 0
      %3605 = vmatprep.subr.bf16.mxu0 0
      %3606 = vmatpush1.bf16.msra.mxu0 0
      %3607 = vmatprep.subr.bf16.mxu0 0
      %3608 = vmatpush1.bf16.msra.mxu0 0
      %3609 = vmatprep.subr.bf16.mxu0 0
      %3610 = vmatpush1.bf16.msra.mxu0 0
      %3611 = vmatprep.subr.bf16.mxu0 0
      %3612 = vmatpush1.bf16.msra.mxu0 0
      %3613 = vmatprep.subr.bf16.mxu0 0
      %3614 = vmatpush1.bf16.msra.mxu0 0
      %3615 = vmatprep.subr.bf16.mxu0 0
      %3616 = vmatpush1.bf16.msra.mxu0 0
      %3617 = vmatprep.subr.bf16.mxu0 0
      %3618 = vmatpush1.bf16.msra.mxu0 0
      %3619 = vmatprep.mubr.bf16.mxu0 0
      %3620 = vmatmul.mubr.bf16.gmra.mrb[0].mxu0 %v3561
      %v3621 = vpop.f32.mrb[0].mxu0
      %v3622 = vadd.f32 0.0, %v3621
      %v3623 = vpop.f32.mrb[0].mxu0
      %v3624 = vpop.f32.mrb[0].mxu0
      %v3625 = vadd.f32 0.0, %v3624
      %v3626 = vpop.f32.mrb[0].mxu0
      %3627 = vmatprep.mubr.bf16.mxu0 0
      %3628 = vmatmul.mubr.bf16.gmra.mrb[0].mxu0 %v3564
      %v3629 = vpop.f32.mrb[0].mxu0
      %v3630 = vadd.f32 0.0, %v3629
      %v3631 = vpop.f32.mrb[0].mxu0
      %v3632 = vpop.f32.mrb[0].mxu0
      %v3633 = vadd.f32 0.0, %v3632
      %v3634 = vpop.f32.mrb[0].mxu0
      %3635 = vmatprep.mubr.bf16.mxu0 0
      %3636 = vmatmul.mubr.bf16.gmra.mrb[0].mxu0 %v3567
      %v3637 = vpop.f32.mrb[0].mxu0
      %v3638 = vadd.f32 0.0, %v3637
      %v3639 = vpop.f32.mrb[0].mxu0
      %v3640 = vpop.f32.mrb[0].mxu0
      %v3641 = vadd.f32 0.0, %v3640
      %v3642 = vpop.f32.mrb[0].mxu0
      %3643 = vmatprep.mubr.bf16.mxu0 0
      %3644 = vmatmul.mubr.bf16.gmra.mrb[0].mxu0 %v3570
      %v3645 = vpop.f32.mrb[0].mxu0
      %v3646 = vadd.f32 0.0, %v3645
      %v3647 = vpop.f32.mrb[0].mxu0
      %v3648 = vpop.f32.mrb[0].mxu0
      %v3649 = vadd.f32 0.0, %v3648
      %v3650 = vpop.f32.mrb[0].mxu0
      %3651 = vmatprep.mubr.bf16.mxu0 0
      %3652 = vmatmul.mubr.bf16.gmra.mrb[0].mxu0 %v3573
      %v3653 = vpop.f32.mrb[0].mxu0
      %v3654 = vadd.f32 0.0, %v3653
      %v3655 = vpop.f32.mrb[0].mxu0
      %v3656 = vpop.f32.mrb[0].mxu0
      %v3657 = vadd.f32 0.0, %v3656
      %v3658 = vpop.f32.mrb[0].mxu0
      %3659 = vmatprep.mubr.bf16.mxu0 0
      %3660 = vmatmul.mubr.bf16.gmra.mrb[0].mxu0 %v3576
      %v3661 = vpop.f32.mrb[0].mxu0
      %v3662 = vadd.f32 0.0, %v3661
      %v3663 = vpop.f32.mrb[0].mxu0
      %v3664 = vpop.f32.mrb[0].mxu0
      %v3665 = vadd.f32 0.0, %v3664
      %v3666 = vpop.f32.mrb[0].mxu0
      %3667 = vmatprep.mubr.bf16.mxu0 0
      %3668 = vmatmul.mubr.bf16.gmra.mrb[0].mxu0 %v3579
      %v3669 = vpop.f32.mrb[0].mxu0
      %v3670 = vadd.f32 0.0, %v3669
      %v3671 = vpop.f32.mrb[0].mxu0
      %v3672 = vpop.f32.mrb[0].mxu0
      %v3673 = vadd.f32 0.0, %v3672
      %v3674 = vpop.f32.mrb[0].mxu0
      %3675 = vmatprep.mubr.bf16.mxu0 0
      %3676 = vmatmul.mubr.bf16.gmra.mrb[0].mxu0 %v3582
      %v3677 = vpop.f32.mrb[0].mxu0
      %v3678 = vadd.f32 0.0, %v3677
      %v3679 = vpop.f32.mrb[0].mxu0
      %v3680 = vpop.f32.mrb[0].mxu0
      %v3681 = vadd.f32 0.0, %v3680
      %v3682 = vpop.f32.mrb[0].mxu0
      %3683 = vdwg.mxu0
      %v3684 = vadd.f32 %v3478, %v3622
      %v3685 = vadd.f32 %v3479, %v3625
      %v3686 = vadd.f32 %v3480, %v3630
      %v3687 = vadd.f32 %v3481, %v3633
      %v3688 = vadd.f32 %v3482, %v3638
      %v3689 = vadd.f32 %v3483, %v3641
      %v3690 = vadd.f32 %v3484, %v3646
      %v3691 = vadd.f32 %v3485, %v3649
      %v3692 = vadd.f32 %v3486, %v3654
      %v3693 = vadd.f32 %v3487, %v3657
      %v3694 = vadd.f32 %v3488, %v3662
      %v3695 = vadd.f32 %v3489, %v3665
      %v3696 = vadd.f32 %v3490, %v3670
      %v3697 = vadd.f32 %v3491, %v3673
      %v3698 = vadd.f32 %v3492, %v3678
      %v3699 = vadd.f32 %v3493, %v3681
      %v3701 = vshrl.u32 %v3495, 16
      %v3703 = vrot.slane %v3701, 4
      %v3704 = vshll.u32 %v3495, 16
      %v3706 = vrot.slane %v3704, 5
      %v3707 = vor.u32 %v3703, %v3706
      %v3708 = vrot.slane %v3707, 4
      %v3710 = vshll.u32 %v3496, 16
      %v3712 = vrot.slane %v3710, 5
      %v3713 = vsel %vm321, %v3708, %v3712
      %v3714 = vshrl.u32 %v3496, 16
      %v3716 = vrot.slane %v3714, 4
      %v3717 = vor.u32 %v3716, %v3712
      %v3718 = vrot.slane %v3717, 4
      %v3720 = vshll.u32 %v3497, 16
      %v3722 = vrot.slane %v3720, 5
      %v3723 = vsel %vm321, %v3718, %v3722
      %v3725 = vshrl.u32 %v3498, 16
      %v3727 = vrot.slane %v3725, 4
      %v3728 = vshll.u32 %v3498, 16
      %v3730 = vrot.slane %v3728, 5
      %v3731 = vor.u32 %v3727, %v3730
      %v3732 = vrot.slane %v3731, 4
      %v3734 = vshll.u32 %v3499, 16
      %v3736 = vrot.slane %v3734, 5
      %v3737 = vsel %vm321, %v3732, %v3736
      %v3738 = vshrl.u32 %v3499, 16
      %v3740 = vrot.slane %v3738, 4
      %v3741 = vor.u32 %v3740, %v3736
      %v3742 = vrot.slane %v3741, 4
      %v3744 = vshll.u32 %v3500, 16
      %v3746 = vrot.slane %v3744, 5
      %v3747 = vsel %vm321, %v3742, %v3746
      %v3749 = vshrl.u32 %v3501, 16
      %v3751 = vrot.slane %v3749, 4
      %v3752 = vshll.u32 %v3501, 16
      %v3754 = vrot.slane %v3752, 5
      %v3755 = vor.u32 %v3751, %v3754
      %v3756 = vrot.slane %v3755, 4
      %v3758 = vshll.u32 %v3502, 16
      %v3760 = vrot.slane %v3758, 5
      %v3761 = vsel %vm321, %v3756, %v3760
      %v3762 = vshrl.u32 %v3502, 16
      %v3764 = vrot.slane %v3762, 4
      %v3765 = vor.u32 %v3764, %v3760
      %v3766 = vrot.slane %v3765, 4
      %v3768 = vshll.u32 %v3503, 16
      %v3770 = vrot.slane %v3768, 5
      %v3771 = vsel %vm321, %v3766, %v3770
      %v3773 = vshrl.u32 %v3504, 16
      %v3775 = vrot.slane %v3773, 4
      %v3776 = vshll.u32 %v3504, 16
      %v3778 = vrot.slane %v3776, 5
      %v3779 = vor.u32 %v3775, %v3778
      %v3780 = vrot.slane %v3779, 4
      %v3782 = vshll.u32 %v3505, 16
      %v3784 = vrot.slane %v3782, 5
      %v3785 = vsel %vm321, %v3780, %v3784
      %v3786 = vshrl.u32 %v3505, 16
      %v3788 = vrot.slane %v3786, 4
      %v3789 = vor.u32 %v3788, %v3784
      %v3790 = vrot.slane %v3789, 4
      %v3792 = vshll.u32 %v3506, 16
      %v3794 = vrot.slane %v3792, 5
      %v3795 = vsel %vm321, %v3790, %v3794
      %v3797 = vshrl.u32 %v3507, 16
      %v3799 = vrot.slane %v3797, 4
      %v3800 = vshll.u32 %v3507, 16
      %v3802 = vrot.slane %v3800, 5
      %v3803 = vor.u32 %v3799, %v3802
      %v3804 = vrot.slane %v3803, 4
      %v3806 = vshll.u32 %v3508, 16
      %v3808 = vrot.slane %v3806, 5
      %v3809 = vsel %vm321, %v3804, %v3808
      %v3810 = vshrl.u32 %v3508, 16
      %v3812 = vrot.slane %v3810, 4
      %v3813 = vor.u32 %v3812, %v3808
      %v3814 = vrot.slane %v3813, 4
      %v3816 = vshll.u32 %v3509, 16
      %v3818 = vrot.slane %v3816, 5
      %v3819 = vsel %vm321, %v3814, %v3818
      %v3821 = vshrl.u32 %v3510, 16
      %v3823 = vrot.slane %v3821, 4
      %v3824 = vshll.u32 %v3510, 16
      %v3826 = vrot.slane %v3824, 5
      %v3827 = vor.u32 %v3823, %v3826
      %v3828 = vrot.slane %v3827, 4
      %v3830 = vshll.u32 %v3511, 16
      %v3832 = vrot.slane %v3830, 5
      %v3833 = vsel %vm321, %v3828, %v3832
      %v3834 = vshrl.u32 %v3511, 16
      %v3836 = vrot.slane %v3834, 4
      %v3837 = vor.u32 %v3836, %v3832
      %v3838 = vrot.slane %v3837, 4
      %v3840 = vshll.u32 %v3512, 16
      %v3842 = vrot.slane %v3840, 5
      %v3843 = vsel %vm321, %v3838, %v3842
      %v3845 = vshrl.u32 %v3513, 16
      %v3847 = vrot.slane %v3845, 4
      %v3848 = vshll.u32 %v3513, 16
      %v3850 = vrot.slane %v3848, 5
      %v3851 = vor.u32 %v3847, %v3850
      %v3852 = vrot.slane %v3851, 4
      %v3854 = vshll.u32 %v3514, 16
      %v3856 = vrot.slane %v3854, 5
      %v3857 = vsel %vm321, %v3852, %v3856
      %v3858 = vshrl.u32 %v3514, 16
      %v3860 = vrot.slane %v3858, 4
      %v3861 = vor.u32 %v3860, %v3856
      %v3862 = vrot.slane %v3861, 4
      %v3864 = vshll.u32 %v3515, 16
      %v3866 = vrot.slane %v3864, 5
      %v3867 = vsel %vm321, %v3862, %v3866
      %v3869 = vshrl.u32 %v3516, 16
      %v3871 = vrot.slane %v3869, 4
      %v3872 = vshll.u32 %v3516, 16
      %v3874 = vrot.slane %v3872, 5
      %v3875 = vor.u32 %v3871, %v3874
      %v3876 = vrot.slane %v3875, 4
      %v3878 = vshll.u32 %v3517, 16
      %v3880 = vrot.slane %v3878, 5
      %v3881 = vsel %vm321, %v3876, %v3880
      %v3882 = vshrl.u32 %v3517, 16
      %v3884 = vrot.slane %v3882, 4
      %v3885 = vor.u32 %v3884, %v3880
      %v3886 = vrot.slane %v3885, 4
      %v3888 = vshll.u32 %v3518, 16
      %v3890 = vrot.slane %v3888, 5
      %v3891 = vsel %vm321, %v3886, %v3890
      %v3892 = vld [vmem:[%s1462] sm:$0x3]
      %v3893 = vunpack.c.l.b16 %v3713
      %v3894 = vunpack.c.l.b16 %v3723
      %v3895 = vunpack.c.l.b16 %v3737
      %v3896 = vunpack.c.l.b16 %v3747
      %v3897 = vunpack.c.l.b16 %v3761
      %v3898 = vunpack.c.l.b16 %v3771
      %v3899 = vunpack.c.l.b16 %v3785
      %v3900 = vunpack.c.l.b16 %v3795
      %v3901 = vunpack.c.l.b16 %v3809
      %v3902 = vunpack.c.l.b16 %v3819
      %v3903 = vunpack.c.l.b16 %v3833
      %v3904 = vunpack.c.l.b16 %v3843
      %v3905 = vunpack.c.l.b16 %v3857
      %v3906 = vunpack.c.l.b16 %v3867
      %v3907 = vunpack.c.l.b16 %v3881
      %v3908 = vunpack.c.l.b16 %v3891
      %v3909 = vpack.c.b16 %v3894, %v3893
      %v3910 = vpack.c.b16 %v3896, %v3895
      %v3911 = vpack.c.b16 %v3898, %v3897
      %v3912 = vpack.c.b16 %v3900, %v3899
      %v3913 = vpack.c.b16 %v3902, %v3901
      %v3914 = vpack.c.b16 %v3904, %v3903
      %v3915 = vpack.c.b16 %v3906, %v3905
      %v3916 = vpack.c.b16 %v3908, %v3907
      %v3918 = vsel %vm540, %v3909, 0
      %v3921 = vsel %vm540, %v3910, 0
      %v3924 = vsel %vm540, %v3911, 0
      %v3927 = vsel %vm540, %v3912, 0
      %v3930 = vsel %vm540, %v3913, 0
      %v3933 = vsel %vm540, %v3914, 0
      %v3936 = vsel %vm540, %v3915, 0
      %v3939 = vsel %vm540, %v3916, 0
      %v3942 = vsel %vm565, %v3892, 0
      %3944 = vmatprep.subr.bf16.mxu0 0
      %3945 = vmatpush1.bf16.msra.mxu0 %v3942
      %3946 = vmatprep.subr.bf16.mxu0 0
      %3947 = vmatpush1.bf16.msra.mxu0 0
      %3948 = vmatprep.subr.bf16.mxu0 0
      %3949 = vmatpush1.bf16.msra.mxu0 0
      %3950 = vmatprep.subr.bf16.mxu0 0
      %3951 = vmatpush1.bf16.msra.mxu0 0
      %3952 = vmatprep.subr.bf16.mxu0 0
      %3953 = vmatpush1.bf16.msra.mxu0 0
      %3954 = vmatprep.subr.bf16.mxu0 0
      %3955 = vmatpush1.bf16.msra.mxu0 0
      %3956 = vmatprep.subr.bf16.mxu0 0
      %3957 = vmatpush1.bf16.msra.mxu0 0
      %3958 = vmatprep.subr.bf16.mxu0 0
      %3959 = vmatpush1.bf16.msra.mxu0 0
      %3960 = vmatprep.subr.bf16.mxu0 0
      %3961 = vmatpush1.bf16.msra.mxu0 0
      %3962 = vmatprep.subr.bf16.mxu0 0
      %3963 = vmatpush1.bf16.msra.mxu0 0
      %3964 = vmatprep.subr.bf16.mxu0 0
      %3965 = vmatpush1.bf16.msra.mxu0 0
      %3966 = vmatprep.subr.bf16.mxu0 0
      %3967 = vmatpush1.bf16.msra.mxu0 0
      %3968 = vmatprep.subr.bf16.mxu0 0
      %3969 = vmatpush1.bf16.msra.mxu0 0
      %3970 = vmatprep.subr.bf16.mxu0 0
      %3971 = vmatpush1.bf16.msra.mxu0 0
      %3972 = vmatprep.subr.bf16.mxu0 0
      %3973 = vmatpush1.bf16.msra.mxu0 0
      %3974 = vmatprep.subr.bf16.mxu0 0
      %3975 = vmatpush1.bf16.msra.mxu0 0
      %3976 = vmatprep.mubr.bf16.mxu0 0
      %3977 = vmatmul.mubr.bf16.gmra.mrb[0].mxu0 %v3918
      %v3978 = vpop.f32.mrb[0].mxu0
      %v3979 = vadd.f32 0.0, %v3978
      %v3980 = vpop.f32.mrb[0].mxu0
      %v3981 = vpop.f32.mrb[0].mxu0
      %v3982 = vadd.f32 0.0, %v3981
      %v3983 = vpop.f32.mrb[0].mxu0
      %3984 = vmatprep.mubr.bf16.mxu0 0
      %3985 = vmatmul.mubr.bf16.gmra.mrb[0].mxu0 %v3921
      %v3986 = vpop.f32.mrb[0].mxu0
      %v3987 = vadd.f32 0.0, %v3986
      %v3988 = vpop.f32.mrb[0].mxu0
      %v3989 = vpop.f32.mrb[0].mxu0
      %v3990 = vadd.f32 0.0, %v3989
      %v3991 = vpop.f32.mrb[0].mxu0
      %3992 = vmatprep.mubr.bf16.mxu0 0
      %3993 = vmatmul.mubr.bf16.gmra.mrb[0].mxu0 %v3924
      %v3994 = vpop.f32.mrb[0].mxu0
      %v3995 = vadd.f32 0.0, %v3994
      %v3996 = vpop.f32.mrb[0].mxu0
      %v3997 = vpop.f32.mrb[0].mxu0
      %v3998 = vadd.f32 0.0, %v3997
      %v3999 = vpop.f32.mrb[0].mxu0
      %4000 = vmatprep.mubr.bf16.mxu0 0
      %4001 = vmatmul.mubr.bf16.gmra.mrb[0].mxu0 %v3927
      %v4002 = vpop.f32.mrb[0].mxu0
      %v4003 = vadd.f32 0.0, %v4002
      %v4004 = vpop.f32.mrb[0].mxu0
      %v4005 = vpop.f32.mrb[0].mxu0
      %v4006 = vadd.f32 0.0, %v4005
      %v4007 = vpop.f32.mrb[0].mxu0
      %4008 = vmatprep.mubr.bf16.mxu0 0
      %4009 = vmatmul.mubr.bf16.gmra.mrb[0].mxu0 %v3930
      %v4010 = vpop.f32.mrb[0].mxu0
      %v4011 = vadd.f32 0.0, %v4010
      %v4012 = vpop.f32.mrb[0].mxu0
      %v4013 = vpop.f32.mrb[0].mxu0
      %v4014 = vadd.f32 0.0, %v4013
      %v4015 = vpop.f32.mrb[0].mxu0
      %4016 = vmatprep.mubr.bf16.mxu0 0
      %4017 = vmatmul.mubr.bf16.gmra.mrb[0].mxu0 %v3933
      %v4018 = vpop.f32.mrb[0].mxu0
      %v4019 = vadd.f32 0.0, %v4018
      %v4020 = vpop.f32.mrb[0].mxu0
      %v4021 = vpop.f32.mrb[0].mxu0
      %v4022 = vadd.f32 0.0, %v4021
      %v4023 = vpop.f32.mrb[0].mxu0
      %4024 = vmatprep.mubr.bf16.mxu0 0
      %4025 = vmatmul.mubr.bf16.gmra.mrb[0].mxu0 %v3936
      %v4026 = vpop.f32.mrb[0].mxu0
      %v4027 = vadd.f32 0.0, %v4026
      %v4028 = vpop.f32.mrb[0].mxu0
      %v4029 = vpop.f32.mrb[0].mxu0
      %v4030 = vadd.f32 0.0, %v4029
      %v4031 = vpop.f32.mrb[0].mxu0
      %4032 = vmatprep.mubr.bf16.mxu0 0
      %4033 = vmatmul.mubr.bf16.gmra.mrb[0].mxu0 %v3939
      %v4034 = vpop.f32.mrb[0].mxu0
      %v4035 = vadd.f32 0.0, %v4034
      %v4036 = vpop.f32.mrb[0].mxu0
      %v4037 = vpop.f32.mrb[0].mxu0
      %v4038 = vadd.f32 0.0, %v4037
      %v4039 = vpop.f32.mrb[0].mxu0
      %4040 = vdwg.mxu0
      %v4041 = vadd.f32 %v3684, %v3979
      %v4042 = vadd.f32 %v3685, %v3982
      %v4043 = vadd.f32 %v3686, %v3987
      %v4044 = vadd.f32 %v3687, %v3990
      %v4045 = vadd.f32 %v3688, %v3995
      %v4046 = vadd.f32 %v3689, %v3998
      %v4047 = vadd.f32 %v3690, %v4003
      %v4048 = vadd.f32 %v3691, %v4006
      %v4049 = vadd.f32 %v3692, %v4011
      %v4050 = vadd.f32 %v3693, %v4014
      %v4051 = vadd.f32 %v3694, %v4019
      %v4052 = vadd.f32 %v3695, %v4022
      %v4053 = vadd.f32 %v3696, %v4027
      %v4054 = vadd.f32 %v3697, %v4030
      %v4055 = vadd.f32 %v3698, %v4035
      %v4056 = vadd.f32 %v3699, %v4038
      %v4065 = vrot.slane %v3495, 5
      %v4066 = vrot.slane %v4065, 4
      %v4067 = vrot.slane %v3496, 5
      %v4068 = vsel %vm840, %v4066, %v4067
      %v4069 = vrot.slane %v4067, 4
      %v4070 = vrot.slane %v3497, 5
      %v4071 = vsel %vm840, %v4069, %v4070
      %v4072 = vrot.slane %v3498, 5
      %v4073 = vrot.slane %v4072, 4
      %v4074 = vrot.slane %v3499, 5
      %v4075 = vsel %vm840, %v4073, %v4074
      %v4076 = vrot.slane %v4074, 4
      %v4077 = vrot.slane %v3500, 5
      %v4078 = vsel %vm840, %v4076, %v4077
      %v4079 = vrot.slane %v3501, 5
      %v4080 = vrot.slane %v4079, 4
      %v4081 = vrot.slane %v3502, 5
      %v4082 = vsel %vm840, %v4080, %v4081
      %v4083 = vrot.slane %v4081, 4
      %v4084 = vrot.slane %v3503, 5
      %v4085 = vsel %vm840, %v4083, %v4084
      %v4086 = vrot.slane %v3504, 5
      %v4087 = vrot.slane %v4086, 4
      %v4088 = vrot.slane %v3505, 5
      %v4089 = vsel %vm840, %v4087, %v4088
      %v4090 = vrot.slane %v4088, 4
      %v4091 = vrot.slane %v3506, 5
      %v4092 = vsel %vm840, %v4090, %v4091
      %v4093 = vrot.slane %v3507, 5
      %v4094 = vrot.slane %v4093, 4
      %v4095 = vrot.slane %v3508, 5
      %v4096 = vsel %vm840, %v4094, %v4095
      %v4097 = vrot.slane %v4095, 4
      %v4098 = vrot.slane %v3509, 5
      %v4099 = vsel %vm840, %v4097, %v4098
      %v4100 = vrot.slane %v3510, 5
      %v4101 = vrot.slane %v4100, 4
      %v4102 = vrot.slane %v3511, 5
      %v4103 = vsel %vm840, %v4101, %v4102
      %v4104 = vrot.slane %v4102, 4
      %v4105 = vrot.slane %v3512, 5
      %v4106 = vsel %vm840, %v4104, %v4105
      %v4107 = vrot.slane %v3513, 5
      %v4108 = vrot.slane %v4107, 4
      %v4109 = vrot.slane %v3514, 5
      %v4110 = vsel %vm840, %v4108, %v4109
      %v4111 = vrot.slane %v4109, 4
      %v4112 = vrot.slane %v3515, 5
      %v4113 = vsel %vm840, %v4111, %v4112
      %v4114 = vrot.slane %v3516, 5
      %v4115 = vrot.slane %v4114, 4
      %v4116 = vrot.slane %v3517, 5
      %v4117 = vsel %vm840, %v4115, %v4116
      %v4118 = vrot.slane %v4116, 4
      %v4119 = vrot.slane %v3518, 5
      %v4120 = vsel %vm840, %v4118, %v4119
      %v4121 = vld [vmem:[%s1692] sm:$0x3]
      %v4122 = vunpack.c.l.b16 %v4068
      %v4123 = vunpack.c.l.b16 %v4071
      %v4124 = vunpack.c.l.b16 %v4075
      %v4125 = vunpack.c.l.b16 %v4078
      %v4126 = vunpack.c.l.b16 %v4082
      %v4127 = vunpack.c.l.b16 %v4085
      %v4128 = vunpack.c.l.b16 %v4089
      %v4129 = vunpack.c.l.b16 %v4092
      %v4130 = vunpack.c.l.b16 %v4096
      %v4131 = vunpack.c.l.b16 %v4099
      %v4132 = vunpack.c.l.b16 %v4103
      %v4133 = vunpack.c.l.b16 %v4106
      %v4134 = vunpack.c.l.b16 %v4110
      %v4135 = vunpack.c.l.b16 %v4113
      %v4136 = vunpack.c.l.b16 %v4117
      %v4137 = vunpack.c.l.b16 %v4120
      %v4138 = vpack.c.b16 %v4123, %v4122
      %v4139 = vpack.c.b16 %v4125, %v4124
      %v4140 = vpack.c.b16 %v4127, %v4126
      %v4141 = vpack.c.b16 %v4129, %v4128
      %v4142 = vpack.c.b16 %v4131, %v4130
      %v4143 = vpack.c.b16 %v4133, %v4132
      %v4144 = vpack.c.b16 %v4135, %v4134
      %v4145 = vpack.c.b16 %v4137, %v4136
      %v4147 = vsel %vm540, %v4138, 0
      %v4150 = vsel %vm540, %v4139, 0
      %v4153 = vsel %vm540, %v4140, 0
      %v4156 = vsel %vm540, %v4141, 0
      %v4159 = vsel %vm540, %v4142, 0
      %v4162 = vsel %vm540, %v4143, 0
      %v4165 = vsel %vm540, %v4144, 0
      %v4168 = vsel %vm540, %v4145, 0
      %v4171 = vsel %vm565, %v4121, 0
      %4173 = vmatprep.subr.bf16.mxu0 0
      %4174 = vmatpush1.bf16.msra.mxu0 %v4171
      %4175 = vmatprep.subr.bf16.mxu0 0
      %4176 = vmatpush1.bf16.msra.mxu0 0
      %4177 = vmatprep.subr.bf16.mxu0 0
      %4178 = vmatpush1.bf16.msra.mxu0 0
      %4179 = vmatprep.subr.bf16.mxu0 0
      %4180 = vmatpush1.bf16.msra.mxu0 0
      %4181 = vmatprep.subr.bf16.mxu0 0
      %4182 = vmatpush1.bf16.msra.mxu0 0
      %4183 = vmatprep.subr.bf16.mxu0 0
      %4184 = vmatpush1.bf16.msra.mxu0 0
      %4185 = vmatprep.subr.bf16.mxu0 0
      %4186 = vmatpush1.bf16.msra.mxu0 0
      %4187 = vmatprep.subr.bf16.mxu0 0
      %4188 = vmatpush1.bf16.msra.mxu0 0
      %4189 = vmatprep.subr.bf16.mxu0 0
      %4190 = vmatpush1.bf16.msra.mxu0 0
      %4191 = vmatprep.subr.bf16.mxu0 0
      %4192 = vmatpush1.bf16.msra.mxu0 0
      %4193 = vmatprep.subr.bf16.mxu0 0
      %4194 = vmatpush1.bf16.msra.mxu0 0
      %4195 = vmatprep.subr.bf16.mxu0 0
      %4196 = vmatpush1.bf16.msra.mxu0 0
      %4197 = vmatprep.subr.bf16.mxu0 0
      %4198 = vmatpush1.bf16.msra.mxu0 0
      %4199 = vmatprep.subr.bf16.mxu0 0
      %4200 = vmatpush1.bf16.msra.mxu0 0
      %4201 = vmatprep.subr.bf16.mxu0 0
      %4202 = vmatpush1.bf16.msra.mxu0 0
      %4203 = vmatprep.subr.bf16.mxu0 0
      %4204 = vmatpush1.bf16.msra.mxu0 0
      %4205 = vmatprep.mubr.bf16.mxu0 0
      %4206 = vmatmul.mubr.bf16.gmra.mrb[0].mxu0 %v4147
      %v4207 = vpop.f32.mrb[0].mxu0
      %v4208 = vadd.f32 0.0, %v4207
      %v4209 = vpop.f32.mrb[0].mxu0
      %v4210 = vpop.f32.mrb[0].mxu0
      %v4211 = vadd.f32 0.0, %v4210
      %v4212 = vpop.f32.mrb[0].mxu0
      %4213 = vmatprep.mubr.bf16.mxu0 0
      %4214 = vmatmul.mubr.bf16.gmra.mrb[0].mxu0 %v4150
      %v4215 = vpop.f32.mrb[0].mxu0
      %v4216 = vadd.f32 0.0, %v4215
      %v4217 = vpop.f32.mrb[0].mxu0
      %v4218 = vpop.f32.mrb[0].mxu0
      %v4219 = vadd.f32 0.0, %v4218
      %v4220 = vpop.f32.mrb[0].mxu0
      %4221 = vmatprep.mubr.bf16.mxu0 0
      %4222 = vmatmul.mubr.bf16.gmra.mrb[0].mxu0 %v4153
      %v4223 = vpop.f32.mrb[0].mxu0
      %v4224 = vadd.f32 0.0, %v4223
      %v4225 = vpop.f32.mrb[0].mxu0
      %v4226 = vpop.f32.mrb[0].mxu0
      %v4227 = vadd.f32 0.0, %v4226
      %v4228 = vpop.f32.mrb[0].mxu0
      %4229 = vmatprep.mubr.bf16.mxu0 0
      %4230 = vmatmul.mubr.bf16.gmra.mrb[0].mxu0 %v4156
      %v4231 = vpop.f32.mrb[0].mxu0
      %v4232 = vadd.f32 0.0, %v4231
      %v4233 = vpop.f32.mrb[0].mxu0
      %v4234 = vpop.f32.mrb[0].mxu0
      %v4235 = vadd.f32 0.0, %v4234
      %v4236 = vpop.f32.mrb[0].mxu0
      %4237 = vmatprep.mubr.bf16.mxu0 0
      %4238 = vmatmul.mubr.bf16.gmra.mrb[0].mxu0 %v4159
      %v4239 = vpop.f32.mrb[0].mxu0
      %v4240 = vadd.f32 0.0, %v4239
      %v4241 = vpop.f32.mrb[0].mxu0
      %v4242 = vpop.f32.mrb[0].mxu0
      %v4243 = vadd.f32 0.0, %v4242
      %v4244 = vpop.f32.mrb[0].mxu0
      %4245 = vmatprep.mubr.bf16.mxu0 0
      %4246 = vmatmul.mubr.bf16.gmra.mrb[0].mxu0 %v4162
      %v4247 = vpop.f32.mrb[0].mxu0
      %v4248 = vadd.f32 0.0, %v4247
      %v4249 = vpop.f32.mrb[0].mxu0
      %v4250 = vpop.f32.mrb[0].mxu0
      %v4251 = vadd.f32 0.0, %v4250
      %v4252 = vpop.f32.mrb[0].mxu0
      %4253 = vmatprep.mubr.bf16.mxu0 0
      %4254 = vmatmul.mubr.bf16.gmra.mrb[0].mxu0 %v4165
      %v4255 = vpop.f32.mrb[0].mxu0
      %v4256 = vadd.f32 0.0, %v4255
      %v4257 = vpop.f32.mrb[0].mxu0
      %v4258 = vpop.f32.mrb[0].mxu0
      %v4259 = vadd.f32 0.0, %v4258
      %v4260 = vpop.f32.mrb[0].mxu0
      %4261 = vmatprep.mubr.bf16.mxu0 0
      %4262 = vmatmul.mubr.bf16.gmra.mrb[0].mxu0 %v4168
      %v4263 = vpop.f32.mrb[0].mxu0
      %v4264 = vadd.f32 0.0, %v4263
      %v4265 = vpop.f32.mrb[0].mxu0
      %v4266 = vpop.f32.mrb[0].mxu0
      %v4267 = vadd.f32 0.0, %v4266
      %v4268 = vpop.f32.mrb[0].mxu0
      %4269 = vdwg.mxu0
      %v4270 = vadd.f32 %v4041, %v4208
      %v4271 = vadd.f32 %v4042, %v4211
      %v4272 = vadd.f32 %v4043, %v4216
      %v4273 = vadd.f32 %v4044, %v4219
      %v4274 = vadd.f32 %v4045, %v4224
      %v4275 = vadd.f32 %v4046, %v4227
      %v4276 = vadd.f32 %v4047, %v4232
      %v4277 = vadd.f32 %v4048, %v4235
      %v4278 = vadd.f32 %v4049, %v4240
      %v4279 = vadd.f32 %v4050, %v4243
      %v4280 = vadd.f32 %v4051, %v4248
      %v4281 = vadd.f32 %v4052, %v4251
      %v4282 = vadd.f32 %v4053, %v4256
      %v4283 = vadd.f32 %v4054, %v4259
      %v4284 = vadd.f32 %v4055, %v4264
      %v4285 = vadd.f32 %v4056, %v4267
      %s4286 = scalar_lea.vmem %s260, 120
      %v4287 = vld [vmem:[%s4286] sm:$0xf]
      %v4288 = vld [vmem:[%s4286 + $0x4] sm:$0xf]
      %v4289 = vld [vmem:[%s4286 + $0x8] sm:$0x1]
      %v4290 = vld [vmem:[%s4286 + $0xc] sm:$0xf]
      %v4291 = vld [vmem:[%s4286 + $0x10] sm:$0xf]
      %v4292 = vld [vmem:[%s4286 + $0x14] sm:$0x1]
      %v4293 = vld [vmem:[%s4286 + $0x18] sm:$0xf]
      %v4294 = vld [vmem:[%s4286 + $0x1c] sm:$0xf]
      %v4295 = vld [vmem:[%s4286 + $0x20] sm:$0x1]
      %v4296 = vld [vmem:[%s4286 + $0x24] sm:$0xf]
      %v4297 = vld [vmem:[%s4286 + $0x28] sm:$0xf]
      %v4298 = vld [vmem:[%s4286 + $0x2c] sm:$0x1]
      %v4299 = vld [vmem:[%s4286 + $0x30] sm:$0xf]
      %v4300 = vld [vmem:[%s4286 + $0x34] sm:$0xf]
      %v4301 = vld [vmem:[%s4286 + $0x38] sm:$0x1]
      %v4302 = vld [vmem:[%s4286 + $0x3c] sm:$0xf]
      %v4303 = vld [vmem:[%s4286 + $0x40] sm:$0xf]
      %v4304 = vld [vmem:[%s4286 + $0x44] sm:$0x1]
      %v4305 = vld [vmem:[%s278] sm:$0xf]
      %v4306 = vld [vmem:[%s278 + $0x4] sm:$0xf]
      %v4307 = vld [vmem:[%s278 + $0x8] sm:$0x1]
      %v4308 = vld [vmem:[%s278 + $0xc] sm:$0xf]
      %v4309 = vld [vmem:[%s278 + $0x10] sm:$0xf]
      %v4310 = vld [vmem:[%s278 + $0x14] sm:$0x1]
      %v4311 = vld [vmem:[%s1883] sm:$0x3]
      %v4328 = vunpack.c.l.b16 %v4287
      %v4329 = vunpack.c.l.b16 %v4288
      %v4330 = vunpack.c.l.b16 %v4290
      %v4331 = vunpack.c.l.b16 %v4291
      %v4332 = vunpack.c.l.b16 %v4293
      %v4333 = vunpack.c.l.b16 %v4294
      %v4334 = vunpack.c.l.b16 %v4296
      %v4335 = vunpack.c.l.b16 %v4297
      %v4336 = vunpack.c.l.b16 %v4299
      %v4337 = vunpack.c.l.b16 %v4300
      %v4338 = vunpack.c.l.b16 %v4302
      %v4339 = vunpack.c.l.b16 %v4303
      %v4340 = vunpack.c.l.b16 %v4305
      %v4341 = vunpack.c.l.b16 %v4306
      %v4342 = vunpack.c.l.b16 %v4308
      %v4343 = vunpack.c.l.b16 %v4309
      %v4344 = vpack.c.b16 %v4329, %v4328
      %v4345 = vpack.c.b16 %v4331, %v4330
      %v4346 = vpack.c.b16 %v4333, %v4332
      %v4347 = vpack.c.b16 %v4335, %v4334
      %v4348 = vpack.c.b16 %v4337, %v4336
      %v4349 = vpack.c.b16 %v4339, %v4338
      %v4350 = vpack.c.b16 %v4341, %v4340
      %v4351 = vpack.c.b16 %v4343, %v4342
      %v4353 = vsel %vm540, %v4344, 0
      %v4356 = vsel %vm540, %v4345, 0
      %v4359 = vsel %vm540, %v4346, 0
      %v4362 = vsel %vm540, %v4347, 0
      %v4365 = vsel %vm540, %v4348, 0
      %v4368 = vsel %vm540, %v4349, 0
      %v4371 = vsel %vm540, %v4350, 0
      %v4374 = vsel %vm540, %v4351, 0
      %v4377 = vsel %vm565, %v4311, 0
      %4379 = vmatprep.subr.bf16.mxu0 0
      %4380 = vmatpush1.bf16.msra.mxu0 %v4377
      %4381 = vmatprep.subr.bf16.mxu0 0
      %4382 = vmatpush1.bf16.msra.mxu0 0
      %4383 = vmatprep.subr.bf16.mxu0 0
      %4384 = vmatpush1.bf16.msra.mxu0 0
      %4385 = vmatprep.subr.bf16.mxu0 0
      %4386 = vmatpush1.bf16.msra.mxu0 0
      %4387 = vmatprep.subr.bf16.mxu0 0
      %4388 = vmatpush1.bf16.msra.mxu0 0
      %4389 = vmatprep.subr.bf16.mxu0 0
      %4390 = vmatpush1.bf16.msra.mxu0 0
      %4391 = vmatprep.subr.bf16.mxu0 0
      %4392 = vmatpush1.bf16.msra.mxu0 0
      %4393 = vmatprep.subr.bf16.mxu0 0
      %4394 = vmatpush1.bf16.msra.mxu0 0
      %4395 = vmatprep.subr.bf16.mxu0 0
      %4396 = vmatpush1.bf16.msra.mxu0 0
      %4397 = vmatprep.subr.bf16.mxu0 0
      %4398 = vmatpush1.bf16.msra.mxu0 0
      %4399 = vmatprep.subr.bf16.mxu0 0
      %4400 = vmatpush1.bf16.msra.mxu0 0
      %4401 = vmatprep.subr.bf16.mxu0 0
      %4402 = vmatpush1.bf16.msra.mxu0 0
      %4403 = vmatprep.subr.bf16.mxu0 0
      %4404 = vmatpush1.bf16.msra.mxu0 0
      %4405 = vmatprep.subr.bf16.mxu0 0
      %4406 = vmatpush1.bf16.msra.mxu0 0
      %4407 = vmatprep.subr.bf16.mxu0 0
      %4408 = vmatpush1.bf16.msra.mxu0 0
      %4409 = vmatprep.subr.bf16.mxu0 0
      %4410 = vmatpush1.bf16.msra.mxu0 0
      %4411 = vmatprep.mubr.bf16.mxu0 0
      %4412 = vmatmul.mubr.bf16.gmra.mrb[0].mxu0 %v4353
      %v4413 = vpop.f32.mrb[0].mxu0
      %v4414 = vadd.f32 0.0, %v4413
      %v4415 = vpop.f32.mrb[0].mxu0
      %v4416 = vpop.f32.mrb[0].mxu0
      %v4417 = vadd.f32 0.0, %v4416
      %v4418 = vpop.f32.mrb[0].mxu0
      %4419 = vmatprep.mubr.bf16.mxu0 0
      %4420 = vmatmul.mubr.bf16.gmra.mrb[0].mxu0 %v4356
      %v4421 = vpop.f32.mrb[0].mxu0
      %v4422 = vadd.f32 0.0, %v4421
      %v4423 = vpop.f32.mrb[0].mxu0
      %v4424 = vpop.f32.mrb[0].mxu0
      %v4425 = vadd.f32 0.0, %v4424
      %v4426 = vpop.f32.mrb[0].mxu0
      %4427 = vmatprep.mubr.bf16.mxu0 0
      %4428 = vmatmul.mubr.bf16.gmra.mrb[0].mxu0 %v4359
      %v4429 = vpop.f32.mrb[0].mxu0
      %v4430 = vadd.f32 0.0, %v4429
      %v4431 = vpop.f32.mrb[0].mxu0
      %v4432 = vpop.f32.mrb[0].mxu0
      %v4433 = vadd.f32 0.0, %v4432
      %v4434 = vpop.f32.mrb[0].mxu0
      %4435 = vmatprep.mubr.bf16.mxu0 0
      %4436 = vmatmul.mubr.bf16.gmra.mrb[0].mxu0 %v4362
      %v4437 = vpop.f32.mrb[0].mxu0
      %v4438 = vadd.f32 0.0, %v4437
      %v4439 = vpop.f32.mrb[0].mxu0
      %v4440 = vpop.f32.mrb[0].mxu0
      %v4441 = vadd.f32 0.0, %v4440
      %v4442 = vpop.f32.mrb[0].mxu0
      %4443 = vmatprep.mubr.bf16.mxu0 0
      %4444 = vmatmul.mubr.bf16.gmra.mrb[0].mxu0 %v4365
      %v4445 = vpop.f32.mrb[0].mxu0
      %v4446 = vadd.f32 0.0, %v4445
      %v4447 = vpop.f32.mrb[0].mxu0
      %v4448 = vpop.f32.mrb[0].mxu0
      %v4449 = vadd.f32 0.0, %v4448
      %v4450 = vpop.f32.mrb[0].mxu0
      %4451 = vmatprep.mubr.bf16.mxu0 0
      %4452 = vmatmul.mubr.bf16.gmra.mrb[0].mxu0 %v4368
      %v4453 = vpop.f32.mrb[0].mxu0
      %v4454 = vadd.f32 0.0, %v4453
      %v4455 = vpop.f32.mrb[0].mxu0
      %v4456 = vpop.f32.mrb[0].mxu0
      %v4457 = vadd.f32 0.0, %v4456
      %v4458 = vpop.f32.mrb[0].mxu0
      %4459 = vmatprep.mubr.bf16.mxu0 0
      %4460 = vmatmul.mubr.bf16.gmra.mrb[0].mxu0 %v4371
      %v4461 = vpop.f32.mrb[0].mxu0
      %v4462 = vadd.f32 0.0, %v4461
      %v4463 = vpop.f32.mrb[0].mxu0
      %v4464 = vpop.f32.mrb[0].mxu0
      %v4465 = vadd.f32 0.0, %v4464
      %v4466 = vpop.f32.mrb[0].mxu0
      %4467 = vmatprep.mubr.bf16.mxu0 0
      %4468 = vmatmul.mubr.bf16.gmra.mrb[0].mxu0 %v4374
      %v4469 = vpop.f32.mrb[0].mxu0
      %v4470 = vadd.f32 0.0, %v4469
      %v4471 = vpop.f32.mrb[0].mxu0
      %v4472 = vpop.f32.mrb[0].mxu0
      %v4473 = vadd.f32 0.0, %v4472
      %v4474 = vpop.f32.mrb[0].mxu0
      %4475 = vdwg.mxu0
      %v4476 = vadd.f32 %v4270, %v4414
      %v4477 = vadd.f32 %v4271, %v4417
      %v4478 = vadd.f32 %v4272, %v4422
      %v4479 = vadd.f32 %v4273, %v4425
      %v4480 = vadd.f32 %v4274, %v4430
      %v4481 = vadd.f32 %v4275, %v4433
      %v4482 = vadd.f32 %v4276, %v4438
      %v4483 = vadd.f32 %v4277, %v4441
      %v4484 = vadd.f32 %v4278, %v4446
      %v4485 = vadd.f32 %v4279, %v4449
      %v4486 = vadd.f32 %v4280, %v4454
      %v4487 = vadd.f32 %v4281, %v4457
      %v4488 = vadd.f32 %v4282, %v4462
      %v4489 = vadd.f32 %v4283, %v4465
      %v4490 = vadd.f32 %v4284, %v4470
      %v4491 = vadd.f32 %v4285, %v4473
      %v4493 = vshrl.u32 %v4287, 16
      %v4495 = vrot.slane %v4493, 4
      %v4496 = vshll.u32 %v4287, 16
      %v4498 = vrot.slane %v4496, 5
      %v4499 = vor.u32 %v4495, %v4498
      %v4500 = vrot.slane %v4499, 4
      %v4502 = vshll.u32 %v4288, 16
      %v4504 = vrot.slane %v4502, 5
      %v4505 = vsel %vm321, %v4500, %v4504
      %v4506 = vshrl.u32 %v4288, 16
      %v4508 = vrot.slane %v4506, 4
      %v4509 = vor.u32 %v4508, %v4504
      %v4510 = vrot.slane %v4509, 4
      %v4512 = vshll.u32 %v4289, 16
      %v4514 = vrot.slane %v4512, 5
      %v4515 = vsel %vm321, %v4510, %v4514
      %v4517 = vshrl.u32 %v4290, 16
      %v4519 = vrot.slane %v4517, 4
      %v4520 = vshll.u32 %v4290, 16
      %v4522 = vrot.slane %v4520, 5
      %v4523 = vor.u32 %v4519, %v4522
      %v4524 = vrot.slane %v4523, 4
      %v4526 = vshll.u32 %v4291, 16
      %v4528 = vrot.slane %v4526, 5
      %v4529 = vsel %vm321, %v4524, %v4528
      %v4530 = vshrl.u32 %v4291, 16
      %v4532 = vrot.slane %v4530, 4
      %v4533 = vor.u32 %v4532, %v4528
      %v4534 = vrot.slane %v4533, 4
      %v4536 = vshll.u32 %v4292, 16
      %v4538 = vrot.slane %v4536, 5
      %v4539 = vsel %vm321, %v4534, %v4538
      %v4541 = vshrl.u32 %v4293, 16
      %v4543 = vrot.slane %v4541, 4
      %v4544 = vshll.u32 %v4293, 16
      %v4546 = vrot.slane %v4544, 5
      %v4547 = vor.u32 %v4543, %v4546
      %v4548 = vrot.slane %v4547, 4
      %v4550 = vshll.u32 %v4294, 16
      %v4552 = vrot.slane %v4550, 5
      %v4553 = vsel %vm321, %v4548, %v4552
      %v4554 = vshrl.u32 %v4294, 16
      %v4556 = vrot.slane %v4554, 4
      %v4557 = vor.u32 %v4556, %v4552
      %v4558 = vrot.slane %v4557, 4
      %v4560 = vshll.u32 %v4295, 16
      %v4562 = vrot.slane %v4560, 5
      %v4563 = vsel %vm321, %v4558, %v4562
      %v4565 = vshrl.u32 %v4296, 16
      %v4567 = vrot.slane %v4565, 4
      %v4568 = vshll.u32 %v4296, 16
      %v4570 = vrot.slane %v4568, 5
      %v4571 = vor.u32 %v4567, %v4570
      %v4572 = vrot.slane %v4571, 4
      %v4574 = vshll.u32 %v4297, 16
      %v4576 = vrot.slane %v4574, 5
      %v4577 = vsel %vm321, %v4572, %v4576
      %v4578 = vshrl.u32 %v4297, 16
      %v4580 = vrot.slane %v4578, 4
      %v4581 = vor.u32 %v4580, %v4576
      %v4582 = vrot.slane %v4581, 4
      %v4584 = vshll.u32 %v4298, 16
      %v4586 = vrot.slane %v4584, 5
      %v4587 = vsel %vm321, %v4582, %v4586
      %v4589 = vshrl.u32 %v4299, 16
      %v4591 = vrot.slane %v4589, 4
      %v4592 = vshll.u32 %v4299, 16
      %v4594 = vrot.slane %v4592, 5
      %v4595 = vor.u32 %v4591, %v4594
      %v4596 = vrot.slane %v4595, 4
      %v4598 = vshll.u32 %v4300, 16
      %v4600 = vrot.slane %v4598, 5
      %v4601 = vsel %vm321, %v4596, %v4600
      %v4602 = vshrl.u32 %v4300, 16
      %v4604 = vrot.slane %v4602, 4
      %v4605 = vor.u32 %v4604, %v4600
      %v4606 = vrot.slane %v4605, 4
      %v4608 = vshll.u32 %v4301, 16
      %v4610 = vrot.slane %v4608, 5
      %v4611 = vsel %vm321, %v4606, %v4610
      %v4613 = vshrl.u32 %v4302, 16
      %v4615 = vrot.slane %v4613, 4
      %v4616 = vshll.u32 %v4302, 16
      %v4618 = vrot.slane %v4616, 5
      %v4619 = vor.u32 %v4615, %v4618
      %v4620 = vrot.slane %v4619, 4
      %v4622 = vshll.u32 %v4303, 16
      %v4624 = vrot.slane %v4622, 5
      %v4625 = vsel %vm321, %v4620, %v4624
      %v4626 = vshrl.u32 %v4303, 16
      %v4628 = vrot.slane %v4626, 4
      %v4629 = vor.u32 %v4628, %v4624
      %v4630 = vrot.slane %v4629, 4
      %v4632 = vshll.u32 %v4304, 16
      %v4634 = vrot.slane %v4632, 5
      %v4635 = vsel %vm321, %v4630, %v4634
      %v4637 = vshrl.u32 %v4305, 16
      %v4639 = vrot.slane %v4637, 4
      %v4640 = vshll.u32 %v4305, 16
      %v4642 = vrot.slane %v4640, 5
      %v4643 = vor.u32 %v4639, %v4642
      %v4644 = vrot.slane %v4643, 4
      %v4646 = vshll.u32 %v4306, 16
      %v4648 = vrot.slane %v4646, 5
      %v4649 = vsel %vm321, %v4644, %v4648
      %v4650 = vshrl.u32 %v4306, 16
      %v4652 = vrot.slane %v4650, 4
      %v4653 = vor.u32 %v4652, %v4648
      %v4654 = vrot.slane %v4653, 4
      %v4656 = vshll.u32 %v4307, 16
      %v4658 = vrot.slane %v4656, 5
      %v4659 = vsel %vm321, %v4654, %v4658
      %v4661 = vshrl.u32 %v4308, 16
      %v4663 = vrot.slane %v4661, 4
      %v4664 = vshll.u32 %v4308, 16
      %v4666 = vrot.slane %v4664, 5
      %v4667 = vor.u32 %v4663, %v4666
      %v4668 = vrot.slane %v4667, 4
      %v4670 = vshll.u32 %v4309, 16
      %v4672 = vrot.slane %v4670, 5
      %v4673 = vsel %vm321, %v4668, %v4672
      %v4674 = vshrl.u32 %v4309, 16
      %v4676 = vrot.slane %v4674, 4
      %v4677 = vor.u32 %v4676, %v4672
      %v4678 = vrot.slane %v4677, 4
      %v4680 = vshll.u32 %v4310, 16
      %v4682 = vrot.slane %v4680, 5
      %v4683 = vsel %vm321, %v4678, %v4682
      %v4684 = vld [vmem:[%s2257] sm:$0x3]
      %v4685 = vunpack.c.l.b16 %v4505
      %v4686 = vunpack.c.l.b16 %v4515
      %v4687 = vunpack.c.l.b16 %v4529
      %v4688 = vunpack.c.l.b16 %v4539
      %v4689 = vunpack.c.l.b16 %v4553
      %v4690 = vunpack.c.l.b16 %v4563
      %v4691 = vunpack.c.l.b16 %v4577
      %v4692 = vunpack.c.l.b16 %v4587
      %v4693 = vunpack.c.l.b16 %v4601
      %v4694 = vunpack.c.l.b16 %v4611
      %v4695 = vunpack.c.l.b16 %v4625
      %v4696 = vunpack.c.l.b16 %v4635
      %v4697 = vunpack.c.l.b16 %v4649
      %v4698 = vunpack.c.l.b16 %v4659
      %v4699 = vunpack.c.l.b16 %v4673
      %v4700 = vunpack.c.l.b16 %v4683
      %v4701 = vpack.c.b16 %v4686, %v4685
      %v4702 = vpack.c.b16 %v4688, %v4687
      %v4703 = vpack.c.b16 %v4690, %v4689
      %v4704 = vpack.c.b16 %v4692, %v4691
      %v4705 = vpack.c.b16 %v4694, %v4693
      %v4706 = vpack.c.b16 %v4696, %v4695
      %v4707 = vpack.c.b16 %v4698, %v4697
      %v4708 = vpack.c.b16 %v4700, %v4699
      %v4710 = vsel %vm540, %v4701, 0
      %v4713 = vsel %vm540, %v4702, 0
      %v4716 = vsel %vm540, %v4703, 0
      %v4719 = vsel %vm540, %v4704, 0
      %v4722 = vsel %vm540, %v4705, 0
      %v4725 = vsel %vm540, %v4706, 0
      %v4728 = vsel %vm540, %v4707, 0
      %v4731 = vsel %vm540, %v4708, 0
      %v4734 = vsel %vm565, %v4684, 0
      %4736 = vmatprep.subr.bf16.mxu0 0
      %4737 = vmatpush1.bf16.msra.mxu0 %v4734
      %4738 = vmatprep.subr.bf16.mxu0 0
      %4739 = vmatpush1.bf16.msra.mxu0 0
      %4740 = vmatprep.subr.bf16.mxu0 0
      %4741 = vmatpush1.bf16.msra.mxu0 0
      %4742 = vmatprep.subr.bf16.mxu0 0
      %4743 = vmatpush1.bf16.msra.mxu0 0
      %4744 = vmatprep.subr.bf16.mxu0 0
      %4745 = vmatpush1.bf16.msra.mxu0 0
      %4746 = vmatprep.subr.bf16.mxu0 0
      %4747 = vmatpush1.bf16.msra.mxu0 0
      %4748 = vmatprep.subr.bf16.mxu0 0
      %4749 = vmatpush1.bf16.msra.mxu0 0
      %4750 = vmatprep.subr.bf16.mxu0 0
      %4751 = vmatpush1.bf16.msra.mxu0 0
      %4752 = vmatprep.subr.bf16.mxu0 0
      %4753 = vmatpush1.bf16.msra.mxu0 0
      %4754 = vmatprep.subr.bf16.mxu0 0
      %4755 = vmatpush1.bf16.msra.mxu0 0
      %4756 = vmatprep.subr.bf16.mxu0 0
      %4757 = vmatpush1.bf16.msra.mxu0 0
      %4758 = vmatprep.subr.bf16.mxu0 0
      %4759 = vmatpush1.bf16.msra.mxu0 0
      %4760 = vmatprep.subr.bf16.mxu0 0
      %4761 = vmatpush1.bf16.msra.mxu0 0
      %4762 = vmatprep.subr.bf16.mxu0 0
      %4763 = vmatpush1.bf16.msra.mxu0 0
      %4764 = vmatprep.subr.bf16.mxu0 0
      %4765 = vmatpush1.bf16.msra.mxu0 0
      %4766 = vmatprep.subr.bf16.mxu0 0
      %4767 = vmatpush1.bf16.msra.mxu0 0
      %4768 = vmatprep.mubr.bf16.mxu0 0
      %4769 = vmatmul.mubr.bf16.gmra.mrb[0].mxu0 %v4710
      %v4770 = vpop.f32.mrb[0].mxu0
      %v4771 = vadd.f32 0.0, %v4770
      %v4772 = vpop.f32.mrb[0].mxu0
      %v4773 = vpop.f32.mrb[0].mxu0
      %v4774 = vadd.f32 0.0, %v4773
      %v4775 = vpop.f32.mrb[0].mxu0
      %4776 = vmatprep.mubr.bf16.mxu0 0
      %4777 = vmatmul.mubr.bf16.gmra.mrb[0].mxu0 %v4713
      %v4778 = vpop.f32.mrb[0].mxu0
      %v4779 = vadd.f32 0.0, %v4778
      %v4780 = vpop.f32.mrb[0].mxu0
      %v4781 = vpop.f32.mrb[0].mxu0
      %v4782 = vadd.f32 0.0, %v4781
      %v4783 = vpop.f32.mrb[0].mxu0
      %4784 = vmatprep.mubr.bf16.mxu0 0
      %4785 = vmatmul.mubr.bf16.gmra.mrb[0].mxu0 %v4716
      %v4786 = vpop.f32.mrb[0].mxu0
      %v4787 = vadd.f32 0.0, %v4786
      %v4788 = vpop.f32.mrb[0].mxu0
      %v4789 = vpop.f32.mrb[0].mxu0
      %v4790 = vadd.f32 0.0, %v4789
      %v4791 = vpop.f32.mrb[0].mxu0
      %4792 = vmatprep.mubr.bf16.mxu0 0
      %4793 = vmatmul.mubr.bf16.gmra.mrb[0].mxu0 %v4719
      %v4794 = vpop.f32.mrb[0].mxu0
      %v4795 = vadd.f32 0.0, %v4794
      %v4796 = vpop.f32.mrb[0].mxu0
      %v4797 = vpop.f32.mrb[0].mxu0
      %v4798 = vadd.f32 0.0, %v4797
      %v4799 = vpop.f32.mrb[0].mxu0
      %4800 = vmatprep.mubr.bf16.mxu0 0
      %4801 = vmatmul.mubr.bf16.gmra.mrb[0].mxu0 %v4722
      %v4802 = vpop.f32.mrb[0].mxu0
      %v4803 = vadd.f32 0.0, %v4802
      %v4804 = vpop.f32.mrb[0].mxu0
      %v4805 = vpop.f32.mrb[0].mxu0
      %v4806 = vadd.f32 0.0, %v4805
      %v4807 = vpop.f32.mrb[0].mxu0
      %4808 = vmatprep.mubr.bf16.mxu0 0
      %4809 = vmatmul.mubr.bf16.gmra.mrb[0].mxu0 %v4725
      %v4810 = vpop.f32.mrb[0].mxu0
      %v4811 = vadd.f32 0.0, %v4810
      %v4812 = vpop.f32.mrb[0].mxu0
      %v4813 = vpop.f32.mrb[0].mxu0
      %v4814 = vadd.f32 0.0, %v4813
      %v4815 = vpop.f32.mrb[0].mxu0
      %4816 = vmatprep.mubr.bf16.mxu0 0
      %4817 = vmatmul.mubr.bf16.gmra.mrb[0].mxu0 %v4728
      %v4818 = vpop.f32.mrb[0].mxu0
      %v4819 = vadd.f32 0.0, %v4818
      %v4820 = vpop.f32.mrb[0].mxu0
      %v4821 = vpop.f32.mrb[0].mxu0
      %v4822 = vadd.f32 0.0, %v4821
      %v4823 = vpop.f32.mrb[0].mxu0
      %4824 = vmatprep.mubr.bf16.mxu0 0
      %4825 = vmatmul.mubr.bf16.gmra.mrb[0].mxu0 %v4731
      %v4826 = vpop.f32.mrb[0].mxu0
      %v4827 = vadd.f32 0.0, %v4826
      %v4828 = vpop.f32.mrb[0].mxu0
      %v4829 = vpop.f32.mrb[0].mxu0
      %v4830 = vadd.f32 0.0, %v4829
      %v4831 = vpop.f32.mrb[0].mxu0
      %4832 = vdwg.mxu0
      %v4833 = vadd.f32 %v4476, %v4771
      %v4834 = vadd.f32 %v4477, %v4774
      %v4835 = vadd.f32 %v4478, %v4779
      %v4836 = vadd.f32 %v4479, %v4782
      %v4837 = vadd.f32 %v4480, %v4787
      %v4838 = vadd.f32 %v4481, %v4790
      %v4839 = vadd.f32 %v4482, %v4795
      %v4840 = vadd.f32 %v4483, %v4798
      %v4841 = vadd.f32 %v4484, %v4803
      %v4842 = vadd.f32 %v4485, %v4806
      %v4843 = vadd.f32 %v4486, %v4811
      %v4844 = vadd.f32 %v4487, %v4814
      %v4845 = vadd.f32 %v4488, %v4819
      %v4846 = vadd.f32 %v4489, %v4822
      %v4847 = vadd.f32 %v4490, %v4827
      %v4848 = vadd.f32 %v4491, %v4830
      %v4857 = vrot.slane %v4287, 5
      %v4858 = vrot.slane %v4857, 4
      %v4859 = vrot.slane %v4288, 5
      %v4860 = vsel %vm840, %v4858, %v4859
      %v4861 = vrot.slane %v4859, 4
      %v4862 = vrot.slane %v4289, 5
      %v4863 = vsel %vm840, %v4861, %v4862
      %v4864 = vrot.slane %v4290, 5
      %v4865 = vrot.slane %v4864, 4
      %v4866 = vrot.slane %v4291, 5
      %v4867 = vsel %vm840, %v4865, %v4866
      %v4868 = vrot.slane %v4866, 4
      %v4869 = vrot.slane %v4292, 5
      %v4870 = vsel %vm840, %v4868, %v4869
      %v4871 = vrot.slane %v4293, 5
      %v4872 = vrot.slane %v4871, 4
      %v4873 = vrot.slane %v4294, 5
      %v4874 = vsel %vm840, %v4872, %v4873
      %v4875 = vrot.slane %v4873, 4
      %v4876 = vrot.slane %v4295, 5
      %v4877 = vsel %vm840, %v4875, %v4876
      %v4878 = vrot.slane %v4296, 5
      %v4879 = vrot.slane %v4878, 4
      %v4880 = vrot.slane %v4297, 5
      %v4881 = vsel %vm840, %v4879, %v4880
      %v4882 = vrot.slane %v4880, 4
      %v4883 = vrot.slane %v4298, 5
      %v4884 = vsel %vm840, %v4882, %v4883
      %v4885 = vrot.slane %v4299, 5
      %v4886 = vrot.slane %v4885, 4
      %v4887 = vrot.slane %v4300, 5
      %v4888 = vsel %vm840, %v4886, %v4887
      %v4889 = vrot.slane %v4887, 4
      %v4890 = vrot.slane %v4301, 5
      %v4891 = vsel %vm840, %v4889, %v4890
      %v4892 = vrot.slane %v4302, 5
      %v4893 = vrot.slane %v4892, 4
      %v4894 = vrot.slane %v4303, 5
      %v4895 = vsel %vm840, %v4893, %v4894
      %v4896 = vrot.slane %v4894, 4
      %v4897 = vrot.slane %v4304, 5
      %v4898 = vsel %vm840, %v4896, %v4897
      %v4899 = vrot.slane %v4305, 5
      %v4900 = vrot.slane %v4899, 4
      %v4901 = vrot.slane %v4306, 5
      %v4902 = vsel %vm840, %v4900, %v4901
      %v4903 = vrot.slane %v4901, 4
      %v4904 = vrot.slane %v4307, 5
      %v4905 = vsel %vm840, %v4903, %v4904
      %v4906 = vrot.slane %v4308, 5
      %v4907 = vrot.slane %v4906, 4
      %v4908 = vrot.slane %v4309, 5
      %v4909 = vsel %vm840, %v4907, %v4908
      %v4910 = vrot.slane %v4908, 4
      %v4911 = vrot.slane %v4310, 5
      %v4912 = vsel %vm840, %v4910, %v4911
      %v4913 = vld [vmem:[%s2487] sm:$0x3]
      %v4914 = vunpack.c.l.b16 %v4860
      %v4915 = vunpack.c.l.b16 %v4863
      %v4916 = vunpack.c.l.b16 %v4867
      %v4917 = vunpack.c.l.b16 %v4870
      %v4918 = vunpack.c.l.b16 %v4874
      %v4919 = vunpack.c.l.b16 %v4877
      %v4920 = vunpack.c.l.b16 %v4881
      %v4921 = vunpack.c.l.b16 %v4884
      %v4922 = vunpack.c.l.b16 %v4888
      %v4923 = vunpack.c.l.b16 %v4891
      %v4924 = vunpack.c.l.b16 %v4895
      %v4925 = vunpack.c.l.b16 %v4898
      %v4926 = vunpack.c.l.b16 %v4902
      %v4927 = vunpack.c.l.b16 %v4905
      %v4928 = vunpack.c.l.b16 %v4909
      %v4929 = vunpack.c.l.b16 %v4912
      %v4930 = vpack.c.b16 %v4915, %v4914
      %v4931 = vpack.c.b16 %v4917, %v4916
      %v4932 = vpack.c.b16 %v4919, %v4918
      %v4933 = vpack.c.b16 %v4921, %v4920
      %v4934 = vpack.c.b16 %v4923, %v4922
      %v4935 = vpack.c.b16 %v4925, %v4924
      %v4936 = vpack.c.b16 %v4927, %v4926
      %v4937 = vpack.c.b16 %v4929, %v4928
      %v4939 = vsel %vm540, %v4930, 0
      %v4942 = vsel %vm540, %v4931, 0
      %v4945 = vsel %vm540, %v4932, 0
      %v4948 = vsel %vm540, %v4933, 0
      %v4951 = vsel %vm540, %v4934, 0
      %v4954 = vsel %vm540, %v4935, 0
      %v4957 = vsel %vm540, %v4936, 0
      %v4960 = vsel %vm540, %v4937, 0
      %v4963 = vsel %vm565, %v4913, 0
      %4965 = vmatprep.subr.bf16.mxu0 0
      %4966 = vmatpush1.bf16.msra.mxu0 %v4963
      %4967 = vmatprep.subr.bf16.mxu0 0
      %4968 = vmatpush1.bf16.msra.mxu0 0
      %4969 = vmatprep.subr.bf16.mxu0 0
      %4970 = vmatpush1.bf16.msra.mxu0 0
      %4971 = vmatprep.subr.bf16.mxu0 0
      %4972 = vmatpush1.bf16.msra.mxu0 0
      %4973 = vmatprep.subr.bf16.mxu0 0
      %4974 = vmatpush1.bf16.msra.mxu0 0
      %4975 = vmatprep.subr.bf16.mxu0 0
      %4976 = vmatpush1.bf16.msra.mxu0 0
      %4977 = vmatprep.subr.bf16.mxu0 0
      %4978 = vmatpush1.bf16.msra.mxu0 0
      %4979 = vmatprep.subr.bf16.mxu0 0
      %4980 = vmatpush1.bf16.msra.mxu0 0
      %4981 = vmatprep.subr.bf16.mxu0 0
      %4982 = vmatpush1.bf16.msra.mxu0 0
      %4983 = vmatprep.subr.bf16.mxu0 0
      %4984 = vmatpush1.bf16.msra.mxu0 0
      %4985 = vmatprep.subr.bf16.mxu0 0
      %4986 = vmatpush1.bf16.msra.mxu0 0
      %4987 = vmatprep.subr.bf16.mxu0 0
      %4988 = vmatpush1.bf16.msra.mxu0 0
      %4989 = vmatprep.subr.bf16.mxu0 0
      %4990 = vmatpush1.bf16.msra.mxu0 0
      %4991 = vmatprep.subr.bf16.mxu0 0
      %4992 = vmatpush1.bf16.msra.mxu0 0
      %4993 = vmatprep.subr.bf16.mxu0 0
      %4994 = vmatpush1.bf16.msra.mxu0 0
      %4995 = vmatprep.subr.bf16.mxu0 0
      %4996 = vmatpush1.bf16.msra.mxu0 0
      %4997 = vmatprep.mubr.bf16.mxu0 0
      %4998 = vmatmul.mubr.bf16.gmra.mrb[0].mxu0 %v4939
      %v4999 = vpop.f32.mrb[0].mxu0
      %v5000 = vadd.f32 0.0, %v4999
      %v5001 = vpop.f32.mrb[0].mxu0
      %v5002 = vpop.f32.mrb[0].mxu0
      %v5003 = vadd.f32 0.0, %v5002
      %v5004 = vpop.f32.mrb[0].mxu0
      %5005 = vmatprep.mubr.bf16.mxu0 0
      %5006 = vmatmul.mubr.bf16.gmra.mrb[0].mxu0 %v4942
      %v5007 = vpop.f32.mrb[0].mxu0
      %v5008 = vadd.f32 0.0, %v5007
      %v5009 = vpop.f32.mrb[0].mxu0
      %v5010 = vpop.f32.mrb[0].mxu0
      %v5011 = vadd.f32 0.0, %v5010
      %v5012 = vpop.f32.mrb[0].mxu0
      %5013 = vmatprep.mubr.bf16.mxu0 0
      %5014 = vmatmul.mubr.bf16.gmra.mrb[0].mxu0 %v4945
      %v5015 = vpop.f32.mrb[0].mxu0
      %v5016 = vadd.f32 0.0, %v5015
      %v5017 = vpop.f32.mrb[0].mxu0
      %v5018 = vpop.f32.mrb[0].mxu0
      %v5019 = vadd.f32 0.0, %v5018
      %v5020 = vpop.f32.mrb[0].mxu0
      %5021 = vmatprep.mubr.bf16.mxu0 0
      %5022 = vmatmul.mubr.bf16.gmra.mrb[0].mxu0 %v4948
      %v5023 = vpop.f32.mrb[0].mxu0
      %v5024 = vadd.f32 0.0, %v5023
      %v5025 = vpop.f32.mrb[0].mxu0
      %v5026 = vpop.f32.mrb[0].mxu0
      %v5027 = vadd.f32 0.0, %v5026
      %v5028 = vpop.f32.mrb[0].mxu0
      %5029 = vmatprep.mubr.bf16.mxu0 0
      %5030 = vmatmul.mubr.bf16.gmra.mrb[0].mxu0 %v4951
      %v5031 = vpop.f32.mrb[0].mxu0
      %v5032 = vadd.f32 0.0, %v5031
      %v5033 = vpop.f32.mrb[0].mxu0
      %v5034 = vpop.f32.mrb[0].mxu0
      %v5035 = vadd.f32 0.0, %v5034
      %v5036 = vpop.f32.mrb[0].mxu0
      %5037 = vmatprep.mubr.bf16.mxu0 0
      %5038 = vmatmul.mubr.bf16.gmra.mrb[0].mxu0 %v4954
      %v5039 = vpop.f32.mrb[0].mxu0
      %v5040 = vadd.f32 0.0, %v5039
      %v5041 = vpop.f32.mrb[0].mxu0
      %v5042 = vpop.f32.mrb[0].mxu0
      %v5043 = vadd.f32 0.0, %v5042
      %v5044 = vpop.f32.mrb[0].mxu0
      %5045 = vmatprep.mubr.bf16.mxu0 0
      %5046 = vmatmul.mubr.bf16.gmra.mrb[0].mxu0 %v4957
      %v5047 = vpop.f32.mrb[0].mxu0
      %v5048 = vadd.f32 0.0, %v5047
      %v5049 = vpop.f32.mrb[0].mxu0
      %v5050 = vpop.f32.mrb[0].mxu0
      %v5051 = vadd.f32 0.0, %v5050
      %v5052 = vpop.f32.mrb[0].mxu0
      %5053 = vmatprep.mubr.bf16.mxu0 0
      %5054 = vmatmul.mubr.bf16.gmra.mrb[0].mxu0 %v4960
      %v5055 = vpop.f32.mrb[0].mxu0
      %v5056 = vadd.f32 0.0, %v5055
      %v5057 = vpop.f32.mrb[0].mxu0
      %v5058 = vpop.f32.mrb[0].mxu0
      %v5059 = vadd.f32 0.0, %v5058
      %v5060 = vpop.f32.mrb[0].mxu0
      %5061 = vdwg.mxu0
      %v5062 = vadd.f32 %v4833, %v5000
      %v5063 = vadd.f32 %v4834, %v5003
      %v5064 = vadd.f32 %v4835, %v5008
      %v5065 = vadd.f32 %v4836, %v5011
      %v5066 = vadd.f32 %v4837, %v5016
      %v5067 = vadd.f32 %v4838, %v5019
      %v5068 = vadd.f32 %v4839, %v5024
      %v5069 = vadd.f32 %v4840, %v5027
      %v5070 = vadd.f32 %v4841, %v5032
      %v5071 = vadd.f32 %v4842, %v5035
      %v5072 = vadd.f32 %v4843, %v5040
      %v5073 = vadd.f32 %v4844, %v5043
      %v5074 = vadd.f32 %v4845, %v5048
      %v5075 = vadd.f32 %v4846, %v5051
      %v5076 = vadd.f32 %v4847, %v5056
      %v5077 = vadd.f32 %v4848, %v5059
      %v5078 = vpack.c.bf16 %v5063, %v5062
      %v5079 = vpack.c.bf16 %v5065, %v5064
      %v5080 = vpack.c.bf16 %v5067, %v5066
      %v5081 = vpack.c.bf16 %v5069, %v5068
      %v5082 = vpack.c.bf16 %v5071, %v5070
      %v5083 = vpack.c.bf16 %v5073, %v5072
      %v5084 = vpack.c.bf16 %v5075, %v5074
      %v5085 = vpack.c.bf16 %v5077, %v5076
      %v5094 = vunpack.c.l.b16 %v5078
      %v5095 = vunpack.c.h.b16 %v5078
      %v5096 = vunpack.c.l.b16 %v5079
      %v5097 = vunpack.c.h.b16 %v5079
      %v5098 = vunpack.c.l.b16 %v5080
      %v5099 = vunpack.c.h.b16 %v5080
      %v5100 = vunpack.c.l.b16 %v5081
      %v5101 = vunpack.c.h.b16 %v5081
      %v5102 = vunpack.c.l.b16 %v5082
      %v5103 = vunpack.c.h.b16 %v5082
      %v5104 = vunpack.c.l.b16 %v5083
      %v5105 = vunpack.c.h.b16 %v5083
      %v5106 = vunpack.c.l.b16 %v5084
      %v5107 = vunpack.c.h.b16 %v5084
      %v5108 = vunpack.c.l.b16 %v5085
      %v5109 = vunpack.c.h.b16 %v5085
      %v5110 = vpack.c.b16 %v5094, %v5094
      %v5111 = vpack.c.b16 %v5095, %v5095
      %v5112 = vpack.c.b16 %v5096, %v5096
      %v5113 = vpack.c.b16 %v5097, %v5097
      %v5114 = vpack.c.b16 %v5098, %v5098
      %v5115 = vpack.c.b16 %v5099, %v5099
      %v5116 = vpack.c.b16 %v5100, %v5100
      %v5117 = vpack.c.b16 %v5101, %v5101
      %v5118 = vpack.c.b16 %v5102, %v5102
      %v5119 = vpack.c.b16 %v5103, %v5103
      %v5120 = vpack.c.b16 %v5104, %v5104
      %v5121 = vpack.c.b16 %v5105, %v5105
      %v5122 = vpack.c.b16 %v5106, %v5106
      %v5123 = vpack.c.b16 %v5107, %v5107
      %v5124 = vpack.c.b16 %v5108, %v5108
      %v5125 = vpack.c.b16 %v5109, %v5109
      %s5142 = scalar_lea.vmem %s291, 64
      %5143 = vst.msk [vmem:[%s5142] sm:$0xf] %vm2717, %v5110
      %5144 = vst.msk [vmem:[%s5142 + $0x4] sm:$0xf] %vm2717, %v5111
      %5145 = vst.msk [vmem:[%s5142 + $0x8] sm:$0xf] %vm2717, %v5112
      %5146 = vst.msk [vmem:[%s5142 + $0xc] sm:$0xf] %vm2717, %v5113
      %5147 = vst.msk [vmem:[%s5142 + $0x10] sm:$0xf] %vm2717, %v5114
      %5148 = vst.msk [vmem:[%s5142 + $0x14] sm:$0xf] %vm2717, %v5115
      %5149 = vst.msk [vmem:[%s5142 + $0x18] sm:$0xf] %vm2717, %v5116
      %5150 = vst.msk [vmem:[%s5142 + $0x1c] sm:$0xf] %vm2717, %v5117
      %5151 = vst.msk [vmem:[%s5142 + $0x20] sm:$0xf] %vm2717, %v5118
      %5152 = vst.msk [vmem:[%s5142 + $0x24] sm:$0xf] %vm2717, %v5119
      %5153 = vst.msk [vmem:[%s5142 + $0x28] sm:$0xf] %vm2717, %v5120
      %5154 = vst.msk [vmem:[%s5142 + $0x2c] sm:$0xf] %vm2717, %v5121
      %5155 = vst.msk [vmem:[%s5142 + $0x30] sm:$0xf] %vm2717, %v5122
      %5156 = vst.msk [vmem:[%s5142 + $0x34] sm:$0xf] %vm2717, %v5123
      %5157 = vst.msk [vmem:[%s5142 + $0x38] sm:$0xf] %vm2717, %v5124
      %5158 = vst.msk [vmem:[%s5142 + $0x3c] sm:$0xf] %vm2717, %v5125
      %s5159 = smul.u32 16, %s19
      %p5160 = scmp.lt.s32.totalorder %s18, 1
      %s5161 = scalar_select %p5160, %s18, 1
      %p5162 = scmp.lt.s32.totalorder %s5159, 15
      %s5163 = scalar_select %p5162, %s5159, 15
      %s5164 = smul.addr %s5163, 2
      %s5165 = smul.addr %s5161, 32
      %s5166 = sadd.s32 %s5164, %s5165
      %s5167 = smul.addr %s5166, 4
      %s5168 = scalar_lea.vmem %s3, %s5167
      // Predicated region
      $region33: #{tpu_custom_call.1} parent=31 // pred_check
        %p5169 = pneg %p127
      $region34: #{tpu_custom_call.1} parent=31 // pred_check_branch
        %5171 = sbr.rel (%p5169) target = $region36
      $region35: #{tpu_custom_call.1} parent=31 // pred_region
        %s5172 = smul.u32 16, %s19
      $region36: #{tpu_custom_call.1} parent=31 // pred_fallthru
        _
    $region32: #{tpu_custom_call.1} parent=5 // pred_fallthru
      _
    %p5173 = scmp.le.s32.totalorder 2, %s9
    // Predicated region
    $region37: #{tpu_custom_call.1} parent=5 // pred_check
      %p5174 = pneg %p5173
    $region38: #{tpu_custom_call.1} parent=5 // pred_check_branch
      %5176 = sbr.rel (%p5174) target = $region40
    $region39: #{tpu_custom_call.1} parent=5 // pred_region
      %s5177 = ssub.s32 %s9, 2
      // Predicated region
      $region41: #{tpu_custom_call.1} parent=39 // pred_check
        %p5178 = pneg %p133
      $region42: #{tpu_custom_call.1} parent=39 // pred_check_branch
        %5180 = sbr.rel (%p5178) target = $region44
      $region43: #{tpu_custom_call.1} parent=39 // pred_region
        %s5181 = smul.u32 16, %s21
        %p5182 = scmp.lt.s32.totalorder %s20, 1
        %s5183 = scalar_select %p5182, %s20, 1
        %p5184 = scmp.lt.s32.totalorder %s5181, 15
        %s5185 = scalar_select %p5184, %s5181, 15
        %s5186 = smul.addr %s5185, 2
        %s5187 = smul.addr %s5183, 32
        %s5188 = sadd.s32 %s5186, %s5187
        %s5189 = smul.addr %s5188, 4
        %s5190 = scalar_lea.vmem %s3, %s5189
      $region44: #{tpu_custom_call.1} parent=39 // pred_fallthru
        _
    $region40: #{tpu_custom_call.1} parent=5 // pred_fallthru
      _
  $region6: #{tpu_custom_call.1} parent=0 // loop_footer
    %s13 = sadd.s32 1, %s9
  $region7: #{tpu_custom_call.1} parent=0 // loop_footer_branch
    %8 = sbr.rel target = $region3
  $region8: #{tpu_custom_call.1} parent=0 // loop_exit
    _

</llo_original>
